<compile_context>
chip_gen: v6e
topology: v6e:2x2x1
jax: 0.10.0
libtpu: 0.0.40
codegen_flags: <defaults>
</compile_context>

<pallas_src>
import jax
import jax.numpy as jnp
import numpy as np
from jax.experimental import pallas as pl
from jax.experimental.pallas import tpu as pltpu


def _char_rnn_kernel(gx0_ref, h0_ref, c0_ref,
                     whh0_ref,
                     wih1_ref, whh1_ref, b1_ref,
                     wfc1_ref, bfc1_ref, wfc2_ref, bfc2_ref,
                     out_ref, hn_ref, cn_ref):
    L, B, H = h0_ref.shape
    TB = gx0_ref.shape[0]
    T = TB // B
    cdt = whh0_ref.dtype            # MXU operand dtype (bf16); accumulation is f32.

    whh0 = whh0_ref[...]            # (H, 4H)
    wih1 = wih1_ref[...]            # (H, 4H)
    whh1 = whh1_ref[...]            # (H, 4H)
    b1 = b1_ref[...]                # (1, 4H) f32
    wfc1 = wfc1_ref[...]            # (H, F1)
    bfc1 = bfc1_ref[...]            # (1, F1) f32
    wfc2 = wfc2_ref[...]            # (F1, Vpad)
    bfc2 = bfc2_ref[...]            # (1, Vpad) f32

    def lstm_cell(gates, c):
        # gates (B, 4H) f32; two full-vreg EUP ops, then lane slices (PyTorch [i|f|g|o]).
        sig = jax.nn.sigmoid(gates)
        tnh = jnp.tanh(gates)
        i_g = sig[:, 0:H]
        f_g = sig[:, H:2 * H]
        g_g = tnh[:, 2 * H:3 * H]
        o_g = sig[:, 3 * H:4 * H]
        c_new = f_g * c + i_g * g_g
        h_new = o_g * jnp.tanh(c_new)
        return h_new, c_new

    def layer1_step(t, x_t, h1, c1):
        # Layer-1 recurrent step t with per-step input matmul (wavefront with layer-0)
        # and the FC head fused in (stores the lane-dense (B, Vpad) logits row block).
        g1 = (jnp.dot(x_t.astype(cdt), wih1, preferred_element_type=jnp.float32)
              + jnp.dot(h1.astype(cdt), whh1, preferred_element_type=jnp.float32)
              + b1)
        h1n, c1n = lstm_cell(g1, c1)
        f = jnp.maximum(
            jnp.dot(h1n.astype(cdt), wfc1, preferred_element_type=jnp.float32) + bfc1,
            0.0)
        out_ref[t * B:(t + 1) * B, :] = (
            jnp.dot(f.astype(cdt), wfc2, preferred_element_type=jnp.float32) + bfc2)
        return h1n, c1n

    h0 = h0_ref[0]
    c0 = c0_ref[0]
    h1 = h0_ref[1]
    c1 = c0_ref[1]

    # Wavefront: super-step s runs layer-0 step s and layer-1 step s-1; the two
    # dependent chains are independent, so the scheduler overlaps their MXU pushes,
    # EUP transcendentals and VPU gate math. Static unroll (T known at trace time).
    prev_h0 = None
    for s in range(T):
        # layer-0 step s: gx0 is the hoisted input contribution + combined bias.
        g0 = (gx0_ref[s * B:(s + 1) * B, :]
              + jnp.dot(h0.astype(cdt), whh0, preferred_element_type=jnp.float32))
        new_h0, new_c0 = lstm_cell(g0, c0)
        # layer-1 step s-1 (uses layer-0 output of step s-1; independent of layer-0 step s).
        if prev_h0 is not None:
            h1, c1 = layer1_step(s - 1, prev_h0, h1, c1)
        h0, c0 = new_h0, new_c0
        prev_h0 = h0
    # drain: layer-1 final step.
    h1, c1 = layer1_step(T - 1, prev_h0, h1, c1)

    hn_ref[0] = h0
    cn_ref[0] = c0
    hn_ref[1] = h1
    cn_ref[1] = c1


def char_rnn_forward(x, hidden, params, *, compute_dtype=jnp.bfloat16):
    """x: (B, T, V) float32 (batch_first); hidden: (h0, c0) each (L=2, B, H).

    Returns (out, (hn, cn)) with out: (B*T, V) — same as the PyTorch module (eval mode).
    MXU operands are cast to `compute_dtype` (bf16 by default) with f32 accumulation;
    gate/cell math and the state stay f32.
    """
    h0, c0 = hidden
    B, T, V = x.shape
    L, _, H = h0.shape
    assert L == 2, "kernel is specialized to the module's 2-layer LSTM"
    assert B % 8 == 0, "B must be a multiple of 8 (sublane tile) for aligned per-step slices"
    assert h0.shape == c0.shape and h0.shape[1] == B

    (wih0, whh0, bih0, bhh0,
     wih1, whh1, bih1, bhh1,
     wfc1, bfc1, wfc2, bfc2) = params
    F1 = wfc1.shape[0]                       # fc1 output features (128)
    Vpad = -(-V // 128) * 128                # lane-dense logits store (full vst, no vst.msk)
    cdt = compute_dtype

    # Hoisted layer-0 input contribution, done by XLA off the kernel critical path.
    # For one-hot char inputs this matmul is a row gather of Wih0^T.
    # TODO(synk): callers with integer ids should use jnp.take(wih0.T, ids, axis=0) directly.
    x_tm = jnp.transpose(x, (1, 0, 2)).reshape(T * B, V)       # time-major rows
    gx0 = (jnp.dot(x_tm.astype(cdt), wih0.T.astype(cdt),
                   preferred_element_type=jnp.float32)
           + (bih0 + bhh0)[None, :].astype(jnp.float32))       # (T*B, 4H) f32

    # fc2 zero-padded to a multiple of 128 output lanes (sliced back below).
    wfc2_p = jnp.zeros((F1, Vpad), jnp.float32).at[:, :V].set(wfc2.T).astype(cdt)
    bfc2_p = jnp.zeros((1, Vpad), jnp.float32).at[:, :V].set(bfc2)

    args = (
        gx0,
        h0.astype(jnp.float32), c0.astype(jnp.float32),
        whh0.T.astype(cdt),                                    # recurrent weights: explicit bf16 MXU operands
        wih1.T.astype(cdt), whh1.T.astype(cdt),
        (bih1 + bhh1).reshape(1, 4 * H).astype(jnp.float32),
        wfc1.T.astype(cdt), bfc1.reshape(1, F1).astype(jnp.float32),
        wfc2_p, bfc2_p,
    )

    vmem = pl.BlockSpec(memory_space=pltpu.MemorySpace.VMEM)
    out_shapes = (
        jax.ShapeDtypeStruct((T * B, Vpad), jnp.float32),      # logits, time-major rows
        jax.ShapeDtypeStruct((L, B, H), jnp.float32),          # h_n
        jax.ShapeDtypeStruct((L, B, H), jnp.float32),          # c_n
    )

    out_tm, hn, cn = pl.pallas_call(
        _char_rnn_kernel,
        out_shape=out_shapes,
        in_specs=[vmem] * len(args),
        out_specs=(vmem, vmem, vmem),
    )(*args)

    # (t, b) row order -> PyTorch batch-major out.view(-1, n_hidden) order; strip lane pad.
    out = out_tm.reshape(T, B, Vpad).transpose(1, 0, 2).reshape(B * T, Vpad)[:, :V]
    return out, (hn, cn)


def _char_rnn_reference(x, hidden, params, cast_dtype=None):
    """Pure-JAX reference matching the PyTorch module in eval mode.

    cast_dtype=None      -> true f32 reference (HIGHEST matmul precision).
    cast_dtype=bfloat16  -> mirrors the kernel's MXU-operand casts exactly (tight check).
    """
    h0, c0 = hidden
    (wih0, whh0, bih0, bhh0, wih1, whh1, bih1, bhh1,
     wfc1, bfc1, wfc2, bfc2) = params
    B, T, V = x.shape
    H = h0.shape[-1]

    if cast_dtype is None:
        cast = lambda a: a
    else:
        cast = lambda a: a.astype(cast_dtype).astype(jnp.float32)

    def dot(a, b):
        return jnp.dot(cast(a), cast(b), preferred_element_type=jnp.float32,
                       precision=jax.lax.Precision.HIGHEST)

    def lstm(xs, h, c, wih, whh, b):
        outs = []
        for t in range(T):
            g = dot(xs[:, t, :], wih.T) + dot(h, whh.T) + b
            i = jax.nn.sigmoid(g[:, 0:H]);        f = jax.nn.sigmoid(g[:, H:2 * H])
            gg = jnp.tanh(g[:, 2 * H:3 * H]);     o = jax.nn.sigmoid(g[:, 3 * H:4 * H])
            c = f * c + i * gg
            h = o * jnp.tanh(c)
            outs.append(h)
        return jnp.stack(outs, axis=1), h, c      # (B, T, H)

    seq0, h0n, c0n = lstm(x,    h0[0], c0[0], wih0, whh0, bih0 + bhh0)
    seq1, h1n, c1n = lstm(seq0, h0[1], c0[1], wih1, whh1, bih1 + bhh1)
    r = seq1.reshape(B * T, H)
    out = dot(jnp.maximum(dot(r, wfc1.T) + bfc1, 0.0), wfc2.T) + bfc2
    return out, (jnp.stack([h0n, h1n]), jnp.stack([c0n, c1n]))


def init_params(key, vocab, n_hidden):
    """Deterministic parameter init matching PyTorch shapes (uniform +-1/sqrt(H))."""
    H = n_hidden
    k = 1.0 / jnp.sqrt(jnp.float32(H))
    keys = jax.random.split(key, 12)
    u = lambda kk, shape: jax.random.uniform(kk, shape, jnp.float32, -k, k)
    wih0 = u(keys[0], (4 * H, vocab)); whh0 = u(keys[1], (4 * H, H))
    bih0 = u(keys[2], (4 * H,));       bhh0 = u(keys[3], (4 * H,))
    wih1 = u(keys[4], (4 * H, H));     whh1 = u(keys[5], (4 * H, H))
    bih1 = u(keys[6], (4 * H,));       bhh1 = u(keys[7], (4 * H,))
    wfc1 = u(keys[8], (128, H));       bfc1 = u(keys[9], (128,))
    wfc2 = u(keys[10], (vocab, 128));  bfc2 = u(keys[11], (vocab,))
    return (wih0, whh0, bih0, bhh0, wih1, whh1, bih1, bhh1,
            wfc1, bfc1, wfc2, bfc2)


if __name__ == "__main__":
    # Small demo shapes: B raised to 32 (multiple of 8) per the batching review item,
    # V=65 exercises the lane-padded fc2 path, 4H = 128 keeps gate vregs full-lane.
    B, T, V, H, L = 32, 8, 65, 32, 2

    key = jax.random.PRNGKey(0)
    k_param, k_x = jax.random.split(key)

    params = init_params(k_param, vocab=V, n_hidden=H)

    # One-hot character input (B, T, V), typical usage of this module.
    ids = jax.random.randint(k_x, (B, T), 0, V)
    x = jax.nn.one_hot(ids, V, dtype=jnp.float32)

    # init_hidden equivalent: zeros (L, B, H)
    h0 = jnp.zeros((L, B, H), jnp.float32)
    c0 = jnp.zeros((L, B, H), jnp.float32)

    out, (hn, cn) = char_rnn_forward(x, (h0, c0), params)
    jax.block_until_ready((out, hn, cn))

    assert out.shape == (B * T, V)
    assert hn.shape == (L, B, H) and cn.shape == (L, B, H)

    # Tight check: reference that mirrors the kernel's declared bf16 MXU-operand casts.
    # Verifies the kernel math itself (only f32 accumulation-order noise remains).
    out_m, (hn_m, cn_m) = _char_rnn_reference(x, (h0, c0), params, cast_dtype=jnp.bfloat16)
    np.testing.assert_allclose(np.asarray(out), np.asarray(out_m), rtol=5e-3, atol=5e-3)
    np.testing.assert_allclose(np.asarray(hn), np.asarray(hn_m), rtol=5e-3, atol=5e-3)
    np.testing.assert_allclose(np.asarray(cn), np.asarray(cn_m), rtol=5e-3, atol=5e-3)

    # Loose check: pure-f32 reference — bounds the total bf16-operand error.
    out_f, (hn_f, cn_f) = _char_rnn_reference(x, (h0, c0), params)
    np.testing.assert_allclose(np.asarray(out), np.asarray(out_f), rtol=3e-2, atol=3e-2)
    np.testing.assert_allclose(np.asarray(hn), np.asarray(hn_f), rtol=3e-2, atol=3e-2)
    np.testing.assert_allclose(np.asarray(cn), np.asarray(cn_f), rtol=3e-2, atol=3e-2)

    print("KERNEL_OK")
</pallas_src>

<mosaic_0001>
module attributes {stable_mosaic.version = 11 : i64} {
  func.func @_char_rnn_kernel(%arg0: memref<256x128xf32, #tpu.memory_space<vmem>>, %arg1: memref<2x32x32xf32, #tpu.memory_space<vmem>>, %arg2: memref<2x32x32xf32, #tpu.memory_space<vmem>>, %arg3: memref<32x128xbf16, #tpu.memory_space<vmem>>, %arg4: memref<32x128xbf16, #tpu.memory_space<vmem>>, %arg5: memref<32x128xbf16, #tpu.memory_space<vmem>>, %arg6: memref<1x128xf32, #tpu.memory_space<vmem>>, %arg7: memref<32x128xbf16, #tpu.memory_space<vmem>>, %arg8: memref<1x128xf32, #tpu.memory_space<vmem>>, %arg9: memref<128x128xbf16, #tpu.memory_space<vmem>>, %arg10: memref<1x128xf32, #tpu.memory_space<vmem>>, %arg11: memref<256x128xf32, #tpu.memory_space<vmem>>, %arg12: memref<2x32x32xf32, #tpu.memory_space<vmem>>, %arg13: memref<2x32x32xf32, #tpu.memory_space<vmem>>) attributes {dimension_semantics = [], scalar_prefetch = 0 : i64, scratch_operands = 0 : i64, tpu.core_type = #tpu.core_type<tc>} {
    %c0 = arith.constant 0 : index
    %c0_0 = arith.constant 0 : index
    %0 = vector.load %arg3[%c0, %c0_0] : memref<32x128xbf16, #tpu.memory_space<vmem>>, vector<32x128xbf16>
    %c0_1 = arith.constant 0 : index
    %c0_2 = arith.constant 0 : index
    %1 = vector.load %arg4[%c0_1, %c0_2] : memref<32x128xbf16, #tpu.memory_space<vmem>>, vector<32x128xbf16>
    %c0_3 = arith.constant 0 : index
    %c0_4 = arith.constant 0 : index
    %2 = vector.load %arg5[%c0_3, %c0_4] : memref<32x128xbf16, #tpu.memory_space<vmem>>, vector<32x128xbf16>
    %c0_5 = arith.constant 0 : index
    %c0_6 = arith.constant 0 : index
    %3 = vector.load %arg6[%c0_5, %c0_6] : memref<1x128xf32, #tpu.memory_space<vmem>>, vector<1x128xf32>
    %c0_7 = arith.constant 0 : index
    %c0_8 = arith.constant 0 : index
    %4 = vector.load %arg7[%c0_7, %c0_8] : memref<32x128xbf16, #tpu.memory_space<vmem>>, vector<32x128xbf16>
    %c0_9 = arith.constant 0 : index
    %c0_10 = arith.constant 0 : index
    %5 = vector.load %arg8[%c0_9, %c0_10] : memref<1x128xf32, #tpu.memory_space<vmem>>, vector<1x128xf32>
    %c0_11 = arith.constant 0 : index
    %c0_12 = arith.constant 0 : index
    %6 = vector.load %arg9[%c0_11, %c0_12] : memref<128x128xbf16, #tpu.memory_space<vmem>>, vector<128x128xbf16>
    %c0_13 = arith.constant 0 : index
    %c0_14 = arith.constant 0 : index
    %7 = vector.load %arg10[%c0_13, %c0_14] : memref<1x128xf32, #tpu.memory_space<vmem>>, vector<1x128xf32>
    %c0_15 = arith.constant 0 : index
    %c0_16 = arith.constant 0 : index
    %c0_17 = arith.constant 0 : index
    %8 = vector.load %arg1[%c0_15, %c0_16, %c0_17] : memref<2x32x32xf32, #tpu.memory_space<vmem>>, vector<1x32x32xf32>
    %9 = vector.shape_cast %8 : vector<1x32x32xf32> to vector<32x32xf32>
    %c0_18 = arith.constant 0 : index
    %c0_19 = arith.constant 0 : index
    %c0_20 = arith.constant 0 : index
    %10 = vector.load %arg2[%c0_18, %c0_19, %c0_20] : memref<2x32x32xf32, #tpu.memory_space<vmem>>, vector<1x32x32xf32>
    %11 = vector.shape_cast %10 : vector<1x32x32xf32> to vector<32x32xf32>
    %c1 = arith.constant 1 : index
    %c0_21 = arith.constant 0 : index
    %c0_22 = arith.constant 0 : index
    %12 = vector.load %arg1[%c1, %c0_21, %c0_22] : memref<2x32x32xf32, #tpu.memory_space<vmem>>, vector<1x32x32xf32>
    %13 = vector.shape_cast %12 : vector<1x32x32xf32> to vector<32x32xf32>
    %c1_23 = arith.constant 1 : index
    %c0_24 = arith.constant 0 : index
    %c0_25 = arith.constant 0 : index
    %14 = vector.load %arg2[%c1_23, %c0_24, %c0_25] : memref<2x32x32xf32, #tpu.memory_space<vmem>>, vector<1x32x32xf32>
    %15 = vector.shape_cast %14 : vector<1x32x32xf32> to vector<32x32xf32>
    %c0_26 = arith.constant 0 : index
    %c0_27 = arith.constant 0 : index
    %16 = vector.load %arg0[%c0_26, %c0_27] : memref<256x128xf32, #tpu.memory_space<vmem>>, vector<32x128xf32>
    %17 = arith.truncf %9 : vector<32x32xf32> to vector<32x32xbf16>
    %cst = arith.constant dense<0.000000e+00> : vector<32x128xf32>
    %18 = tpu.matmul %17, %0, %cst {dimension_numbers = #tpu.dot_dimension_numbers<[1], [0], [0], [1], [0, 0, 1, 1], [], []>} : vector<32x32xbf16>, vector<32x128xbf16>, vector<32x128xf32> -> vector<32x128xf32>
    %19 = arith.addf %16, %18 : vector<32x128xf32>
    %20 = arith.negf %19 : vector<32x128xf32>
    %21 = math.exp %20 : vector<32x128xf32>
    %cst_28 = arith.constant 1.000000e+00 : f32
    %22 = vector.broadcast %cst_28 : f32 to vector<32x128xf32>
    %23 = arith.addf %22, %21 : vector<32x128xf32>
    %24 = arith.divf %22, %23 : vector<32x128xf32>
    %25 = math.tanh %19 : vector<32x128xf32>
    %26 = vector.extract_strided_slice %24 {offsets = [0, 0], sizes = [32, 32], strides = [1, 1]} : vector<32x128xf32> to vector<32x32xf32>
    %27 = vector.extract_strided_slice %24 {offsets = [0, 32], sizes = [32, 32], strides = [1, 1]} : vector<32x128xf32> to vector<32x32xf32>
    %28 = vector.extract_strided_slice %25 {offsets = [0, 64], sizes = [32, 32], strides = [1, 1]} : vector<32x128xf32> to vector<32x32xf32>
    %29 = vector.extract_strided_slice %24 {offsets = [0, 96], sizes = [32, 32], strides = [1, 1]} : vector<32x128xf32> to vector<32x32xf32>
    %30 = arith.mulf %27, %11 : vector<32x32xf32>
    %31 = arith.mulf %26, %28 : vector<32x32xf32>
    %32 = arith.addf %30, %31 : vector<32x32xf32>
    %33 = math.tanh %32 : vector<32x32xf32>
    %34 = arith.mulf %29, %33 : vector<32x32xf32>
    %c32 = arith.constant 32 : index
    %c0_29 = arith.constant 0 : index
    %35 = vector.load %arg0[%c32, %c0_29] : memref<256x128xf32, #tpu.memory_space<vmem>>, vector<32x128xf32>
    %36 = arith.truncf %34 : vector<32x32xf32> to vector<32x32xbf16>
    %cst_30 = arith.constant dense<0.000000e+00> : vector<32x128xf32>
    %37 = tpu.matmul %36, %0, %cst_30 {dimension_numbers = #tpu.dot_dimension_numbers<[1], [0], [0], [1], [0, 0, 1, 1], [], []>} : vector<32x32xbf16>, vector<32x128xbf16>, vector<32x128xf32> -> vector<32x128xf32>
    %38 = arith.addf %35, %37 : vector<32x128xf32>
    %39 = arith.negf %38 : vector<32x128xf32>
    %40 = math.exp %39 : vector<32x128xf32>
    %cst_31 = arith.constant 1.000000e+00 : f32
    %41 = vector.broadcast %cst_31 : f32 to vector<32x128xf32>
    %42 = arith.addf %41, %40 : vector<32x128xf32>
    %43 = arith.divf %41, %42 : vector<32x128xf32>
    %44 = math.tanh %38 : vector<32x128xf32>
    %45 = vector.extract_strided_slice %43 {offsets = [0, 0], sizes = [32, 32], strides = [1, 1]} : vector<32x128xf32> to vector<32x32xf32>
    %46 = vector.extract_strided_slice %43 {offsets = [0, 32], sizes = [32, 32], strides = [1, 1]} : vector<32x128xf32> to vector<32x32xf32>
    %47 = vector.extract_strided_slice %44 {offsets = [0, 64], sizes = [32, 32], strides = [1, 1]} : vector<32x128xf32> to vector<32x32xf32>
    %48 = vector.extract_strided_slice %43 {offsets = [0, 96], sizes = [32, 32], strides = [1, 1]} : vector<32x128xf32> to vector<32x32xf32>
    %49 = arith.mulf %46, %32 : vector<32x32xf32>
    %50 = arith.mulf %45, %47 : vector<32x32xf32>
    %51 = arith.addf %49, %50 : vector<32x32xf32>
    %52 = math.tanh %51 : vector<32x32xf32>
    %53 = arith.mulf %48, %52 : vector<32x32xf32>
    %54 = arith.truncf %34 : vector<32x32xf32> to vector<32x32xbf16>
    %cst_32 = arith.constant dense<0.000000e+00> : vector<32x128xf32>
    %55 = tpu.matmul %54, %1, %cst_32 {dimension_numbers = #tpu.dot_dimension_numbers<[1], [0], [0], [1], [0, 0, 1, 1], [], []>} : vector<32x32xbf16>, vector<32x128xbf16>, vector<32x128xf32> -> vector<32x128xf32>
    %56 = arith.truncf %13 : vector<32x32xf32> to vector<32x32xbf16>
    %cst_33 = arith.constant dense<0.000000e+00> : vector<32x128xf32>
    %57 = tpu.matmul %56, %2, %cst_33 {dimension_numbers = #tpu.dot_dimension_numbers<[1], [0], [0], [1], [0, 0, 1, 1], [], []>} : vector<32x32xbf16>, vector<32x128xbf16>, vector<32x128xf32> -> vector<32x128xf32>
    %58 = arith.addf %55, %57 : vector<32x128xf32>
    %59 = vector.broadcast %3 : vector<1x128xf32> to vector<32x128xf32>
    %60 = arith.addf %58, %59 : vector<32x128xf32>
    %61 = arith.negf %60 : vector<32x128xf32>
    %62 = math.exp %61 : vector<32x128xf32>
    %cst_34 = arith.constant 1.000000e+00 : f32
    %63 = vector.broadcast %cst_34 : f32 to vector<32x128xf32>
    %64 = arith.addf %63, %62 : vector<32x128xf32>
    %65 = arith.divf %63, %64 : vector<32x128xf32>
    %66 = math.tanh %60 : vector<32x128xf32>
    %67 = vector.extract_strided_slice %65 {offsets = [0, 0], sizes = [32, 32], strides = [1, 1]} : vector<32x128xf32> to vector<32x32xf32>
    %68 = vector.extract_strided_slice %65 {offsets = [0, 32], sizes = [32, 32], strides = [1, 1]} : vector<32x128xf32> to vector<32x32xf32>
    %69 = vector.extract_strided_slice %66 {offsets = [0, 64], sizes = [32, 32], strides = [1, 1]} : vector<32x128xf32> to vector<32x32xf32>
    %70 = vector.extract_strided_slice %65 {offsets = [0, 96], sizes = [32, 32], strides = [1, 1]} : vector<32x128xf32> to vector<32x32xf32>
    %71 = arith.mulf %68, %15 : vector<32x32xf32>
    %72 = arith.mulf %67, %69 : vector<32x32xf32>
    %73 = arith.addf %71, %72 : vector<32x32xf32>
    %74 = math.tanh %73 : vector<32x32xf32>
    %75 = arith.mulf %70, %74 : vector<32x32xf32>
    %76 = arith.truncf %75 : vector<32x32xf32> to vector<32x32xbf16>
    %cst_35 = arith.constant dense<0.000000e+00> : vector<32x128xf32>
    %77 = tpu.matmul %76, %4, %cst_35 {dimension_numbers = #tpu.dot_dimension_numbers<[1], [0], [0], [1], [0, 0, 1, 1], [], []>} : vector<32x32xbf16>, vector<32x128xbf16>, vector<32x128xf32> -> vector<32x128xf32>
    %78 = vector.broadcast %5 : vector<1x128xf32> to vector<32x128xf32>
    %79 = arith.addf %77, %78 : vector<32x128xf32>
    %cst_36 = arith.constant 0.000000e+00 : f32
    %80 = vector.broadcast %cst_36 : f32 to vector<32x128xf32>
    %81 = arith.maximumf %79, %80 : vector<32x128xf32>
    %82 = arith.truncf %81 : vector<32x128xf32> to vector<32x128xbf16>
    %cst_37 = arith.constant dense<0.000000e+00> : vector<32x128xf32>
    %83 = tpu.matmul %82, %6, %cst_37 {dimension_numbers = #tpu.dot_dimension_numbers<[1], [0], [0], [1], [0, 0, 1, 1], [], []>} : vector<32x128xbf16>, vector<128x128xbf16>, vector<32x128xf32> -> vector<32x128xf32>
    %84 = vector.broadcast %7 : vector<1x128xf32> to vector<32x128xf32>
    %85 = arith.addf %83, %84 : vector<32x128xf32>
    %c0_38 = arith.constant 0 : index
    %c0_39 = arith.constant 0 : index
    %86 = vector.load %arg11[%c0_38, %c0_39] : memref<256x128xf32, #tpu.memory_space<vmem>>, vector<32x128xf32>
    tpu.vector_store %arg11[%c0_38, %c0_39], %85 {strides = array<i32>} : memref<256x128xf32, #tpu.memory_space<vmem>>, vector<32x128xf32>,
    %c64 = arith.constant 64 : index
    %c0_40 = arith.constant 0 : index
    %87 = vector.load %arg0[%c64, %c0_40] : memref<256x128xf32, #tpu.memory_space<vmem>>, vector<32x128xf32>
    %88 = arith.truncf %53 : vector<32x32xf32> to vector<32x32xbf16>
    %cst_41 = arith.constant dense<0.000000e+00> : vector<32x128xf32>
    %89 = tpu.matmul %88, %0, %cst_41 {dimension_numbers = #tpu.dot_dimension_numbers<[1], [0], [0], [1], [0, 0, 1, 1], [], []>} : vector<32x32xbf16>, vector<32x128xbf16>, vector<32x128xf32> -> vector<32x128xf32>
    %90 = arith.addf %87, %89 : vector<32x128xf32>
    %91 = arith.negf %90 : vector<32x128xf32>
    %92 = math.exp %91 : vector<32x128xf32>
    %cst_42 = arith.constant 1.000000e+00 : f32
    %93 = vector.broadcast %cst_42 : f32 to vector<32x128xf32>
    %94 = arith.addf %93, %92 : vector<32x128xf32>
    %95 = arith.divf %93, %94 : vector<32x128xf32>
    %96 = math.tanh %90 : vector<32x128xf32>
    %97 = vector.extract_strided_slice %95 {offsets = [0, 0], sizes = [32, 32], strides = [1, 1]} : vector<32x128xf32> to vector<32x32xf32>
    %98 = vector.extract_strided_slice %95 {offsets = [0, 32], sizes = [32, 32], strides = [1, 1]} : vector<32x128xf32> to vector<32x32xf32>
    %99 = vector.extract_strided_slice %96 {offsets = [0, 64], sizes = [32, 32], strides = [1, 1]} : vector<32x128xf32> to vector<32x32xf32>
    %100 = vector.extract_strided_slice %95 {offsets = [0, 96], sizes = [32, 32], strides = [1, 1]} : vector<32x128xf32> to vector<32x32xf32>
    %101 = arith.mulf %98, %51 : vector<32x32xf32>
    %102 = arith.mulf %97, %99 : vector<32x32xf32>
    %103 = arith.addf %101, %102 : vector<32x32xf32>
    %104 = math.tanh %103 : vector<32x32xf32>
    %105 = arith.mulf %100, %104 : vector<32x32xf32>
    %106 = arith.truncf %53 : vector<32x32xf32> to vector<32x32xbf16>
    %cst_43 = arith.constant dense<0.000000e+00> : vector<32x128xf32>
    %107 = tpu.matmul %106, %1, %cst_43 {dimension_numbers = #tpu.dot_dimension_numbers<[1], [0], [0], [1], [0, 0, 1, 1], [], []>} : vector<32x32xbf16>, vector<32x128xbf16>, vector<32x128xf32> -> vector<32x128xf32>
    %108 = arith.truncf %75 : vector<32x32xf32> to vector<32x32xbf16>
    %cst_44 = arith.constant dense<0.000000e+00> : vector<32x128xf32>
    %109 = tpu.matmul %108, %2, %cst_44 {dimension_numbers = #tpu.dot_dimension_numbers<[1], [0], [0], [1], [0, 0, 1, 1], [], []>} : vector<32x32xbf16>, vector<32x128xbf16>, vector<32x128xf32> -> vector<32x128xf32>
    %110 = arith.addf %107, %109 : vector<32x128xf32>
    %111 = vector.broadcast %3 : vector<1x128xf32> to vector<32x128xf32>
    %112 = arith.addf %110, %111 : vector<32x128xf32>
    %113 = arith.negf %112 : vector<32x128xf32>
    %114 = math.exp %113 : vector<32x128xf32>
    %cst_45 = arith.constant 1.000000e+00 : f32
    %115 = vector.broadcast %cst_45 : f32 to vector<32x128xf32>
    %116 = arith.addf %115, %114 : vector<32x128xf32>
    %117 = arith.divf %115, %116 : vector<32x128xf32>
    %118 = math.tanh %112 : vector<32x128xf32>
    %119 = vector.extract_strided_slice %117 {offsets = [0, 0], sizes = [32, 32], strides = [1, 1]} : vector<32x128xf32> to vector<32x32xf32>
    %120 = vector.extract_strided_slice %117 {offsets = [0, 32], sizes = [32, 32], strides = [1, 1]} : vector<32x128xf32> to vector<32x32xf32>
    %121 = vector.extract_strided_slice %118 {offsets = [0, 64], sizes = [32, 32], strides = [1, 1]} : vector<32x128xf32> to vector<32x32xf32>
    %122 = vector.extract_strided_slice %117 {offsets = [0, 96], sizes = [32, 32], strides = [1, 1]} : vector<32x128xf32> to vector<32x32xf32>
    %123 = arith.mulf %120, %73 : vector<32x32xf32>
    %124 = arith.mulf %119, %121 : vector<32x32xf32>
    %125 = arith.addf %123, %124 : vector<32x32xf32>
    %126 = math.tanh %125 : vector<32x32xf32>
    %127 = arith.mulf %122, %126 : vector<32x32xf32>
    %128 = arith.truncf %127 : vector<32x32xf32> to vector<32x32xbf16>
    %cst_46 = arith.constant dense<0.000000e+00> : vector<32x128xf32>
    %129 = tpu.matmul %128, %4, %cst_46 {dimension_numbers = #tpu.dot_dimension_numbers<[1], [0], [0], [1], [0, 0, 1, 1], [], []>} : vector<32x32xbf16>, vector<32x128xbf16>, vector<32x128xf32> -> vector<32x128xf32>
    %130 = vector.broadcast %5 : vector<1x128xf32> to vector<32x128xf32>
    %131 = arith.addf %129, %130 : vector<32x128xf32>
    %cst_47 = arith.constant 0.000000e+00 : f32
    %132 = vector.broadcast %cst_47 : f32 to vector<32x128xf32>
    %133 = arith.maximumf %131, %132 : vector<32x128xf32>
    %134 = arith.truncf %133 : vector<32x128xf32> to vector<32x128xbf16>
    %cst_48 = arith.constant dense<0.000000e+00> : vector<32x128xf32>
    %135 = tpu.matmul %134, %6, %cst_48 {dimension_numbers = #tpu.dot_dimension_numbers<[1], [0], [0], [1], [0, 0, 1, 1], [], []>} : vector<32x128xbf16>, vector<128x128xbf16>, vector<32x128xf32> -> vector<32x128xf32>
    %136 = vector.broadcast %7 : vector<1x128xf32> to vector<32x128xf32>
    %137 = arith.addf %135, %136 : vector<32x128xf32>
    %c32_49 = arith.constant 32 : index
    %c0_50 = arith.constant 0 : index
    %138 = vector.load %arg11[%c32_49, %c0_50] : memref<256x128xf32, #tpu.memory_space<vmem>>, vector<32x128xf32>
    tpu.vector_store %arg11[%c32_49, %c0_50], %137 {strides = array<i32>} : memref<256x128xf32, #tpu.memory_space<vmem>>, vector<32x128xf32>,
    %c96 = arith.constant 96 : index
    %c0_51 = arith.constant 0 : index
    %139 = vector.load %arg0[%c96, %c0_51] : memref<256x128xf32, #tpu.memory_space<vmem>>, vector<32x128xf32>
    %140 = arith.truncf %105 : vector<32x32xf32> to vector<32x32xbf16>
    %cst_52 = arith.constant dense<0.000000e+00> : vector<32x128xf32>
    %141 = tpu.matmul %140, %0, %cst_52 {dimension_numbers = #tpu.dot_dimension_numbers<[1], [0], [0], [1], [0, 0, 1, 1], [], []>} : vector<32x32xbf16>, vector<32x128xbf16>, vector<32x128xf32> -> vector<32x128xf32>
    %142 = arith.addf %139, %141 : vector<32x128xf32>
    %143 = arith.negf %142 : vector<32x128xf32>
    %144 = math.exp %143 : vector<32x128xf32>
    %cst_53 = arith.constant 1.000000e+00 : f32
    %145 = vector.broadcast %cst_53 : f32 to vector<32x128xf32>
    %146 = arith.addf %145, %144 : vector<32x128xf32>
    %147 = arith.divf %145, %146 : vector<32x128xf32>
    %148 = math.tanh %142 : vector<32x128xf32>
    %149 = vector.extract_strided_slice %147 {offsets = [0, 0], sizes = [32, 32], strides = [1, 1]} : vector<32x128xf32> to vector<32x32xf32>
    %150 = vector.extract_strided_slice %147 {offsets = [0, 32], sizes = [32, 32], strides = [1, 1]} : vector<32x128xf32> to vector<32x32xf32>
    %151 = vector.extract_strided_slice %148 {offsets = [0, 64], sizes = [32, 32], strides = [1, 1]} : vector<32x128xf32> to vector<32x32xf32>
    %152 = vector.extract_strided_slice %147 {offsets = [0, 96], sizes = [32, 32], strides = [1, 1]} : vector<32x128xf32> to vector<32x32xf32>
    %153 = arith.mulf %150, %103 : vector<32x32xf32>
    %154 = arith.mulf %149, %151 : vector<32x32xf32>
    %155 = arith.addf %153, %154 : vector<32x32xf32>
    %156 = math.tanh %155 : vector<32x32xf32>
    %157 = arith.mulf %152, %156 : vector<32x32xf32>
    %158 = arith.truncf %105 : vector<32x32xf32> to vector<32x32xbf16>
    %cst_54 = arith.constant dense<0.000000e+00> : vector<32x128xf32>
    %159 = tpu.matmul %158, %1, %cst_54 {dimension_numbers = #tpu.dot_dimension_numbers<[1], [0], [0], [1], [0, 0, 1, 1], [], []>} : vector<32x32xbf16>, vector<32x128xbf16>, vector<32x128xf32> -> vector<32x128xf32>
    %160 = arith.truncf %127 : vector<32x32xf32> to vector<32x32xbf16>
    %cst_55 = arith.constant dense<0.000000e+00> : vector<32x128xf32>
    %161 = tpu.matmul %160, %2, %cst_55 {dimension_numbers = #tpu.dot_dimension_numbers<[1], [0], [0], [1], [0, 0, 1, 1], [], []>} : vector<32x32xbf16>, vector<32x128xbf16>, vector<32x128xf32> -> vector<32x128xf32>
    %162 = arith.addf %159, %161 : vector<32x128xf32>
    %163 = vector.broadcast %3 : vector<1x128xf32> to vector<32x128xf32>
    %164 = arith.addf %162, %163 : vector<32x128xf32>
    %165 = arith.negf %164 : vector<32x128xf32>
    %166 = math.exp %165 : vector<32x128xf32>
    %cst_56 = arith.constant 1.000000e+00 : f32
    %167 = vector.broadcast %cst_56 : f32 to vector<32x128xf32>
    %168 = arith.addf %167, %166 : vector<32x128xf32>
    %169 = arith.divf %167, %168 : vector<32x128xf32>
    %170 = math.tanh %164 : vector<32x128xf32>
    %171 = vector.extract_strided_slice %169 {offsets = [0, 0], sizes = [32, 32], strides = [1, 1]} : vector<32x128xf32> to vector<32x32xf32>
    %172 = vector.extract_strided_slice %169 {offsets = [0, 32], sizes = [32, 32], strides = [1, 1]} : vector<32x128xf32> to vector<32x32xf32>
    %173 = vector.extract_strided_slice %170 {offsets = [0, 64], sizes = [32, 32], strides = [1, 1]} : vector<32x128xf32> to vector<32x32xf32>
    %174 = vector.extract_strided_slice %169 {offsets = [0, 96], sizes = [32, 32], strides = [1, 1]} : vector<32x128xf32> to vector<32x32xf32>
    %175 = arith.mulf %172, %125 : vector<32x32xf32>
    %176 = arith.mulf %171, %173 : vector<32x32xf32>
    %177 = arith.addf %175, %176 : vector<32x32xf32>
    %178 = math.tanh %177 : vector<32x32xf32>
    %179 = arith.mulf %174, %178 : vector<32x32xf32>
    %180 = arith.truncf %179 : vector<32x32xf32> to vector<32x32xbf16>
    %cst_57 = arith.constant dense<0.000000e+00> : vector<32x128xf32>
    %181 = tpu.matmul %180, %4, %cst_57 {dimension_numbers = #tpu.dot_dimension_numbers<[1], [0], [0], [1], [0, 0, 1, 1], [], []>} : vector<32x32xbf16>, vector<32x128xbf16>, vector<32x128xf32> -> vector<32x128xf32>
    %182 = vector.broadcast %5 : vector<1x128xf32> to vector<32x128xf32>
    %183 = arith.addf %181, %182 : vector<32x128xf32>
    %cst_58 = arith.constant 0.000000e+00 : f32
    %184 = vector.broadcast %cst_58 : f32 to vector<32x128xf32>
    %185 = arith.maximumf %183, %184 : vector<32x128xf32>
    %186 = arith.truncf %185 : vector<32x128xf32> to vector<32x128xbf16>
    %cst_59 = arith.constant dense<0.000000e+00> : vector<32x128xf32>
    %187 = tpu.matmul %186, %6, %cst_59 {dimension_numbers = #tpu.dot_dimension_numbers<[1], [0], [0], [1], [0, 0, 1, 1], [], []>} : vector<32x128xbf16>, vector<128x128xbf16>, vector<32x128xf32> -> vector<32x128xf32>
    %188 = vector.broadcast %7 : vector<1x128xf32> to vector<32x128xf32>
    %189 = arith.addf %187, %188 : vector<32x128xf32>
    %c64_60 = arith.constant 64 : index
    %c0_61 = arith.constant 0 : index
    %190 = vector.load %arg11[%c64_60, %c0_61] : memref<256x128xf32, #tpu.memory_space<vmem>>, vector<32x128xf32>
    tpu.vector_store %arg11[%c64_60, %c0_61], %189 {strides = array<i32>} : memref<256x128xf32, #tpu.memory_space<vmem>>, vector<32x128xf32>,
    %c128 = arith.constant 128 : index
    %c0_62 = arith.constant 0 : index
    %191 = vector.load %arg0[%c128, %c0_62] : memref<256x128xf32, #tpu.memory_space<vmem>>, vector<32x128xf32>
    %192 = arith.truncf %157 : vector<32x32xf32> to vector<32x32xbf16>
    %cst_63 = arith.constant dense<0.000000e+00> : vector<32x128xf32>
    %193 = tpu.matmul %192, %0, %cst_63 {dimension_numbers = #tpu.dot_dimension_numbers<[1], [0], [0], [1], [0, 0, 1, 1], [], []>} : vector<32x32xbf16>, vector<32x128xbf16>, vector<32x128xf32> -> vector<32x128xf32>
    %194 = arith.addf %191, %193 : vector<32x128xf32>
    %195 = arith.negf %194 : vector<32x128xf32>
    %196 = math.exp %195 : vector<32x128xf32>
    %cst_64 = arith.constant 1.000000e+00 : f32
    %197 = vector.broadcast %cst_64 : f32 to vector<32x128xf32>
    %198 = arith.addf %197, %196 : vector<32x128xf32>
    %199 = arith.divf %197, %198 : vector<32x128xf32>
    %200 = math.tanh %194 : vector<32x128xf32>
    %201 = vector.extract_strided_slice %199 {offsets = [0, 0], sizes = [32, 32], strides = [1, 1]} : vector<32x128xf32> to vector<32x32xf32>
    %202 = vector.extract_strided_slice %199 {offsets = [0, 32], sizes = [32, 32], strides = [1, 1]} : vector<32x128xf32> to vector<32x32xf32>
    %203 = vector.extract_strided_slice %200 {offsets = [0, 64], sizes = [32, 32], strides = [1, 1]} : vector<32x128xf32> to vector<32x32xf32>
    %204 = vector.extract_strided_slice %199 {offsets = [0, 96], sizes = [32, 32], strides = [1, 1]} : vector<32x128xf32> to vector<32x32xf32>
    %205 = arith.mulf %202, %155 : vector<32x32xf32>
    %206 = arith.mulf %201, %203 : vector<32x32xf32>
    %207 = arith.addf %205, %206 : vector<32x32xf32>
    %208 = math.tanh %207 : vector<32x32xf32>
    %209 = arith.mulf %204, %208 : vector<32x32xf32>
    %210 = arith.truncf %157 : vector<32x32xf32> to vector<32x32xbf16>
    %cst_65 = arith.constant dense<0.000000e+00> : vector<32x128xf32>
    %211 = tpu.matmul %210, %1, %cst_65 {dimension_numbers = #tpu.dot_dimension_numbers<[1], [0], [0], [1], [0, 0, 1, 1], [], []>} : vector<32x32xbf16>, vector<32x128xbf16>, vector<32x128xf32> -> vector<32x128xf32>
    %212 = arith.truncf %179 : vector<32x32xf32> to vector<32x32xbf16>
    %cst_66 = arith.constant dense<0.000000e+00> : vector<32x128xf32>
    %213 = tpu.matmul %212, %2, %cst_66 {dimension_numbers = #tpu.dot_dimension_numbers<[1], [0], [0], [1], [0, 0, 1, 1], [], []>} : vector<32x32xbf16>, vector<32x128xbf16>, vector<32x128xf32> -> vector<32x128xf32>
    %214 = arith.addf %211, %213 : vector<32x128xf32>
    %215 = vector.broadcast %3 : vector<1x128xf32> to vector<32x128xf32>
    %216 = arith.addf %214, %215 : vector<32x128xf32>
    %217 = arith.negf %216 : vector<32x128xf32>
    %218 = math.exp %217 : vector<32x128xf32>
    %cst_67 = arith.constant 1.000000e+00 : f32
    %219 = vector.broadcast %cst_67 : f32 to vector<32x128xf32>
    %220 = arith.addf %219, %218 : vector<32x128xf32>
    %221 = arith.divf %219, %220 : vector<32x128xf32>
    %222 = math.tanh %216 : vector<32x128xf32>
    %223 = vector.extract_strided_slice %221 {offsets = [0, 0], sizes = [32, 32], strides = [1, 1]} : vector<32x128xf32> to vector<32x32xf32>
    %224 = vector.extract_strided_slice %221 {offsets = [0, 32], sizes = [32, 32], strides = [1, 1]} : vector<32x128xf32> to vector<32x32xf32>
    %225 = vector.extract_strided_slice %222 {offsets = [0, 64], sizes = [32, 32], strides = [1, 1]} : vector<32x128xf32> to vector<32x32xf32>
    %226 = vector.extract_strided_slice %221 {offsets = [0, 96], sizes = [32, 32], strides = [1, 1]} : vector<32x128xf32> to vector<32x32xf32>
    %227 = arith.mulf %224, %177 : vector<32x32xf32>
    %228 = arith.mulf %223, %225 : vector<32x32xf32>
    %229 = arith.addf %227, %228 : vector<32x32xf32>
    %230 = math.tanh %229 : vector<32x32xf32>
    %231 = arith.mulf %226, %230 : vector<32x32xf32>
    %232 = arith.truncf %231 : vector<32x32xf32> to vector<32x32xbf16>
    %cst_68 = arith.constant dense<0.000000e+00> : vector<32x128xf32>
    %233 = tpu.matmul %232, %4, %cst_68 {dimension_numbers = #tpu.dot_dimension_numbers<[1], [0], [0], [1], [0, 0, 1, 1], [], []>} : vector<32x32xbf16>, vector<32x128xbf16>, vector<32x128xf32> -> vector<32x128xf32>
    %234 = vector.broadcast %5 : vector<1x128xf32> to vector<32x128xf32>
    %235 = arith.addf %233, %234 : vector<32x128xf32>
    %cst_69 = arith.constant 0.000000e+00 : f32
    %236 = vector.broadcast %cst_69 : f32 to vector<32x128xf32>
    %237 = arith.maximumf %235, %236 : vector<32x128xf32>
    %238 = arith.truncf %237 : vector<32x128xf32> to vector<32x128xbf16>
    %cst_70 = arith.constant dense<0.000000e+00> : vector<32x128xf32>
    %239 = tpu.matmul %238, %6, %cst_70 {dimension_numbers = #tpu.dot_dimension_numbers<[1], [0], [0], [1], [0, 0, 1, 1], [], []>} : vector<32x128xbf16>, vector<128x128xbf16>, vector<32x128xf32> -> vector<32x128xf32>
    %240 = vector.broadcast %7 : vector<1x128xf32> to vector<32x128xf32>
    %241 = arith.addf %239, %240 : vector<32x128xf32>
    %c96_71 = arith.constant 96 : index
    %c0_72 = arith.constant 0 : index
    %242 = vector.load %arg11[%c96_71, %c0_72] : memref<256x128xf32, #tpu.memory_space<vmem>>, vector<32x128xf32>
    tpu.vector_store %arg11[%c96_71, %c0_72], %241 {strides = array<i32>} : memref<256x128xf32, #tpu.memory_space<vmem>>, vector<32x128xf32>,
    %c160 = arith.constant 160 : index
    %c0_73 = arith.constant 0 : index
    %243 = vector.load %arg0[%c160, %c0_73] : memref<256x128xf32, #tpu.memory_space<vmem>>, vector<32x128xf32>
    %244 = arith.truncf %209 : vector<32x32xf32> to vector<32x32xbf16>
    %cst_74 = arith.constant dense<0.000000e+00> : vector<32x128xf32>
    %245 = tpu.matmul %244, %0, %cst_74 {dimension_numbers = #tpu.dot_dimension_numbers<[1], [0], [0], [1], [0, 0, 1, 1], [], []>} : vector<32x32xbf16>, vector<32x128xbf16>, vector<32x128xf32> -> vector<32x128xf32>
    %246 = arith.addf %243, %245 : vector<32x128xf32>
    %247 = arith.negf %246 : vector<32x128xf32>
    %248 = math.exp %247 : vector<32x128xf32>
    %cst_75 = arith.constant 1.000000e+00 : f32
    %249 = vector.broadcast %cst_75 : f32 to vector<32x128xf32>
    %250 = arith.addf %249, %248 : vector<32x128xf32>
    %251 = arith.divf %249, %250 : vector<32x128xf32>
    %252 = math.tanh %246 : vector<32x128xf32>
    %253 = vector.extract_strided_slice %251 {offsets = [0, 0], sizes = [32, 32], strides = [1, 1]} : vector<32x128xf32> to vector<32x32xf32>
    %254 = vector.extract_strided_slice %251 {offsets = [0, 32], sizes = [32, 32], strides = [1, 1]} : vector<32x128xf32> to vector<32x32xf32>
    %255 = vector.extract_strided_slice %252 {offsets = [0, 64], sizes = [32, 32], strides = [1, 1]} : vector<32x128xf32> to vector<32x32xf32>
    %256 = vector.extract_strided_slice %251 {offsets = [0, 96], sizes = [32, 32], strides = [1, 1]} : vector<32x128xf32> to vector<32x32xf32>
    %257 = arith.mulf %254, %207 : vector<32x32xf32>
    %258 = arith.mulf %253, %255 : vector<32x32xf32>
    %259 = arith.addf %257, %258 : vector<32x32xf32>
    %260 = math.tanh %259 : vector<32x32xf32>
    %261 = arith.mulf %256, %260 : vector<32x32xf32>
    %262 = arith.truncf %209 : vector<32x32xf32> to vector<32x32xbf16>
    %cst_76 = arith.constant dense<0.000000e+00> : vector<32x128xf32>
    %263 = tpu.matmul %262, %1, %cst_76 {dimension_numbers = #tpu.dot_dimension_numbers<[1], [0], [0], [1], [0, 0, 1, 1], [], []>} : vector<32x32xbf16>, vector<32x128xbf16>, vector<32x128xf32> -> vector<32x128xf32>
    %264 = arith.truncf %231 : vector<32x32xf32> to vector<32x32xbf16>
    %cst_77 = arith.constant dense<0.000000e+00> : vector<32x128xf32>
    %265 = tpu.matmul %264, %2, %cst_77 {dimension_numbers = #tpu.dot_dimension_numbers<[1], [0], [0], [1], [0, 0, 1, 1], [], []>} : vector<32x32xbf16>, vector<32x128xbf16>, vector<32x128xf32> -> vector<32x128xf32>
    %266 = arith.addf %263, %265 : vector<32x128xf32>
    %267 = vector.broadcast %3 : vector<1x128xf32> to vector<32x128xf32>
    %268 = arith.addf %266, %267 : vector<32x128xf32>
    %269 = arith.negf %268 : vector<32x128xf32>
    %270 = math.exp %269 : vector<32x128xf32>
    %cst_78 = arith.constant 1.000000e+00 : f32
    %271 = vector.broadcast %cst_78 : f32 to vector<32x128xf32>
    %272 = arith.addf %271, %270 : vector<32x128xf32>
    %273 = arith.divf %271, %272 : vector<32x128xf32>
    %274 = math.tanh %268 : vector<32x128xf32>
    %275 = vector.extract_strided_slice %273 {offsets = [0, 0], sizes = [32, 32], strides = [1, 1]} : vector<32x128xf32> to vector<32x32xf32>
    %276 = vector.extract_strided_slice %273 {offsets = [0, 32], sizes = [32, 32], strides = [1, 1]} : vector<32x128xf32> to vector<32x32xf32>
    %277 = vector.extract_strided_slice %274 {offsets = [0, 64], sizes = [32, 32], strides = [1, 1]} : vector<32x128xf32> to vector<32x32xf32>
    %278 = vector.extract_strided_slice %273 {offsets = [0, 96], sizes = [32, 32], strides = [1, 1]} : vector<32x128xf32> to vector<32x32xf32>
    %279 = arith.mulf %276, %229 : vector<32x32xf32>
    %280 = arith.mulf %275, %277 : vector<32x32xf32>
    %281 = arith.addf %279, %280 : vector<32x32xf32>
    %282 = math.tanh %281 : vector<32x32xf32>
    %283 = arith.mulf %278, %282 : vector<32x32xf32>
    %284 = arith.truncf %283 : vector<32x32xf32> to vector<32x32xbf16>
    %cst_79 = arith.constant dense<0.000000e+00> : vector<32x128xf32>
    %285 = tpu.matmul %284, %4, %cst_79 {dimension_numbers = #tpu.dot_dimension_numbers<[1], [0], [0], [1], [0, 0, 1, 1], [], []>} : vector<32x32xbf16>, vector<32x128xbf16>, vector<32x128xf32> -> vector<32x128xf32>
    %286 = vector.broadcast %5 : vector<1x128xf32> to vector<32x128xf32>
    %287 = arith.addf %285, %286 : vector<32x128xf32>
    %cst_80 = arith.constant 0.000000e+00 : f32
    %288 = vector.broadcast %cst_80 : f32 to vector<32x128xf32>
    %289 = arith.maximumf %287, %288 : vector<32x128xf32>
    %290 = arith.truncf %289 : vector<32x128xf32> to vector<32x128xbf16>
    %cst_81 = arith.constant dense<0.000000e+00> : vector<32x128xf32>
    %291 = tpu.matmul %290, %6, %cst_81 {dimension_numbers = #tpu.dot_dimension_numbers<[1], [0], [0], [1], [0, 0, 1, 1], [], []>} : vector<32x128xbf16>, vector<128x128xbf16>, vector<32x128xf32> -> vector<32x128xf32>
    %292 = vector.broadcast %7 : vector<1x128xf32> to vector<32x128xf32>
    %293 = arith.addf %291, %292 : vector<32x128xf32>
    %c128_82 = arith.constant 128 : index
    %c0_83 = arith.constant 0 : index
    %294 = vector.load %arg11[%c128_82, %c0_83] : memref<256x128xf32, #tpu.memory_space<vmem>>, vector<32x128xf32>
    tpu.vector_store %arg11[%c128_82, %c0_83], %293 {strides = array<i32>} : memref<256x128xf32, #tpu.memory_space<vmem>>, vector<32x128xf32>,
    %c192 = arith.constant 192 : index
    %c0_84 = arith.constant 0 : index
    %295 = vector.load %arg0[%c192, %c0_84] : memref<256x128xf32, #tpu.memory_space<vmem>>, vector<32x128xf32>
    %296 = arith.truncf %261 : vector<32x32xf32> to vector<32x32xbf16>
    %cst_85 = arith.constant dense<0.000000e+00> : vector<32x128xf32>
    %297 = tpu.matmul %296, %0, %cst_85 {dimension_numbers = #tpu.dot_dimension_numbers<[1], [0], [0], [1], [0, 0, 1, 1], [], []>} : vector<32x32xbf16>, vector<32x128xbf16>, vector<32x128xf32> -> vector<32x128xf32>
    %298 = arith.addf %295, %297 : vector<32x128xf32>
    %299 = arith.negf %298 : vector<32x128xf32>
    %300 = math.exp %299 : vector<32x128xf32>
    %cst_86 = arith.constant 1.000000e+00 : f32
    %301 = vector.broadcast %cst_86 : f32 to vector<32x128xf32>
    %302 = arith.addf %301, %300 : vector<32x128xf32>
    %303 = arith.divf %301, %302 : vector<32x128xf32>
    %304 = math.tanh %298 : vector<32x128xf32>
    %305 = vector.extract_strided_slice %303 {offsets = [0, 0], sizes = [32, 32], strides = [1, 1]} : vector<32x128xf32> to vector<32x32xf32>
    %306 = vector.extract_strided_slice %303 {offsets = [0, 32], sizes = [32, 32], strides = [1, 1]} : vector<32x128xf32> to vector<32x32xf32>
    %307 = vector.extract_strided_slice %304 {offsets = [0, 64], sizes = [32, 32], strides = [1, 1]} : vector<32x128xf32> to vector<32x32xf32>
    %308 = vector.extract_strided_slice %303 {offsets = [0, 96], sizes = [32, 32], strides = [1, 1]} : vector<32x128xf32> to vector<32x32xf32>
    %309 = arith.mulf %306, %259 : vector<32x32xf32>
    %310 = arith.mulf %305, %307 : vector<32x32xf32>
    %311 = arith.addf %309, %310 : vector<32x32xf32>
    %312 = math.tanh %311 : vector<32x32xf32>
    %313 = arith.mulf %308, %312 : vector<32x32xf32>
    %314 = arith.truncf %261 : vector<32x32xf32> to vector<32x32xbf16>
    %cst_87 = arith.constant dense<0.000000e+00> : vector<32x128xf32>
    %315 = tpu.matmul %314, %1, %cst_87 {dimension_numbers = #tpu.dot_dimension_numbers<[1], [0], [0], [1], [0, 0, 1, 1], [], []>} : vector<32x32xbf16>, vector<32x128xbf16>, vector<32x128xf32> -> vector<32x128xf32>
    %316 = arith.truncf %283 : vector<32x32xf32> to vector<32x32xbf16>
    %cst_88 = arith.constant dense<0.000000e+00> : vector<32x128xf32>
    %317 = tpu.matmul %316, %2, %cst_88 {dimension_numbers = #tpu.dot_dimension_numbers<[1], [0], [0], [1], [0, 0, 1, 1], [], []>} : vector<32x32xbf16>, vector<32x128xbf16>, vector<32x128xf32> -> vector<32x128xf32>
    %318 = arith.addf %315, %317 : vector<32x128xf32>
    %319 = vector.broadcast %3 : vector<1x128xf32> to vector<32x128xf32>
    %320 = arith.addf %318, %319 : vector<32x128xf32>
    %321 = arith.negf %320 : vector<32x128xf32>
    %322 = math.exp %321 : vector<32x128xf32>
    %cst_89 = arith.constant 1.000000e+00 : f32
    %323 = vector.broadcast %cst_89 : f32 to vector<32x128xf32>
    %324 = arith.addf %323, %322 : vector<32x128xf32>
    %325 = arith.divf %323, %324 : vector<32x128xf32>
    %326 = math.tanh %320 : vector<32x128xf32>
    %327 = vector.extract_strided_slice %325 {offsets = [0, 0], sizes = [32, 32], strides = [1, 1]} : vector<32x128xf32> to vector<32x32xf32>
    %328 = vector.extract_strided_slice %325 {offsets = [0, 32], sizes = [32, 32], strides = [1, 1]} : vector<32x128xf32> to vector<32x32xf32>
    %329 = vector.extract_strided_slice %326 {offsets = [0, 64], sizes = [32, 32], strides = [1, 1]} : vector<32x128xf32> to vector<32x32xf32>
    %330 = vector.extract_strided_slice %325 {offsets = [0, 96], sizes = [32, 32], strides = [1, 1]} : vector<32x128xf32> to vector<32x32xf32>
    %331 = arith.mulf %328, %281 : vector<32x32xf32>
    %332 = arith.mulf %327, %329 : vector<32x32xf32>
    %333 = arith.addf %331, %332 : vector<32x32xf32>
    %334 = math.tanh %333 : vector<32x32xf32>
    %335 = arith.mulf %330, %334 : vector<32x32xf32>
    %336 = arith.truncf %335 : vector<32x32xf32> to vector<32x32xbf16>
    %cst_90 = arith.constant dense<0.000000e+00> : vector<32x128xf32>
    %337 = tpu.matmul %336, %4, %cst_90 {dimension_numbers = #tpu.dot_dimension_numbers<[1], [0], [0], [1], [0, 0, 1, 1], [], []>} : vector<32x32xbf16>, vector<32x128xbf16>, vector<32x128xf32> -> vector<32x128xf32>
    %338 = vector.broadcast %5 : vector<1x128xf32> to vector<32x128xf32>
    %339 = arith.addf %337, %338 : vector<32x128xf32>
    %cst_91 = arith.constant 0.000000e+00 : f32
    %340 = vector.broadcast %cst_91 : f32 to vector<32x128xf32>
    %341 = arith.maximumf %339, %340 : vector<32x128xf32>
    %342 = arith.truncf %341 : vector<32x128xf32> to vector<32x128xbf16>
    %cst_92 = arith.constant dense<0.000000e+00> : vector<32x128xf32>
    %343 = tpu.matmul %342, %6, %cst_92 {dimension_numbers = #tpu.dot_dimension_numbers<[1], [0], [0], [1], [0, 0, 1, 1], [], []>} : vector<32x128xbf16>, vector<128x128xbf16>, vector<32x128xf32> -> vector<32x128xf32>
    %344 = vector.broadcast %7 : vector<1x128xf32> to vector<32x128xf32>
    %345 = arith.addf %343, %344 : vector<32x128xf32>
    %c160_93 = arith.constant 160 : index
    %c0_94 = arith.constant 0 : index
    %346 = vector.load %arg11[%c160_93, %c0_94] : memref<256x128xf32, #tpu.memory_space<vmem>>, vector<32x128xf32>
    tpu.vector_store %arg11[%c160_93, %c0_94], %345 {strides = array<i32>} : memref<256x128xf32, #tpu.memory_space<vmem>>, vector<32x128xf32>,
    %c224 = arith.constant 224 : index
    %c0_95 = arith.constant 0 : index
    %347 = vector.load %arg0[%c224, %c0_95] : memref<256x128xf32, #tpu.memory_space<vmem>>, vector<32x128xf32>
    %348 = arith.truncf %313 : vector<32x32xf32> to vector<32x32xbf16>
    %cst_96 = arith.constant dense<0.000000e+00> : vector<32x128xf32>
    %349 = tpu.matmul %348, %0, %cst_96 {dimension_numbers = #tpu.dot_dimension_numbers<[1], [0], [0], [1], [0, 0, 1, 1], [], []>} : vector<32x32xbf16>, vector<32x128xbf16>, vector<32x128xf32> -> vector<32x128xf32>
    %350 = arith.addf %347, %349 : vector<32x128xf32>
    %351 = arith.negf %350 : vector<32x128xf32>
    %352 = math.exp %351 : vector<32x128xf32>
    %cst_97 = arith.constant 1.000000e+00 : f32
    %353 = vector.broadcast %cst_97 : f32 to vector<32x128xf32>
    %354 = arith.addf %353, %352 : vector<32x128xf32>
    %355 = arith.divf %353, %354 : vector<32x128xf32>
    %356 = math.tanh %350 : vector<32x128xf32>
    %357 = vector.extract_strided_slice %355 {offsets = [0, 0], sizes = [32, 32], strides = [1, 1]} : vector<32x128xf32> to vector<32x32xf32>
    %358 = vector.extract_strided_slice %355 {offsets = [0, 32], sizes = [32, 32], strides = [1, 1]} : vector<32x128xf32> to vector<32x32xf32>
    %359 = vector.extract_strided_slice %356 {offsets = [0, 64], sizes = [32, 32], strides = [1, 1]} : vector<32x128xf32> to vector<32x32xf32>
    %360 = vector.extract_strided_slice %355 {offsets = [0, 96], sizes = [32, 32], strides = [1, 1]} : vector<32x128xf32> to vector<32x32xf32>
    %361 = arith.mulf %358, %311 : vector<32x32xf32>
    %362 = arith.mulf %357, %359 : vector<32x32xf32>
    %363 = arith.addf %361, %362 : vector<32x32xf32>
    %364 = math.tanh %363 : vector<32x32xf32>
    %365 = arith.mulf %360, %364 : vector<32x32xf32>
    %366 = arith.truncf %313 : vector<32x32xf32> to vector<32x32xbf16>
    %cst_98 = arith.constant dense<0.000000e+00> : vector<32x128xf32>
    %367 = tpu.matmul %366, %1, %cst_98 {dimension_numbers = #tpu.dot_dimension_numbers<[1], [0], [0], [1], [0, 0, 1, 1], [], []>} : vector<32x32xbf16>, vector<32x128xbf16>, vector<32x128xf32> -> vector<32x128xf32>
    %368 = arith.truncf %335 : vector<32x32xf32> to vector<32x32xbf16>
    %cst_99 = arith.constant dense<0.000000e+00> : vector<32x128xf32>
    %369 = tpu.matmul %368, %2, %cst_99 {dimension_numbers = #tpu.dot_dimension_numbers<[1], [0], [0], [1], [0, 0, 1, 1], [], []>} : vector<32x32xbf16>, vector<32x128xbf16>, vector<32x128xf32> -> vector<32x128xf32>
    %370 = arith.addf %367, %369 : vector<32x128xf32>
    %371 = vector.broadcast %3 : vector<1x128xf32> to vector<32x128xf32>
    %372 = arith.addf %370, %371 : vector<32x128xf32>
    %373 = arith.negf %372 : vector<32x128xf32>
    %374 = math.exp %373 : vector<32x128xf32>
    %cst_100 = arith.constant 1.000000e+00 : f32
    %375 = vector.broadcast %cst_100 : f32 to vector<32x128xf32>
    %376 = arith.addf %375, %374 : vector<32x128xf32>
    %377 = arith.divf %375, %376 : vector<32x128xf32>
    %378 = math.tanh %372 : vector<32x128xf32>
    %379 = vector.extract_strided_slice %377 {offsets = [0, 0], sizes = [32, 32], strides = [1, 1]} : vector<32x128xf32> to vector<32x32xf32>
    %380 = vector.extract_strided_slice %377 {offsets = [0, 32], sizes = [32, 32], strides = [1, 1]} : vector<32x128xf32> to vector<32x32xf32>
    %381 = vector.extract_strided_slice %378 {offsets = [0, 64], sizes = [32, 32], strides = [1, 1]} : vector<32x128xf32> to vector<32x32xf32>
    %382 = vector.extract_strided_slice %377 {offsets = [0, 96], sizes = [32, 32], strides = [1, 1]} : vector<32x128xf32> to vector<32x32xf32>
    %383 = arith.mulf %380, %333 : vector<32x32xf32>
    %384 = arith.mulf %379, %381 : vector<32x32xf32>
    %385 = arith.addf %383, %384 : vector<32x32xf32>
    %386 = math.tanh %385 : vector<32x32xf32>
    %387 = arith.mulf %382, %386 : vector<32x32xf32>
    %388 = arith.truncf %387 : vector<32x32xf32> to vector<32x32xbf16>
    %cst_101 = arith.constant dense<0.000000e+00> : vector<32x128xf32>
    %389 = tpu.matmul %388, %4, %cst_101 {dimension_numbers = #tpu.dot_dimension_numbers<[1], [0], [0], [1], [0, 0, 1, 1], [], []>} : vector<32x32xbf16>, vector<32x128xbf16>, vector<32x128xf32> -> vector<32x128xf32>
    %390 = vector.broadcast %5 : vector<1x128xf32> to vector<32x128xf32>
    %391 = arith.addf %389, %390 : vector<32x128xf32>
    %cst_102 = arith.constant 0.000000e+00 : f32
    %392 = vector.broadcast %cst_102 : f32 to vector<32x128xf32>
    %393 = arith.maximumf %391, %392 : vector<32x128xf32>
    %394 = arith.truncf %393 : vector<32x128xf32> to vector<32x128xbf16>
    %cst_103 = arith.constant dense<0.000000e+00> : vector<32x128xf32>
    %395 = tpu.matmul %394, %6, %cst_103 {dimension_numbers = #tpu.dot_dimension_numbers<[1], [0], [0], [1], [0, 0, 1, 1], [], []>} : vector<32x128xbf16>, vector<128x128xbf16>, vector<32x128xf32> -> vector<32x128xf32>
    %396 = vector.broadcast %7 : vector<1x128xf32> to vector<32x128xf32>
    %397 = arith.addf %395, %396 : vector<32x128xf32>
    %c192_104 = arith.constant 192 : index
    %c0_105 = arith.constant 0 : index
    %398 = vector.load %arg11[%c192_104, %c0_105] : memref<256x128xf32, #tpu.memory_space<vmem>>, vector<32x128xf32>
    tpu.vector_store %arg11[%c192_104, %c0_105], %397 {strides = array<i32>} : memref<256x128xf32, #tpu.memory_space<vmem>>, vector<32x128xf32>,
    %399 = arith.truncf %365 : vector<32x32xf32> to vector<32x32xbf16>
    %cst_106 = arith.constant dense<0.000000e+00> : vector<32x128xf32>
    %400 = tpu.matmul %399, %1, %cst_106 {dimension_numbers = #tpu.dot_dimension_numbers<[1], [0], [0], [1], [0, 0, 1, 1], [], []>} : vector<32x32xbf16>, vector<32x128xbf16>, vector<32x128xf32> -> vector<32x128xf32>
    %401 = arith.truncf %387 : vector<32x32xf32> to vector<32x32xbf16>
    %cst_107 = arith.constant dense<0.000000e+00> : vector<32x128xf32>
    %402 = tpu.matmul %401, %2, %cst_107 {dimension_numbers = #tpu.dot_dimension_numbers<[1], [0], [0], [1], [0, 0, 1, 1], [], []>} : vector<32x32xbf16>, vector<32x128xbf16>, vector<32x128xf32> -> vector<32x128xf32>
    %403 = arith.addf %400, %402 : vector<32x128xf32>
    %404 = vector.broadcast %3 : vector<1x128xf32> to vector<32x128xf32>
    %405 = arith.addf %403, %404 : vector<32x128xf32>
    %406 = arith.negf %405 : vector<32x128xf32>
    %407 = math.exp %406 : vector<32x128xf32>
    %cst_108 = arith.constant 1.000000e+00 : f32
    %408 = vector.broadcast %cst_108 : f32 to vector<32x128xf32>
    %409 = arith.addf %408, %407 : vector<32x128xf32>
    %410 = arith.divf %408, %409 : vector<32x128xf32>
    %411 = math.tanh %405 : vector<32x128xf32>
    %412 = vector.extract_strided_slice %410 {offsets = [0, 0], sizes = [32, 32], strides = [1, 1]} : vector<32x128xf32> to vector<32x32xf32>
    %413 = vector.extract_strided_slice %410 {offsets = [0, 32], sizes = [32, 32], strides = [1, 1]} : vector<32x128xf32> to vector<32x32xf32>
    %414 = vector.extract_strided_slice %411 {offsets = [0, 64], sizes = [32, 32], strides = [1, 1]} : vector<32x128xf32> to vector<32x32xf32>
    %415 = vector.extract_strided_slice %410 {offsets = [0, 96], sizes = [32, 32], strides = [1, 1]} : vector<32x128xf32> to vector<32x32xf32>
    %416 = arith.mulf %413, %385 : vector<32x32xf32>
    %417 = arith.mulf %412, %414 : vector<32x32xf32>
    %418 = arith.addf %416, %417 : vector<32x32xf32>
    %419 = math.tanh %418 : vector<32x32xf32>
    %420 = arith.mulf %415, %419 : vector<32x32xf32>
    %421 = arith.truncf %420 : vector<32x32xf32> to vector<32x32xbf16>
    %cst_109 = arith.constant dense<0.000000e+00> : vector<32x128xf32>
    %422 = tpu.matmul %421, %4, %cst_109 {dimension_numbers = #tpu.dot_dimension_numbers<[1], [0], [0], [1], [0, 0, 1, 1], [], []>} : vector<32x32xbf16>, vector<32x128xbf16>, vector<32x128xf32> -> vector<32x128xf32>
    %423 = vector.broadcast %5 : vector<1x128xf32> to vector<32x128xf32>
    %424 = arith.addf %422, %423 : vector<32x128xf32>
    %cst_110 = arith.constant 0.000000e+00 : f32
    %425 = vector.broadcast %cst_110 : f32 to vector<32x128xf32>
    %426 = arith.maximumf %424, %425 : vector<32x128xf32>
    %427 = arith.truncf %426 : vector<32x128xf32> to vector<32x128xbf16>
    %cst_111 = arith.constant dense<0.000000e+00> : vector<32x128xf32>
    %428 = tpu.matmul %427, %6, %cst_111 {dimension_numbers = #tpu.dot_dimension_numbers<[1], [0], [0], [1], [0, 0, 1, 1], [], []>} : vector<32x128xbf16>, vector<128x128xbf16>, vector<32x128xf32> -> vector<32x128xf32>
    %429 = vector.broadcast %7 : vector<1x128xf32> to vector<32x128xf32>
    %430 = arith.addf %428, %429 : vector<32x128xf32>
    %c224_112 = arith.constant 224 : index
    %c0_113 = arith.constant 0 : index
    %431 = vector.load %arg11[%c224_112, %c0_113] : memref<256x128xf32, #tpu.memory_space<vmem>>, vector<32x128xf32>
    tpu.vector_store %arg11[%c224_112, %c0_113], %430 {strides = array<i32>} : memref<256x128xf32, #tpu.memory_space<vmem>>, vector<32x128xf32>,
    %c0_114 = arith.constant 0 : index
    %c0_115 = arith.constant 0 : index
    %c0_116 = arith.constant 0 : index
    %432 = vector.load %arg12[%c0_114, %c0_115, %c0_116] : memref<2x32x32xf32, #tpu.memory_space<vmem>>, vector<1x32x32xf32>
    %433 = vector.shape_cast %432 : vector<1x32x32xf32> to vector<32x32xf32>
    %434 = vector.shape_cast %365 : vector<32x32xf32> to vector<1x32x32xf32>
    tpu.vector_store %arg12[%c0_114, %c0_115, %c0_116], %434 {strides = array<i32>} : memref<2x32x32xf32, #tpu.memory_space<vmem>>, vector<1x32x32xf32>,
    %c0_117 = arith.constant 0 : index
    %c0_118 = arith.constant 0 : index
    %c0_119 = arith.constant 0 : index
    %435 = vector.load %arg13[%c0_117, %c0_118, %c0_119] : memref<2x32x32xf32, #tpu.memory_space<vmem>>, vector<1x32x32xf32>
    %436 = vector.shape_cast %435 : vector<1x32x32xf32> to vector<32x32xf32>
    %437 = vector.shape_cast %363 : vector<32x32xf32> to vector<1x32x32xf32>
    tpu.vector_store %arg13[%c0_117, %c0_118, %c0_119], %437 {strides = array<i32>} : memref<2x32x32xf32, #tpu.memory_space<vmem>>, vector<1x32x32xf32>,
    %c1_120 = arith.constant 1 : index
    %c0_121 = arith.constant 0 : index
    %c0_122 = arith.constant 0 : index
    %438 = vector.load %arg12[%c1_120, %c0_121, %c0_122] : memref<2x32x32xf32, #tpu.memory_space<vmem>>, vector<1x32x32xf32>
    %439 = vector.shape_cast %438 : vector<1x32x32xf32> to vector<32x32xf32>
    %440 = vector.shape_cast %420 : vector<32x32xf32> to vector<1x32x32xf32>
    tpu.vector_store %arg12[%c1_120, %c0_121, %c0_122], %440 {strides = array<i32>} : memref<2x32x32xf32, #tpu.memory_space<vmem>>, vector<1x32x32xf32>,
    %c1_123 = arith.constant 1 : index
    %c0_124 = arith.constant 0 : index
    %c0_125 = arith.constant 0 : index
    %441 = vector.load %arg13[%c1_123, %c0_124, %c0_125] : memref<2x32x32xf32, #tpu.memory_space<vmem>>, vector<1x32x32xf32>
    %442 = vector.shape_cast %441 : vector<1x32x32xf32> to vector<32x32xf32>
    %443 = vector.shape_cast %418 : vector<32x32xf32> to vector<1x32x32xf32>
    tpu.vector_store %arg13[%c1_123, %c0_124, %c0_125], %443 {strides = array<i32>} : memref<2x32x32xf32, #tpu.memory_space<vmem>>, vector<1x32x32xf32>,
    return
  }
}

</mosaic_0001>

<llo_original>
// kernel: tpu_custom_call.1
$region0: #{tpu_custom_call.1}
  #allocation0 [shape = 'u32[]', space=smem, size = 0x4, offset = 0x4, fixed_abs, tag = 'smem constant byte address 0x4 - core index']
  #allocation1 [shape = 'u32[144,128]{1,0:T(1,128)}', space=vmem, size = 0x12000, scoped, tag = 'internal scratch']
  %s0 = inlined_call_operand.hbm [shape: f32[256,128], index: 0, kind: input, shape index: {}]
  %s1 = inlined_call_operand.hbm [shape: f32[2,32,32], index: 1, kind: input, shape index: {}]
  %s2 = inlined_call_operand.hbm [shape: f32[2,32,32], index: 2, kind: input, shape index: {}]
  %s3 = inlined_call_operand.hbm [shape: bf16[32,128], index: 3, kind: input, shape index: {}]
  %s4 = inlined_call_operand.hbm [shape: bf16[32,128], index: 4, kind: input, shape index: {}]
  %s5 = inlined_call_operand.hbm [shape: bf16[32,128], index: 5, kind: input, shape index: {}]
  %s6 = inlined_call_operand.vmem [shape: f32[1,128], index: 6, kind: input, shape index: {}]
  %s7 = inlined_call_operand.hbm [shape: bf16[32,128], index: 7, kind: input, shape index: {}]
  %s8 = inlined_call_operand.vmem [shape: f32[1,128], index: 8, kind: input, shape index: {}]
  %s9 = inlined_call_operand.hbm [shape: bf16[128,128], index: 9, kind: input, shape index: {}]
  %s10 = inlined_call_operand.vmem [shape: f32[1,128], index: 10, kind: input, shape index: {}]
  %s11 = inlined_call_operand.hbm [shape: f32[256,128], index: 11, kind: output, shape index: {0}]
  %s12 = inlined_call_operand.hbm [shape: f32[2,32,32], index: 12, kind: output, shape index: {1}]
  %s13 = inlined_call_operand.hbm [shape: f32[2,32,32], index: 13, kind: output, shape index: {2}]
  %14 = xla_tuple %s11, %s12, %s13
  %s15 = sld [smem:[#allocation0]]
  $region102: #{tpu_custom_call.1} parent=0
    _
  %s17 = ssub.s32 1, %s15
  %s18 = scalar_select 0, %s17, %s15
  $region1: #{tpu_custom_call.1} parent=0
    #allocation2 [shape = 'u8[131072]{0}', space=vmem, size = 0x20000, scoped, tag = 'input window, operand 0, single buffered']
    #allocation3 [shape = 's32[1]{0}', space=sflag, size = 0x4, scoped, tag = 'scoped memory for tpu_custom_call.1']
    #allocation4 [shape = 's32[1]{0}', space=sflag, size = 0x4, scoped, tag = 'scoped memory for tpu_custom_call.1']
    #allocation5 [shape = 'u8[32768]{0}', space=vmem, size = 0x8000, scoped, tag = 'input window, operand 1, single buffered']
    #allocation6 [shape = 's32[1]{0}', space=sflag, size = 0x4, scoped, tag = 'scoped memory for tpu_custom_call.1']
    #allocation7 [shape = 'u8[32768]{0}', space=vmem, size = 0x8000, scoped, tag = 'input window, operand 2, single buffered']
    #allocation8 [shape = 'u8[8192]{0}', space=vmem, size = 0x2000, scoped, tag = 'input window, operand 3, single buffered']
    #allocation9 [shape = 's32[1]{0}', space=sflag, size = 0x4, scoped, tag = 'scoped memory for tpu_custom_call.1']
    #allocation10 [shape = 'u8[8192]{0}', space=vmem, size = 0x2000, scoped, tag = 'input window, operand 4, single buffered']
    #allocation11 [shape = 'u8[8192]{0}', space=vmem, size = 0x2000, scoped, tag = 'input window, operand 5, single buffered']
    #allocation12 [shape = 's32[1]{0}', space=sflag, size = 0x4, scoped, tag = 'scoped memory for tpu_custom_call.1']
    #allocation13 [shape = 'u8[8192]{0}', space=vmem, size = 0x2000, scoped, tag = 'input window, operand 7, single buffered']
    #allocation14 [shape = 'u8[32768]{0}', space=vmem, size = 0x8000, scoped, tag = 'input window, operand 9, single buffered']
    #allocation15 [shape = 's32[1]{0}', space=sflag, size = 0x4, scoped, tag = 'scoped memory for tpu_custom_call.1']
    #allocation16 [shape = 'u8[131072]{0}', space=vmem, size = 0x20000, scoped, tag = 'output window, operand 0, single buffered']
    #allocation17 [shape = 'u8[32768]{0}', space=vmem, size = 0x8000, scoped, tag = 'output window, operand 1, single buffered']
    #allocation18 [shape = 's32[1]{0}', space=sflag, size = 0x4, scoped, tag = 'scoped memory for tpu_custom_call.1']
    #allocation19 [shape = 'u8[32768]{0}', space=vmem, size = 0x8000, scoped, tag = 'output window, operand 2, single buffered']
    %19 = vsyncpa [#allocation3], 0
    %20 = vsyncpa [#allocation6], 0
    %21 = vsyncpa [#allocation9], 0
    %22 = vsyncpa [#allocation12], 0
    %23 = vsyncpa [#allocation15], 0
    %24 = vsyncpa [#allocation4], 0
    %25 = vsyncpa [#allocation18], 0
    // Predicated region
    $region2: #{tpu_custom_call.1} parent=1 // pred_check
      _
    $region3: #{tpu_custom_call.1} parent=1 // pred_check_branch
      %27 = sbr.rel (0) target = $region5
    $region4: #{tpu_custom_call.1} parent=1 // pred_region
      %s29 = ssub.s32 4096, 4096
      %30 = vsyncadd [#allocation3], %s29
      %s31 = sshll.u32 [#allocation2], 4
      %s32 = int_to_ptr.vmem [resolvable:$true] %s31
      %37 = dma.hbm_to_vmem [thread:$0]  %s0, 4096, %s32, [#allocation3], 128, 128, 8
    $region5: #{tpu_custom_call.1} parent=1 // pred_fallthru
      _
    // Predicated region
    $region6: #{tpu_custom_call.1} parent=1 // pred_check
      _
    $region7: #{tpu_custom_call.1} parent=1 // pred_check_branch
      %39 = sbr.rel (0) target = $region9
    $region8: #{tpu_custom_call.1} parent=1 // pred_region
      %s41 = ssub.s32 1024, 1024
      %42 = vsyncadd [#allocation6], %s41
      %s43 = sshll.u32 [#allocation5], 4
      %s44 = int_to_ptr.vmem [resolvable:$true] %s43
      %49 = dma.hbm_to_vmem [thread:$0]  %s1, 1024, %s44, [#allocation6], 128, 128, 8
    $region9: #{tpu_custom_call.1} parent=1 // pred_fallthru
      _
    // Predicated region
    $region10: #{tpu_custom_call.1} parent=1 // pred_check
      _
    $region11: #{tpu_custom_call.1} parent=1 // pred_check_branch
      %51 = sbr.rel (0) target = $region13
    $region12: #{tpu_custom_call.1} parent=1 // pred_region
      %s53 = ssub.s32 1024, 1024
      %54 = vsyncadd [#allocation6], %s53
      %s55 = sshll.u32 [#allocation7], 4
      %s56 = int_to_ptr.vmem [resolvable:$true] %s55
      %61 = dma.hbm_to_vmem [thread:$0]  %s2, 1024, %s56, [#allocation6], 128, 128, 8
    $region13: #{tpu_custom_call.1} parent=1 // pred_fallthru
      _
    // Predicated region
    $region14: #{tpu_custom_call.1} parent=1 // pred_check
      _
    $region15: #{tpu_custom_call.1} parent=1 // pred_check_branch
      %63 = sbr.rel (0) target = $region17
    $region16: #{tpu_custom_call.1} parent=1 // pred_region
      %s65 = ssub.s32 256, 256
      %66 = vsyncadd [#allocation9], %s65
      %s67 = sshll.u32 [#allocation8], 4
      %s68 = int_to_ptr.vmem [resolvable:$true] %s67
      %73 = dma.hbm_to_vmem [thread:$0]  %s3, 256, %s68, [#allocation9], 64, 64, 4
    $region17: #{tpu_custom_call.1} parent=1 // pred_fallthru
      _
    // Predicated region
    $region18: #{tpu_custom_call.1} parent=1 // pred_check
      _
    $region19: #{tpu_custom_call.1} parent=1 // pred_check_branch
      %75 = sbr.rel (0) target = $region21
    $region20: #{tpu_custom_call.1} parent=1 // pred_region
      %s77 = ssub.s32 256, 256
      %78 = vsyncadd [#allocation9], %s77
      %s79 = sshll.u32 [#allocation10], 4
      %s80 = int_to_ptr.vmem [resolvable:$true] %s79
      %85 = dma.hbm_to_vmem [thread:$0]  %s4, 256, %s80, [#allocation9], 64, 64, 4
    $region21: #{tpu_custom_call.1} parent=1 // pred_fallthru
      _
    // Predicated region
    $region22: #{tpu_custom_call.1} parent=1 // pred_check
      _
    $region23: #{tpu_custom_call.1} parent=1 // pred_check_branch
      %87 = sbr.rel (0) target = $region25
    $region24: #{tpu_custom_call.1} parent=1 // pred_region
      %s89 = ssub.s32 256, 256
      %90 = vsyncadd [#allocation12], %s89
      %s91 = sshll.u32 [#allocation11], 4
      %s92 = int_to_ptr.vmem [resolvable:$true] %s91
      %97 = dma.hbm_to_vmem [thread:$0]  %s5, 256, %s92, [#allocation12], 64, 64, 4
    $region25: #{tpu_custom_call.1} parent=1 // pred_fallthru
      _
    // Predicated region
    $region26: #{tpu_custom_call.1} parent=1 // pred_check
      _
    $region27: #{tpu_custom_call.1} parent=1 // pred_check_branch
      %99 = sbr.rel (0) target = $region29
    $region28: #{tpu_custom_call.1} parent=1 // pred_region
      _
    $region29: #{tpu_custom_call.1} parent=1 // pred_fallthru
      _
    // Predicated region
    $region30: #{tpu_custom_call.1} parent=1 // pred_check
      _
    $region31: #{tpu_custom_call.1} parent=1 // pred_check_branch
      %101 = sbr.rel (0) target = $region33
    $region32: #{tpu_custom_call.1} parent=1 // pred_region
      %s103 = ssub.s32 256, 256
      %104 = vsyncadd [#allocation12], %s103
      %s105 = sshll.u32 [#allocation13], 4
      %s106 = int_to_ptr.vmem [resolvable:$true] %s105
      %111 = dma.hbm_to_vmem [thread:$0]  %s7, 256, %s106, [#allocation12], 64, 64, 4
    $region33: #{tpu_custom_call.1} parent=1 // pred_fallthru
      _
    // Predicated region
    $region34: #{tpu_custom_call.1} parent=1 // pred_check
      _
    $region35: #{tpu_custom_call.1} parent=1 // pred_check_branch
      %113 = sbr.rel (0) target = $region37
    $region36: #{tpu_custom_call.1} parent=1 // pred_region
      _
    $region37: #{tpu_custom_call.1} parent=1 // pred_fallthru
      _
    // Predicated region
    $region38: #{tpu_custom_call.1} parent=1 // pred_check
      _
    $region39: #{tpu_custom_call.1} parent=1 // pred_check_branch
      %115 = sbr.rel (0) target = $region41
    $region40: #{tpu_custom_call.1} parent=1 // pred_region
      %s117 = ssub.s32 1024, 1024
      %118 = vsyncadd [#allocation15], %s117
      %s119 = sshll.u32 [#allocation14], 4
      %s120 = int_to_ptr.vmem [resolvable:$true] %s119
      %125 = dma.hbm_to_vmem [thread:$0]  %s9, 1024, %s120, [#allocation15], 64, 64, 4
    $region41: #{tpu_custom_call.1} parent=1 // pred_fallthru
      _
    // Predicated region
    $region42: #{tpu_custom_call.1} parent=1 // pred_check
      _
    $region43: #{tpu_custom_call.1} parent=1 // pred_check_branch
      %127 = sbr.rel (0) target = $region45
    $region44: #{tpu_custom_call.1} parent=1 // pred_region
      _
    $region45: #{tpu_custom_call.1} parent=1 // pred_fallthru
      _
    // Predicated region
    $region46: #{tpu_custom_call.1} parent=1 // pred_check
      _
    $region47: #{tpu_custom_call.1} parent=1 // pred_check_branch
      %129 = sbr.rel (0) target = $region49
    $region48: #{tpu_custom_call.1} parent=1 // pred_region
      %130 = dma.done [#allocation3], 4096
    $region49: #{tpu_custom_call.1} parent=1 // pred_fallthru
      _
    // Predicated region
    $region50: #{tpu_custom_call.1} parent=1 // pred_check
      _
    $region51: #{tpu_custom_call.1} parent=1 // pred_check_branch
      %132 = sbr.rel (0) target = $region53
    $region52: #{tpu_custom_call.1} parent=1 // pred_region
      %133 = dma.done [#allocation6], 1024
    $region53: #{tpu_custom_call.1} parent=1 // pred_fallthru
      _
    // Predicated region
    $region54: #{tpu_custom_call.1} parent=1 // pred_check
      _
    $region55: #{tpu_custom_call.1} parent=1 // pred_check_branch
      %135 = sbr.rel (0) target = $region57
    $region56: #{tpu_custom_call.1} parent=1 // pred_region
      %136 = dma.done [#allocation6], 1024
    $region57: #{tpu_custom_call.1} parent=1 // pred_fallthru
      _
    // Predicated region
    $region58: #{tpu_custom_call.1} parent=1 // pred_check
      _
    $region59: #{tpu_custom_call.1} parent=1 // pred_check_branch
      %138 = sbr.rel (0) target = $region61
    $region60: #{tpu_custom_call.1} parent=1 // pred_region
      %139 = dma.done [#allocation9], 256
    $region61: #{tpu_custom_call.1} parent=1 // pred_fallthru
      _
    // Predicated region
    $region62: #{tpu_custom_call.1} parent=1 // pred_check
      _
    $region63: #{tpu_custom_call.1} parent=1 // pred_check_branch
      %141 = sbr.rel (0) target = $region65
    $region64: #{tpu_custom_call.1} parent=1 // pred_region
      %142 = dma.done [#allocation9], 256
    $region65: #{tpu_custom_call.1} parent=1 // pred_fallthru
      _
    // Predicated region
    $region66: #{tpu_custom_call.1} parent=1 // pred_check
      _
    $region67: #{tpu_custom_call.1} parent=1 // pred_check_branch
      %144 = sbr.rel (0) target = $region69
    $region68: #{tpu_custom_call.1} parent=1 // pred_region
      %145 = dma.done [#allocation12], 256
    $region69: #{tpu_custom_call.1} parent=1 // pred_fallthru
      _
    // Predicated region
    $region70: #{tpu_custom_call.1} parent=1 // pred_check
      _
    $region71: #{tpu_custom_call.1} parent=1 // pred_check_branch
      %147 = sbr.rel (0) target = $region73
    $region72: #{tpu_custom_call.1} parent=1 // pred_region
      %148 = dma.done [#allocation12], 256
    $region73: #{tpu_custom_call.1} parent=1 // pred_fallthru
      _
    // Predicated region
    $region74: #{tpu_custom_call.1} parent=1 // pred_check
      _
    $region75: #{tpu_custom_call.1} parent=1 // pred_check_branch
      %150 = sbr.rel (0) target = $region77
    $region76: #{tpu_custom_call.1} parent=1 // pred_region
      %151 = dma.done [#allocation15], 1024
    $region77: #{tpu_custom_call.1} parent=1 // pred_fallthru
      _
    %v153 = vld [vmem:[#allocation8] sm:$0xf]
    %v154 = vld [vmem:[#allocation8 + $0x4] sm:$0xf]
    %v155 = vld [vmem:[#allocation8 + $0x8] sm:$0xf]
    %v156 = vld [vmem:[#allocation8 + $0xc] sm:$0xf]
    %v157 = vld [vmem:[#allocation10] sm:$0xf]
    %v158 = vld [vmem:[#allocation10 + $0x4] sm:$0xf]
    %v159 = vld [vmem:[#allocation10 + $0x8] sm:$0xf]
    %v160 = vld [vmem:[#allocation10 + $0xc] sm:$0xf]
    %v161 = vld [vmem:[#allocation11] sm:$0xf]
    %v162 = vld [vmem:[#allocation11 + $0x4] sm:$0xf]
    %v163 = vld [vmem:[#allocation11 + $0x8] sm:$0xf]
    %v164 = vld [vmem:[#allocation11 + $0xc] sm:$0xf]
    %v165 = vld [vmem:[%s6] sm:$0x1]
    %v166 = vld [vmem:[#allocation13] sm:$0xf]
    %v167 = vld [vmem:[#allocation13 + $0x4] sm:$0xf]
    %v168 = vld [vmem:[#allocation13 + $0x8] sm:$0xf]
    %v169 = vld [vmem:[#allocation13 + $0xc] sm:$0xf]
    %v170 = vld [vmem:[%s8] sm:$0x1]
    %v171 = vld [vmem:[#allocation14] sm:$0xf]
    %v172 = vld [vmem:[#allocation14 + $0x4] sm:$0xf]
    %v173 = vld [vmem:[#allocation14 + $0x8] sm:$0xf]
    %v174 = vld [vmem:[#allocation14 + $0xc] sm:$0xf]
    %v175 = vld [vmem:[#allocation14 + $0x10] sm:$0xf]
    %v176 = vld [vmem:[#allocation14 + $0x14] sm:$0xf]
    %v177 = vld [vmem:[#allocation14 + $0x18] sm:$0xf]
    %v178 = vld [vmem:[#allocation14 + $0x1c] sm:$0xf]
    %v179 = vld [vmem:[#allocation14 + $0x20] sm:$0xf]
    %v180 = vld [vmem:[#allocation14 + $0x24] sm:$0xf]
    %v181 = vld [vmem:[#allocation14 + $0x28] sm:$0xf]
    %v182 = vld [vmem:[#allocation14 + $0x2c] sm:$0xf]
    %v183 = vld [vmem:[#allocation14 + $0x30] sm:$0xf]
    %v184 = vld [vmem:[#allocation14 + $0x34] sm:$0xf]
    %v185 = vld [vmem:[#allocation14 + $0x38] sm:$0xf]
    %v186 = vld [vmem:[#allocation14 + $0x3c] sm:$0xf]
    %v187 = vld [vmem:[%s10] sm:$0x1]
    %v188 = vld [vmem:[#allocation5] sm:$0xff]
    %v189 = vld [vmem:[#allocation5 + $0x8] sm:$0xff]
    %v190 = vld [vmem:[#allocation5 + $0x10] sm:$0xff]
    %v191 = vld [vmem:[#allocation5 + $0x18] sm:$0xff]
    %v192 = vld [vmem:[#allocation7] sm:$0xff]
    %v193 = vld [vmem:[#allocation7 + $0x8] sm:$0xff]
    %v194 = vld [vmem:[#allocation7 + $0x10] sm:$0xff]
    %v195 = vld [vmem:[#allocation7 + $0x18] sm:$0xff]
    %s196 = scalar_lea.vmem [#allocation5], 32
    %v197 = vld [vmem:[%s196] sm:$0xff]
    %v198 = vld [vmem:[%s196 + $0x8] sm:$0xff]
    %v199 = vld [vmem:[%s196 + $0x10] sm:$0xff]
    %v200 = vld [vmem:[%s196 + $0x18] sm:$0xff]
    %s201 = scalar_lea.vmem [#allocation7], 32
    %v202 = vld [vmem:[%s201] sm:$0xff]
    %v203 = vld [vmem:[%s201 + $0x8] sm:$0xff]
    %v204 = vld [vmem:[%s201 + $0x10] sm:$0xff]
    %v205 = vld [vmem:[%s201 + $0x18] sm:$0xff]
    %v206 = vld [vmem:[#allocation2] sm:$0xff]
    %v207 = vld [vmem:[#allocation2 + $0x8] sm:$0xff]
    %v208 = vld [vmem:[#allocation2 + $0x10] sm:$0xff]
    %v209 = vld [vmem:[#allocation2 + $0x18] sm:$0xff]
    %v210 = vpack.c.bf16 %v189, %v188
    %v211 = vpack.c.bf16 %v191, %v190
    %v216 = vunpack.c.l.b16 %v153
    %v217 = vunpack.c.l.b16 %v154
    %v218 = vunpack.c.l.b16 %v155
    %v219 = vunpack.c.l.b16 %v156
    %v220 = vpack.c.b16 %v217, %v216
    %v221 = vpack.c.b16 %v219, %v218
    %vm224 = vcmask 261120
    %v226 = vsel %vm224, %v210, 0
    %v229 = vsel %vm224, %v211, 0
    %231 = vmatprep.subr.bf16.mxu0 0
    %232 = vmatpush1.bf16.msra.mxu0 0
    %233 = vmatprep.subr.bf16.mxu0 0
    %234 = vmatpush1.bf16.msra.mxu0 0
    %235 = vmatprep.subr.bf16.mxu0 0
    %236 = vmatpush1.bf16.msra.mxu0 0
    %237 = vmatprep.subr.bf16.mxu0 0
    %238 = vmatpush1.bf16.msra.mxu0 0
    %239 = vmatprep.subr.bf16.mxu0 0
    %240 = vmatpush1.bf16.msra.mxu0 0
    %241 = vmatprep.subr.bf16.mxu0 0
    %242 = vmatpush1.bf16.msra.mxu0 0
    %243 = vmatprep.subr.bf16.mxu0 0
    %244 = vmatpush1.bf16.msra.mxu0 %v221
    %245 = vmatprep.subr.bf16.mxu0 0
    %246 = vmatpush1.bf16.msra.mxu0 %v220
    %247 = vmatprep.subr.bf16.mxu0 0
    %248 = vmatpush2.bf16.msra.mxu0 0
    %249 = vmatprep.subr.bf16.mxu0 0
    %250 = vmatpush2.bf16.msra.mxu0 0
    %251 = vmatprep.subr.bf16.mxu0 0
    %252 = vmatpush2.bf16.msra.mxu0 0
    %253 = vmatprep.subr.bf16.mxu0 0
    %254 = vmatpush2.bf16.msra.mxu0 0
    %255 = vmatprep.subr.bf16.mxu0 0
    %256 = vmatpush2.bf16.msra.mxu0 0
    %257 = vmatprep.subr.bf16.mxu0 0
    %258 = vmatpush2.bf16.msra.mxu0 0
    %259 = vmatprep.subr.bf16.mxu0 0
    %260 = vmatpush2.bf16.msra.mxu0 0
    %261 = vmatprep.subr.bf16.mxu0 0
    %262 = vmatpush2.bf16.msra.mxu0 0
    %263 = vmatprep.mubr.bf16.mxu0 0
    %264 = vmatmul.mubr.bf16.gmra.mxu0 %v226
    %v265 = vpop.f32.mrf.mxu0
    %v266 = vadd.f32 0.0, %v265
    %v267 = vpop.f32.mrf.mxu0
    %v268 = vpop.f32.mrf.mxu0
    %v269 = vadd.f32 0.0, %v268
    %v270 = vpop.f32.mrf.mxu0
    %271 = vmatprep.mubr.bf16.mxu0 0
    %272 = vmatmul.mubr.bf16.gmra.mxu0 %v229
    %v273 = vpop.f32.mrf.mxu0
    %v274 = vadd.f32 0.0, %v273
    %v275 = vpop.f32.mrf.mxu0
    %v276 = vpop.f32.mrf.mxu0
    %v277 = vadd.f32 0.0, %v276
    %v278 = vpop.f32.mrf.mxu0
    %279 = vdwg.mxu0
    %v280 = vadd.f32 %v206, %v266
    %v281 = vadd.f32 %v207, %v269
    %v282 = vadd.f32 %v208, %v274
    %v283 = vadd.f32 %v209, %v277
    %v284 = vxor.u32 %v280, 2147483648
    %v285 = vxor.u32 %v281, 2147483648
    %v286 = vxor.u32 %v282, 2147483648
    %v287 = vxor.u32 %v283, 2147483648
    %v288 = vmul.f32 %v284, 1.442695
    %v289 = vpow.pop %v288
    %v290 = vmul.f32 %v285, 1.442695
    %v291 = vpow.pop %v290
    %v292 = vmul.f32 %v286, 1.442695
    %v293 = vpow.pop %v292
    %v294 = vmul.f32 %v287, 1.442695
    %v295 = vpow.pop %v294
    %v296 = vadd.f32 %v289, 1.0
    %v297 = vadd.f32 %v291, 1.0
    %v298 = vadd.f32 %v293, 1.0
    %v299 = vadd.f32 %v295, 1.0
    %v300 = vrcp.pop %v296
    %v301 = vmul.f32 1.0, %v300
    %v302 = vrcp.pop %v297
    %v303 = vmul.f32 1.0, %v302
    %v304 = vrcp.pop %v298
    %v305 = vmul.f32 1.0, %v304
    %v306 = vrcp.pop %v299
    %v307 = vmul.f32 1.0, %v306
    %v308 = vtanh.pop %v280
    %v309 = vtanh.pop %v281
    %v310 = vtanh.pop %v282
    %v311 = vtanh.pop %v283
    %316 = vrot.lane.b32.xlu0 %v192, 32
    %v317 = vpop.permute.xlu0 %316
    %318 = vrot.lane.b32.xlu0 %v193, 32
    %v319 = vpop.permute.xlu0 %318
    %320 = vrot.lane.b32.xlu0 %v194, 32
    %v321 = vpop.permute.xlu0 %320
    %322 = vrot.lane.b32.xlu0 %v195, 32
    %v323 = vpop.permute.xlu0 %322
    %v328 = vmul.f32 %v301, %v317
    %v329 = vmul.f32 %v303, %v319
    %v330 = vmul.f32 %v305, %v321
    %v331 = vmul.f32 %v307, %v323
    %336 = vrot.lane.b32.xlu0 %v308, 64
    %v337 = vpop.permute.xlu0 %336
    %338 = vrot.lane.b32.xlu0 %v309, 64
    %v339 = vpop.permute.xlu0 %338
    %340 = vrot.lane.b32.xlu0 %v310, 64
    %v341 = vpop.permute.xlu0 %340
    %342 = vrot.lane.b32.xlu0 %v311, 64
    %v343 = vpop.permute.xlu0 %342
    %v348 = vmul.f32 %v301, %v337
    %v349 = vmul.f32 %v303, %v339
    %v350 = vmul.f32 %v305, %v341
    %v351 = vmul.f32 %v307, %v343
    %356 = vrot.lane.b32.xlu0 %v348, 32
    %v357 = vpop.permute.xlu0 %356
    %358 = vrot.lane.b32.xlu0 %v349, 32
    %v359 = vpop.permute.xlu0 %358
    %360 = vrot.lane.b32.xlu0 %v350, 32
    %v361 = vpop.permute.xlu0 %360
    %362 = vrot.lane.b32.xlu0 %v351, 32
    %v363 = vpop.permute.xlu0 %362
    %v368 = vadd.f32 %v328, %v357
    %v369 = vadd.f32 %v329, %v359
    %v370 = vadd.f32 %v330, %v361
    %v371 = vadd.f32 %v331, %v363
    %v372 = vtanh.pop %v368
    %v373 = vtanh.pop %v369
    %v374 = vtanh.pop %v370
    %v375 = vtanh.pop %v371
    %380 = vrot.lane.b32.xlu0 %v372, 64
    %v381 = vpop.permute.xlu0 %380
    %382 = vrot.lane.b32.xlu0 %v373, 64
    %v383 = vpop.permute.xlu0 %382
    %384 = vrot.lane.b32.xlu0 %v374, 64
    %v385 = vpop.permute.xlu0 %384
    %386 = vrot.lane.b32.xlu0 %v375, 64
    %v387 = vpop.permute.xlu0 %386
    %v392 = vmul.f32 %v301, %v381
    %v393 = vmul.f32 %v303, %v383
    %v394 = vmul.f32 %v305, %v385
    %v395 = vmul.f32 %v307, %v387
    %v396 = vld [vmem:[#allocation2 + $0x20] sm:$0xff]
    %v397 = vld [vmem:[#allocation2 + $0x28] sm:$0xff]
    %v398 = vld [vmem:[#allocation2 + $0x30] sm:$0xff]
    %v399 = vld [vmem:[#allocation2 + $0x38] sm:$0xff]
    %v400 = vpack.c.bf16 %v393, %v392
    %v401 = vpack.c.bf16 %v395, %v394
    %404 = vrot.lane.b32.xlu0 %v400, 32
    %v405 = vpop.permute.xlu0 %404
    %406 = vrot.lane.b32.xlu0 %v401, 32
    %v407 = vpop.permute.xlu0 %406
    %v409 = vsel %vm224, %v405, 0
    %v412 = vsel %vm224, %v407, 0
    %414 = vmatprep.subr.bf16.mxu0 0
    %415 = vmatpush1.bf16.msra.mxu0 0
    %416 = vmatprep.subr.bf16.mxu0 0
    %417 = vmatpush1.bf16.msra.mxu0 0
    %418 = vmatprep.subr.bf16.mxu0 0
    %419 = vmatpush1.bf16.msra.mxu0 0
    %420 = vmatprep.subr.bf16.mxu0 0
    %421 = vmatpush1.bf16.msra.mxu0 0
    %422 = vmatprep.subr.bf16.mxu0 0
    %423 = vmatpush1.bf16.msra.mxu0 0
    %424 = vmatprep.subr.bf16.mxu0 0
    %425 = vmatpush1.bf16.msra.mxu0 0
    %426 = vmatprep.subr.bf16.mxu0 0
    %427 = vmatpush1.bf16.msra.mxu0 %v221
    %428 = vmatprep.subr.bf16.mxu0 0
    %429 = vmatpush1.bf16.msra.mxu0 %v220
    %430 = vmatprep.subr.bf16.mxu0 0
    %431 = vmatpush2.bf16.msra.mxu0 0
    %432 = vmatprep.subr.bf16.mxu0 0
    %433 = vmatpush2.bf16.msra.mxu0 0
    %434 = vmatprep.subr.bf16.mxu0 0
    %435 = vmatpush2.bf16.msra.mxu0 0
    %436 = vmatprep.subr.bf16.mxu0 0
    %437 = vmatpush2.bf16.msra.mxu0 0
    %438 = vmatprep.subr.bf16.mxu0 0
    %439 = vmatpush2.bf16.msra.mxu0 0
    %440 = vmatprep.subr.bf16.mxu0 0
    %441 = vmatpush2.bf16.msra.mxu0 0
    %442 = vmatprep.subr.bf16.mxu0 0
    %443 = vmatpush2.bf16.msra.mxu0 0
    %444 = vmatprep.subr.bf16.mxu0 0
    %445 = vmatpush2.bf16.msra.mxu0 0
    %446 = vmatprep.mubr.bf16.mxu0 0
    %447 = vmatmul.mubr.bf16.gmra.mxu0 %v409
    %v448 = vpop.f32.mrf.mxu0
    %v449 = vadd.f32 0.0, %v448
    %v450 = vpop.f32.mrf.mxu0
    %v451 = vpop.f32.mrf.mxu0
    %v452 = vadd.f32 0.0, %v451
    %v453 = vpop.f32.mrf.mxu0
    %454 = vmatprep.mubr.bf16.mxu0 0
    %455 = vmatmul.mubr.bf16.gmra.mxu0 %v412
    %v456 = vpop.f32.mrf.mxu0
    %v457 = vadd.f32 0.0, %v456
    %v458 = vpop.f32.mrf.mxu0
    %v459 = vpop.f32.mrf.mxu0
    %v460 = vadd.f32 0.0, %v459
    %v461 = vpop.f32.mrf.mxu0
    %462 = vdwg.mxu0
    %v463 = vadd.f32 %v396, %v449
    %v464 = vadd.f32 %v397, %v452
    %v465 = vadd.f32 %v398, %v457
    %v466 = vadd.f32 %v399, %v460
    %v467 = vxor.u32 %v463, 2147483648
    %v468 = vxor.u32 %v464, 2147483648
    %v469 = vxor.u32 %v465, 2147483648
    %v470 = vxor.u32 %v466, 2147483648
    %v471 = vmul.f32 %v467, 1.442695
    %v472 = vpow.pop %v471
    %v473 = vmul.f32 %v468, 1.442695
    %v474 = vpow.pop %v473
    %v475 = vmul.f32 %v469, 1.442695
    %v476 = vpow.pop %v475
    %v477 = vmul.f32 %v470, 1.442695
    %v478 = vpow.pop %v477
    %v479 = vadd.f32 %v472, 1.0
    %v480 = vadd.f32 %v474, 1.0
    %v481 = vadd.f32 %v476, 1.0
    %v482 = vadd.f32 %v478, 1.0
    %v483 = vrcp.pop %v479
    %v484 = vmul.f32 1.0, %v483
    %v485 = vrcp.pop %v480
    %v486 = vmul.f32 1.0, %v485
    %v487 = vrcp.pop %v481
    %v488 = vmul.f32 1.0, %v487
    %v489 = vrcp.pop %v482
    %v490 = vmul.f32 1.0, %v489
    %v491 = vtanh.pop %v463
    %v492 = vtanh.pop %v464
    %v493 = vtanh.pop %v465
    %v494 = vtanh.pop %v466
    %v495 = vmul.f32 %v484, %v368
    %v496 = vmul.f32 %v486, %v369
    %v497 = vmul.f32 %v488, %v370
    %v498 = vmul.f32 %v490, %v371
    %503 = vrot.lane.b32.xlu0 %v491, 64
    %v504 = vpop.permute.xlu0 %503
    %505 = vrot.lane.b32.xlu0 %v492, 64
    %v506 = vpop.permute.xlu0 %505
    %507 = vrot.lane.b32.xlu0 %v493, 64
    %v508 = vpop.permute.xlu0 %507
    %509 = vrot.lane.b32.xlu0 %v494, 64
    %v510 = vpop.permute.xlu0 %509
    %v515 = vmul.f32 %v484, %v504
    %v516 = vmul.f32 %v486, %v506
    %v517 = vmul.f32 %v488, %v508
    %v518 = vmul.f32 %v490, %v510
    %523 = vrot.lane.b32.xlu0 %v515, 32
    %v524 = vpop.permute.xlu0 %523
    %525 = vrot.lane.b32.xlu0 %v516, 32
    %v526 = vpop.permute.xlu0 %525
    %527 = vrot.lane.b32.xlu0 %v517, 32
    %v528 = vpop.permute.xlu0 %527
    %529 = vrot.lane.b32.xlu0 %v518, 32
    %v530 = vpop.permute.xlu0 %529
    %v535 = vadd.f32 %v495, %v524
    %v536 = vadd.f32 %v496, %v526
    %v537 = vadd.f32 %v497, %v528
    %v538 = vadd.f32 %v498, %v530
    %v539 = vtanh.pop %v535
    %v540 = vtanh.pop %v536
    %v541 = vtanh.pop %v537
    %v542 = vtanh.pop %v538
    %547 = vrot.lane.b32.xlu0 %v539, 64
    %v548 = vpop.permute.xlu0 %547
    %549 = vrot.lane.b32.xlu0 %v540, 64
    %v550 = vpop.permute.xlu0 %549
    %551 = vrot.lane.b32.xlu0 %v541, 64
    %v552 = vpop.permute.xlu0 %551
    %553 = vrot.lane.b32.xlu0 %v542, 64
    %v554 = vpop.permute.xlu0 %553
    %v559 = vmul.f32 %v484, %v548
    %v560 = vmul.f32 %v486, %v550
    %v561 = vmul.f32 %v488, %v552
    %v562 = vmul.f32 %v490, %v554
    %v563 = vpack.c.bf16 %v198, %v197
    %v564 = vpack.c.bf16 %v200, %v199
    %v569 = vunpack.c.l.b16 %v161
    %v570 = vunpack.c.l.b16 %v162
    %v571 = vunpack.c.l.b16 %v163
    %v572 = vunpack.c.l.b16 %v164
    %v573 = vpack.c.b16 %v570, %v569
    %v574 = vpack.c.b16 %v572, %v571
    %v578 = vsel %vm224, %v563, 0
    %v581 = vsel %vm224, %v564, 0
    %583 = vmatprep.subr.bf16.mxu0 0
    %584 = vmatpush1.bf16.msra.mxu0 0
    %585 = vmatprep.subr.bf16.mxu0 0
    %586 = vmatpush1.bf16.msra.mxu0 0
    %587 = vmatprep.subr.bf16.mxu0 0
    %588 = vmatpush1.bf16.msra.mxu0 0
    %589 = vmatprep.subr.bf16.mxu0 0
    %590 = vmatpush1.bf16.msra.mxu0 0
    %591 = vmatprep.subr.bf16.mxu0 0
    %592 = vmatpush1.bf16.msra.mxu0 0
    %593 = vmatprep.subr.bf16.mxu0 0
    %594 = vmatpush1.bf16.msra.mxu0 0
    %595 = vmatprep.subr.bf16.mxu0 0
    %596 = vmatpush1.bf16.msra.mxu0 %v574
    %597 = vmatprep.subr.bf16.mxu0 0
    %598 = vmatpush1.bf16.msra.mxu0 %v573
    %599 = vmatprep.subr.bf16.mxu0 0
    %600 = vmatpush2.bf16.msra.mxu0 0
    %601 = vmatprep.subr.bf16.mxu0 0
    %602 = vmatpush2.bf16.msra.mxu0 0
    %603 = vmatprep.subr.bf16.mxu0 0
    %604 = vmatpush2.bf16.msra.mxu0 0
    %605 = vmatprep.subr.bf16.mxu0 0
    %606 = vmatpush2.bf16.msra.mxu0 0
    %607 = vmatprep.subr.bf16.mxu0 0
    %608 = vmatpush2.bf16.msra.mxu0 0
    %609 = vmatprep.subr.bf16.mxu0 0
    %610 = vmatpush2.bf16.msra.mxu0 0
    %611 = vmatprep.subr.bf16.mxu0 0
    %612 = vmatpush2.bf16.msra.mxu0 0
    %613 = vmatprep.subr.bf16.mxu0 0
    %614 = vmatpush2.bf16.msra.mxu0 0
    %615 = vmatprep.mubr.bf16.mxu0 0
    %616 = vmatmul.mubr.bf16.gmra.mxu0 %v578
    %v617 = vpop.f32.mrf.mxu0
    %v618 = vadd.f32 0.0, %v617
    %v619 = vpop.f32.mrf.mxu0
    %v620 = vpop.f32.mrf.mxu0
    %v621 = vadd.f32 0.0, %v620
    %v622 = vpop.f32.mrf.mxu0
    %623 = vmatprep.mubr.bf16.mxu0 0
    %624 = vmatmul.mubr.bf16.gmra.mxu0 %v581
    %v625 = vpop.f32.mrf.mxu0
    %v626 = vadd.f32 0.0, %v625
    %v627 = vpop.f32.mrf.mxu0
    %v628 = vpop.f32.mrf.mxu0
    %v629 = vadd.f32 0.0, %v628
    %v630 = vpop.f32.mrf.mxu0
    %631 = vdwg.mxu0
    %v636 = vunpack.c.l.b16 %v157
    %v637 = vunpack.c.l.b16 %v158
    %v638 = vunpack.c.l.b16 %v159
    %v639 = vunpack.c.l.b16 %v160
    %v640 = vpack.c.b16 %v637, %v636
    %v641 = vpack.c.b16 %v639, %v638
    %644 = vmatprep.subr.bf16.mxu0 0
    %645 = vmatpush1.bf16.msra.mxu0 0
    %646 = vmatprep.subr.bf16.mxu0 0
    %647 = vmatpush1.bf16.msra.mxu0 0
    %648 = vmatprep.subr.bf16.mxu0 0
    %649 = vmatpush1.bf16.msra.mxu0 0
    %650 = vmatprep.subr.bf16.mxu0 0
    %651 = vmatpush1.bf16.msra.mxu0 0
    %652 = vmatprep.subr.bf16.mxu0 0
    %653 = vmatpush1.bf16.msra.mxu0 0
    %654 = vmatprep.subr.bf16.mxu0 0
    %655 = vmatpush1.bf16.msra.mxu0 0
    %656 = vmatprep.subr.bf16.mxu0 0
    %657 = vmatpush1.bf16.msra.mxu0 %v641
    %658 = vmatprep.subr.bf16.mxu0 0
    %659 = vmatpush1.bf16.msra.mxu0 %v640
    %660 = vmatprep.subr.bf16.mxu0 0
    %661 = vmatpush2.bf16.msra.mxu0 0
    %662 = vmatprep.subr.bf16.mxu0 0
    %663 = vmatpush2.bf16.msra.mxu0 0
    %664 = vmatprep.subr.bf16.mxu0 0
    %665 = vmatpush2.bf16.msra.mxu0 0
    %666 = vmatprep.subr.bf16.mxu0 0
    %667 = vmatpush2.bf16.msra.mxu0 0
    %668 = vmatprep.subr.bf16.mxu0 0
    %669 = vmatpush2.bf16.msra.mxu0 0
    %670 = vmatprep.subr.bf16.mxu0 0
    %671 = vmatpush2.bf16.msra.mxu0 0
    %672 = vmatprep.subr.bf16.mxu0 0
    %673 = vmatpush2.bf16.msra.mxu0 0
    %674 = vmatprep.subr.bf16.mxu0 0
    %675 = vmatpush2.bf16.msra.mxu0 0
    %676 = vmatprep.mubr.bf16.mxu0 0
    %677 = vmatmul.mubr.bf16.gmra.mxu0 %v409
    %v678 = vpop.f32.mrf.mxu0
    %v679 = vadd.f32 %v618, %v678
    %v680 = vpop.f32.mrf.mxu0
    %v681 = vpop.f32.mrf.mxu0
    %v682 = vadd.f32 %v621, %v681
    %v683 = vpop.f32.mrf.mxu0
    %684 = vmatprep.mubr.bf16.mxu0 0
    %685 = vmatmul.mubr.bf16.gmra.mxu0 %v412
    %v686 = vpop.f32.mrf.mxu0
    %v687 = vadd.f32 %v626, %v686
    %v688 = vpop.f32.mrf.mxu0
    %v689 = vpop.f32.mrf.mxu0
    %v690 = vadd.f32 %v629, %v689
    %v691 = vpop.f32.mrf.mxu0
    %692 = vdwg.mxu0
    %v694 = vlaneseq
    %v695 = vshrl.u32 %v694, 7
    %v696 = vsub.s32 0, %v695
    %v697 = vrot.slane %v165, %v696
    %v699 = vadd.f32 %v679, %v697
    %v700 = vadd.f32 %v682, %v697
    %v701 = vadd.f32 %v687, %v697
    %v702 = vadd.f32 %v690, %v697
    %v703 = vxor.u32 %v699, 2147483648
    %v704 = vxor.u32 %v700, 2147483648
    %v705 = vxor.u32 %v701, 2147483648
    %v706 = vxor.u32 %v702, 2147483648
    %v707 = vmul.f32 %v703, 1.442695
    %v708 = vpow.pop %v707
    %v709 = vmul.f32 %v704, 1.442695
    %v710 = vpow.pop %v709
    %v711 = vmul.f32 %v705, 1.442695
    %v712 = vpow.pop %v711
    %v713 = vmul.f32 %v706, 1.442695
    %v714 = vpow.pop %v713
    %v715 = vadd.f32 %v708, 1.0
    %v716 = vadd.f32 %v710, 1.0
    %v717 = vadd.f32 %v712, 1.0
    %v718 = vadd.f32 %v714, 1.0
    %v719 = vrcp.pop %v715
    %v720 = vmul.f32 1.0, %v719
    %v721 = vrcp.pop %v716
    %v722 = vmul.f32 1.0, %v721
    %v723 = vrcp.pop %v717
    %v724 = vmul.f32 1.0, %v723
    %v725 = vrcp.pop %v718
    %v726 = vmul.f32 1.0, %v725
    %v727 = vtanh.pop %v699
    %v728 = vtanh.pop %v700
    %v729 = vtanh.pop %v701
    %v730 = vtanh.pop %v702
    %735 = vrot.lane.b32.xlu0 %v202, 32
    %v736 = vpop.permute.xlu0 %735
    %737 = vrot.lane.b32.xlu0 %v203, 32
    %v738 = vpop.permute.xlu0 %737
    %739 = vrot.lane.b32.xlu0 %v204, 32
    %v740 = vpop.permute.xlu0 %739
    %741 = vrot.lane.b32.xlu0 %v205, 32
    %v742 = vpop.permute.xlu0 %741
    %v747 = vmul.f32 %v720, %v736
    %v748 = vmul.f32 %v722, %v738
    %v749 = vmul.f32 %v724, %v740
    %v750 = vmul.f32 %v726, %v742
    %755 = vrot.lane.b32.xlu0 %v727, 64
    %v756 = vpop.permute.xlu0 %755
    %757 = vrot.lane.b32.xlu0 %v728, 64
    %v758 = vpop.permute.xlu0 %757
    %759 = vrot.lane.b32.xlu0 %v729, 64
    %v760 = vpop.permute.xlu0 %759
    %761 = vrot.lane.b32.xlu0 %v730, 64
    %v762 = vpop.permute.xlu0 %761
    %v767 = vmul.f32 %v720, %v756
    %v768 = vmul.f32 %v722, %v758
    %v769 = vmul.f32 %v724, %v760
    %v770 = vmul.f32 %v726, %v762
    %775 = vrot.lane.b32.xlu0 %v767, 32
    %v776 = vpop.permute.xlu0 %775
    %777 = vrot.lane.b32.xlu0 %v768, 32
    %v778 = vpop.permute.xlu0 %777
    %779 = vrot.lane.b32.xlu0 %v769, 32
    %v780 = vpop.permute.xlu0 %779
    %781 = vrot.lane.b32.xlu0 %v770, 32
    %v782 = vpop.permute.xlu0 %781
    %v787 = vadd.f32 %v747, %v776
    %v788 = vadd.f32 %v748, %v778
    %v789 = vadd.f32 %v749, %v780
    %v790 = vadd.f32 %v750, %v782
    %v791 = vtanh.pop %v787
    %v792 = vtanh.pop %v788
    %v793 = vtanh.pop %v789
    %v794 = vtanh.pop %v790
    %799 = vrot.lane.b32.xlu0 %v791, 64
    %v800 = vpop.permute.xlu0 %799
    %801 = vrot.lane.b32.xlu0 %v792, 64
    %v802 = vpop.permute.xlu0 %801
    %803 = vrot.lane.b32.xlu0 %v793, 64
    %v804 = vpop.permute.xlu0 %803
    %805 = vrot.lane.b32.xlu0 %v794, 64
    %v806 = vpop.permute.xlu0 %805
    %v811 = vmul.f32 %v720, %v800
    %v812 = vmul.f32 %v722, %v802
    %v813 = vmul.f32 %v724, %v804
    %v814 = vmul.f32 %v726, %v806
    %v815 = vpack.c.bf16 %v812, %v811
    %v816 = vpack.c.bf16 %v814, %v813
    %v818 = vlaneseq
    %v819 = vshrl.u32 %v818, 7
    %v820 = vsub.s32 0, %v819
    %v821 = vrot.slane %v170, %v820
    %825 = vrot.lane.b32.xlu0 %v815, 32
    %v826 = vpop.permute.xlu0 %825
    %827 = vrot.lane.b32.xlu0 %v816, 32
    %v828 = vpop.permute.xlu0 %827
    %v833 = vunpack.c.l.b16 %v166
    %v834 = vunpack.c.l.b16 %v167
    %v835 = vunpack.c.l.b16 %v168
    %v836 = vunpack.c.l.b16 %v169
    %v837 = vpack.c.b16 %v834, %v833
    %v838 = vpack.c.b16 %v836, %v835
    %v842 = vsel %vm224, %v826, 0
    %v845 = vsel %vm224, %v828, 0
    %847 = vmatprep.subr.bf16.mxu0 0
    %848 = vmatpush1.bf16.msra.mxu0 0
    %849 = vmatprep.subr.bf16.mxu0 0
    %850 = vmatpush1.bf16.msra.mxu0 0
    %851 = vmatprep.subr.bf16.mxu0 0
    %852 = vmatpush1.bf16.msra.mxu0 0
    %853 = vmatprep.subr.bf16.mxu0 0
    %854 = vmatpush1.bf16.msra.mxu0 0
    %855 = vmatprep.subr.bf16.mxu0 0
    %856 = vmatpush1.bf16.msra.mxu0 0
    %857 = vmatprep.subr.bf16.mxu0 0
    %858 = vmatpush1.bf16.msra.mxu0 0
    %859 = vmatprep.subr.bf16.mxu0 0
    %860 = vmatpush1.bf16.msra.mxu0 %v838
    %861 = vmatprep.subr.bf16.mxu0 0
    %862 = vmatpush1.bf16.msra.mxu0 %v837
    %863 = vmatprep.subr.bf16.mxu0 0
    %864 = vmatpush2.bf16.msra.mxu0 0
    %865 = vmatprep.subr.bf16.mxu0 0
    %866 = vmatpush2.bf16.msra.mxu0 0
    %867 = vmatprep.subr.bf16.mxu0 0
    %868 = vmatpush2.bf16.msra.mxu0 0
    %869 = vmatprep.subr.bf16.mxu0 0
    %870 = vmatpush2.bf16.msra.mxu0 0
    %871 = vmatprep.subr.bf16.mxu0 0
    %872 = vmatpush2.bf16.msra.mxu0 0
    %873 = vmatprep.subr.bf16.mxu0 0
    %874 = vmatpush2.bf16.msra.mxu0 0
    %875 = vmatprep.subr.bf16.mxu0 0
    %876 = vmatpush2.bf16.msra.mxu0 0
    %877 = vmatprep.subr.bf16.mxu0 0
    %878 = vmatpush2.bf16.msra.mxu0 0
    %879 = vmatprep.mubr.bf16.mxu0 0
    %880 = vmatmul.mubr.bf16.gmra.mxu0 %v842
    %v881 = vpop.f32.mrf.mxu0
    %v882 = vadd.f32 %v821, %v881
    %v883 = vpop.f32.mrf.mxu0
    %v884 = vpop.f32.mrf.mxu0
    %v885 = vadd.f32 %v821, %v884
    %v886 = vpop.f32.mrf.mxu0
    %887 = vmatprep.mubr.bf16.mxu0 0
    %888 = vmatmul.mubr.bf16.gmra.mxu0 %v845
    %v889 = vpop.f32.mrf.mxu0
    %v890 = vadd.f32 %v821, %v889
    %v891 = vpop.f32.mrf.mxu0
    %v892 = vpop.f32.mrf.mxu0
    %v893 = vadd.f32 %v821, %v892
    %v894 = vpop.f32.mrf.mxu0
    %895 = vdwg.mxu0
    %v896 = vmax.f32 %v882, 0.0
    %v897 = vmax.f32 %v885, 0.0
    %v898 = vmax.f32 %v890, 0.0
    %v899 = vmax.f32 %v893, 0.0
    %v900 = vpack.c.bf16 %v897, %v896
    %v901 = vpack.c.bf16 %v899, %v898
    %v903 = vlaneseq
    %v904 = vshrl.u32 %v903, 7
    %v905 = vsub.s32 0, %v904
    %v906 = vrot.slane %v187, %v905
    %v924 = vunpack.c.l.b16 %v171
    %v925 = vunpack.c.l.b16 %v172
    %v926 = vunpack.c.l.b16 %v173
    %v927 = vunpack.c.l.b16 %v174
    %v928 = vunpack.c.l.b16 %v175
    %v929 = vunpack.c.l.b16 %v176
    %v930 = vunpack.c.l.b16 %v177
    %v931 = vunpack.c.l.b16 %v178
    %v932 = vunpack.c.l.b16 %v179
    %v933 = vunpack.c.l.b16 %v180
    %v934 = vunpack.c.l.b16 %v181
    %v935 = vunpack.c.l.b16 %v182
    %v936 = vunpack.c.l.b16 %v183
    %v937 = vunpack.c.l.b16 %v184
    %v938 = vunpack.c.l.b16 %v185
    %v939 = vunpack.c.l.b16 %v186
    %v940 = vpack.c.b16 %v925, %v924
    %v941 = vpack.c.b16 %v927, %v926
    %v942 = vpack.c.b16 %v929, %v928
    %v943 = vpack.c.b16 %v931, %v930
    %v944 = vpack.c.b16 %v933, %v932
    %v945 = vpack.c.b16 %v935, %v934
    %v946 = vpack.c.b16 %v937, %v936
    %v947 = vpack.c.b16 %v939, %v938
    %956 = vmatprep.subr.bf16.mxu0 0
    %957 = vmatpush1.bf16.msra.mxu0 %v947
    %958 = vmatprep.subr.bf16.mxu0 0
    %959 = vmatpush1.bf16.msra.mxu0 %v946
    %960 = vmatprep.subr.bf16.mxu0 0
    %961 = vmatpush1.bf16.msra.mxu0 %v945
    %962 = vmatprep.subr.bf16.mxu0 0
    %963 = vmatpush1.bf16.msra.mxu0 %v944
    %964 = vmatprep.subr.bf16.mxu0 0
    %965 = vmatpush1.bf16.msra.mxu0 %v943
    %966 = vmatprep.subr.bf16.mxu0 0
    %967 = vmatpush1.bf16.msra.mxu0 %v942
    %968 = vmatprep.subr.bf16.mxu0 0
    %969 = vmatpush1.bf16.msra.mxu0 %v941
    %970 = vmatprep.subr.bf16.mxu0 0
    %971 = vmatpush1.bf16.msra.mxu0 %v940
    %972 = vmatprep.subr.bf16.mxu0 0
    %973 = vmatpush2.bf16.msra.mxu0 0
    %974 = vmatprep.subr.bf16.mxu0 0
    %975 = vmatpush2.bf16.msra.mxu0 0
    %976 = vmatprep.subr.bf16.mxu0 0
    %977 = vmatpush2.bf16.msra.mxu0 0
    %978 = vmatprep.subr.bf16.mxu0 0
    %979 = vmatpush2.bf16.msra.mxu0 0
    %980 = vmatprep.subr.bf16.mxu0 0
    %981 = vmatpush2.bf16.msra.mxu0 0
    %982 = vmatprep.subr.bf16.mxu0 0
    %983 = vmatpush2.bf16.msra.mxu0 0
    %984 = vmatprep.subr.bf16.mxu0 0
    %985 = vmatpush2.bf16.msra.mxu0 0
    %986 = vmatprep.subr.bf16.mxu0 0
    %987 = vmatpush2.bf16.msra.mxu0 0
    %988 = vmatprep.mubr.bf16.mxu0 0
    %989 = vmatmul.mubr.bf16.gmra.mxu0 %v900
    %v990 = vpop.f32.mrf.mxu0
    %v991 = vadd.f32 %v906, %v990
    %v992 = vpop.f32.mrf.mxu0
    %v993 = vpop.f32.mrf.mxu0
    %v994 = vadd.f32 %v906, %v993
    %v995 = vpop.f32.mrf.mxu0
    %996 = vmatprep.mubr.bf16.mxu0 0
    %997 = vmatmul.mubr.bf16.gmra.mxu0 %v901
    %v998 = vpop.f32.mrf.mxu0
    %v999 = vadd.f32 %v906, %v998
    %v1000 = vpop.f32.mrf.mxu0
    %v1001 = vpop.f32.mrf.mxu0
    %v1002 = vadd.f32 %v906, %v1001
    %v1003 = vpop.f32.mrf.mxu0
    %1004 = vdwg.mxu0
    %1005 = vst [vmem:[#allocation16] sm:$0xff] %v991
    %1006 = vst [vmem:[#allocation16 + $0x8] sm:$0xff] %v994
    %1007 = vst [vmem:[#allocation16 + $0x10] sm:$0xff] %v999
    %1008 = vst [vmem:[#allocation16 + $0x18] sm:$0xff] %v1002
    %v1009 = vld [vmem:[#allocation2 + $0x40] sm:$0xff]
    %v1010 = vld [vmem:[#allocation2 + $0x48] sm:$0xff]
    %v1011 = vld [vmem:[#allocation2 + $0x50] sm:$0xff]
    %v1012 = vld [vmem:[#allocation2 + $0x58] sm:$0xff]
    %v1013 = vpack.c.bf16 %v560, %v559
    %v1014 = vpack.c.bf16 %v562, %v561
    %1017 = vrot.lane.b32.xlu0 %v1013, 32
    %v1018 = vpop.permute.xlu0 %1017
    %1019 = vrot.lane.b32.xlu0 %v1014, 32
    %v1020 = vpop.permute.xlu0 %1019
    %v1022 = vsel %vm224, %v1018, 0
    %v1025 = vsel %vm224, %v1020, 0
    %1027 = vmatprep.subr.bf16.mxu0 0
    %1028 = vmatpush1.bf16.msra.mxu0 0
    %1029 = vmatprep.subr.bf16.mxu0 0
    %1030 = vmatpush1.bf16.msra.mxu0 0
    %1031 = vmatprep.subr.bf16.mxu0 0
    %1032 = vmatpush1.bf16.msra.mxu0 0
    %1033 = vmatprep.subr.bf16.mxu0 0
    %1034 = vmatpush1.bf16.msra.mxu0 0
    %1035 = vmatprep.subr.bf16.mxu0 0
    %1036 = vmatpush1.bf16.msra.mxu0 0
    %1037 = vmatprep.subr.bf16.mxu0 0
    %1038 = vmatpush1.bf16.msra.mxu0 0
    %1039 = vmatprep.subr.bf16.mxu0 0
    %1040 = vmatpush1.bf16.msra.mxu0 %v221
    %1041 = vmatprep.subr.bf16.mxu0 0
    %1042 = vmatpush1.bf16.msra.mxu0 %v220
    %1043 = vmatprep.subr.bf16.mxu0 0
    %1044 = vmatpush2.bf16.msra.mxu0 0
    %1045 = vmatprep.subr.bf16.mxu0 0
    %1046 = vmatpush2.bf16.msra.mxu0 0
    %1047 = vmatprep.subr.bf16.mxu0 0
    %1048 = vmatpush2.bf16.msra.mxu0 0
    %1049 = vmatprep.subr.bf16.mxu0 0
    %1050 = vmatpush2.bf16.msra.mxu0 0
    %1051 = vmatprep.subr.bf16.mxu0 0
    %1052 = vmatpush2.bf16.msra.mxu0 0
    %1053 = vmatprep.subr.bf16.mxu0 0
    %1054 = vmatpush2.bf16.msra.mxu0 0
    %1055 = vmatprep.subr.bf16.mxu0 0
    %1056 = vmatpush2.bf16.msra.mxu0 0
    %1057 = vmatprep.subr.bf16.mxu0 0
    %1058 = vmatpush2.bf16.msra.mxu0 0
    %1059 = vmatprep.mubr.bf16.mxu0 0
    %1060 = vmatmul.mubr.bf16.gmra.mxu0 %v1022
    %v1061 = vpop.f32.mrf.mxu0
    %v1062 = vadd.f32 0.0, %v1061
    %v1063 = vpop.f32.mrf.mxu0
    %v1064 = vpop.f32.mrf.mxu0
    %v1065 = vadd.f32 0.0, %v1064
    %v1066 = vpop.f32.mrf.mxu0
    %1067 = vmatprep.mubr.bf16.mxu0 0
    %1068 = vmatmul.mubr.bf16.gmra.mxu0 %v1025
    %v1069 = vpop.f32.mrf.mxu0
    %v1070 = vadd.f32 0.0, %v1069
    %v1071 = vpop.f32.mrf.mxu0
    %v1072 = vpop.f32.mrf.mxu0
    %v1073 = vadd.f32 0.0, %v1072
    %v1074 = vpop.f32.mrf.mxu0
    %1075 = vdwg.mxu0
    %v1076 = vadd.f32 %v1009, %v1062
    %v1077 = vadd.f32 %v1010, %v1065
    %v1078 = vadd.f32 %v1011, %v1070
    %v1079 = vadd.f32 %v1012, %v1073
    %v1080 = vxor.u32 %v1076, 2147483648
    %v1081 = vxor.u32 %v1077, 2147483648
    %v1082 = vxor.u32 %v1078, 2147483648
    %v1083 = vxor.u32 %v1079, 2147483648
    %v1084 = vmul.f32 %v1080, 1.442695
    %v1085 = vpow.pop %v1084
    %v1086 = vmul.f32 %v1081, 1.442695
    %v1087 = vpow.pop %v1086
    %v1088 = vmul.f32 %v1082, 1.442695
    %v1089 = vpow.pop %v1088
    %v1090 = vmul.f32 %v1083, 1.442695
    %v1091 = vpow.pop %v1090
    %v1092 = vadd.f32 %v1085, 1.0
    %v1093 = vadd.f32 %v1087, 1.0
    %v1094 = vadd.f32 %v1089, 1.0
    %v1095 = vadd.f32 %v1091, 1.0
    %v1096 = vrcp.pop %v1092
    %v1097 = vmul.f32 1.0, %v1096
    %v1098 = vrcp.pop %v1093
    %v1099 = vmul.f32 1.0, %v1098
    %v1100 = vrcp.pop %v1094
    %v1101 = vmul.f32 1.0, %v1100
    %v1102 = vrcp.pop %v1095
    %v1103 = vmul.f32 1.0, %v1102
    %v1104 = vtanh.pop %v1076
    %v1105 = vtanh.pop %v1077
    %v1106 = vtanh.pop %v1078
    %v1107 = vtanh.pop %v1079
    %v1108 = vmul.f32 %v1097, %v535
    %v1109 = vmul.f32 %v1099, %v536
    %v1110 = vmul.f32 %v1101, %v537
    %v1111 = vmul.f32 %v1103, %v538
    %1116 = vrot.lane.b32.xlu0 %v1104, 64
    %v1117 = vpop.permute.xlu0 %1116
    %1118 = vrot.lane.b32.xlu0 %v1105, 64
    %v1119 = vpop.permute.xlu0 %1118
    %1120 = vrot.lane.b32.xlu0 %v1106, 64
    %v1121 = vpop.permute.xlu0 %1120
    %1122 = vrot.lane.b32.xlu0 %v1107, 64
    %v1123 = vpop.permute.xlu0 %1122
    %v1128 = vmul.f32 %v1097, %v1117
    %v1129 = vmul.f32 %v1099, %v1119
    %v1130 = vmul.f32 %v1101, %v1121
    %v1131 = vmul.f32 %v1103, %v1123
    %1136 = vrot.lane.b32.xlu0 %v1128, 32
    %v1137 = vpop.permute.xlu0 %1136
    %1138 = vrot.lane.b32.xlu0 %v1129, 32
    %v1139 = vpop.permute.xlu0 %1138
    %1140 = vrot.lane.b32.xlu0 %v1130, 32
    %v1141 = vpop.permute.xlu0 %1140
    %1142 = vrot.lane.b32.xlu0 %v1131, 32
    %v1143 = vpop.permute.xlu0 %1142
    %v1148 = vadd.f32 %v1108, %v1137
    %v1149 = vadd.f32 %v1109, %v1139
    %v1150 = vadd.f32 %v1110, %v1141
    %v1151 = vadd.f32 %v1111, %v1143
    %v1152 = vtanh.pop %v1148
    %v1153 = vtanh.pop %v1149
    %v1154 = vtanh.pop %v1150
    %v1155 = vtanh.pop %v1151
    %1160 = vrot.lane.b32.xlu0 %v1152, 64
    %v1161 = vpop.permute.xlu0 %1160
    %1162 = vrot.lane.b32.xlu0 %v1153, 64
    %v1163 = vpop.permute.xlu0 %1162
    %1164 = vrot.lane.b32.xlu0 %v1154, 64
    %v1165 = vpop.permute.xlu0 %1164
    %1166 = vrot.lane.b32.xlu0 %v1155, 64
    %v1167 = vpop.permute.xlu0 %1166
    %v1172 = vmul.f32 %v1097, %v1161
    %v1173 = vmul.f32 %v1099, %v1163
    %v1174 = vmul.f32 %v1101, %v1165
    %v1175 = vmul.f32 %v1103, %v1167
    %1176 = vmatprep.subr.bf16.mxu0 0
    %1177 = vmatpush1.bf16.msra.mxu0 0
    %1178 = vmatprep.subr.bf16.mxu0 0
    %1179 = vmatpush1.bf16.msra.mxu0 0
    %1180 = vmatprep.subr.bf16.mxu0 0
    %1181 = vmatpush1.bf16.msra.mxu0 0
    %1182 = vmatprep.subr.bf16.mxu0 0
    %1183 = vmatpush1.bf16.msra.mxu0 0
    %1184 = vmatprep.subr.bf16.mxu0 0
    %1185 = vmatpush1.bf16.msra.mxu0 0
    %1186 = vmatprep.subr.bf16.mxu0 0
    %1187 = vmatpush1.bf16.msra.mxu0 0
    %1188 = vmatprep.subr.bf16.mxu0 0
    %1189 = vmatpush1.bf16.msra.mxu0 %v574
    %1190 = vmatprep.subr.bf16.mxu0 0
    %1191 = vmatpush1.bf16.msra.mxu0 %v573
    %1192 = vmatprep.subr.bf16.mxu0 0
    %1193 = vmatpush2.bf16.msra.mxu0 0
    %1194 = vmatprep.subr.bf16.mxu0 0
    %1195 = vmatpush2.bf16.msra.mxu0 0
    %1196 = vmatprep.subr.bf16.mxu0 0
    %1197 = vmatpush2.bf16.msra.mxu0 0
    %1198 = vmatprep.subr.bf16.mxu0 0
    %1199 = vmatpush2.bf16.msra.mxu0 0
    %1200 = vmatprep.subr.bf16.mxu0 0
    %1201 = vmatpush2.bf16.msra.mxu0 0
    %1202 = vmatprep.subr.bf16.mxu0 0
    %1203 = vmatpush2.bf16.msra.mxu0 0
    %1204 = vmatprep.subr.bf16.mxu0 0
    %1205 = vmatpush2.bf16.msra.mxu0 0
    %1206 = vmatprep.subr.bf16.mxu0 0
    %1207 = vmatpush2.bf16.msra.mxu0 0
    %1208 = vmatprep.mubr.bf16.mxu0 0
    %1209 = vmatmul.mubr.bf16.gmra.mxu0 %v842
    %v1210 = vpop.f32.mrf.mxu0
    %v1211 = vadd.f32 0.0, %v1210
    %v1212 = vpop.f32.mrf.mxu0
    %v1213 = vpop.f32.mrf.mxu0
    %v1214 = vadd.f32 0.0, %v1213
    %v1215 = vpop.f32.mrf.mxu0
    %1216 = vmatprep.mubr.bf16.mxu0 0
    %1217 = vmatmul.mubr.bf16.gmra.mxu0 %v845
    %v1218 = vpop.f32.mrf.mxu0
    %v1219 = vadd.f32 0.0, %v1218
    %v1220 = vpop.f32.mrf.mxu0
    %v1221 = vpop.f32.mrf.mxu0
    %v1222 = vadd.f32 0.0, %v1221
    %v1223 = vpop.f32.mrf.mxu0
    %1224 = vdwg.mxu0
    %1225 = vmatprep.subr.bf16.mxu0 0
    %1226 = vmatpush1.bf16.msra.mxu0 0
    %1227 = vmatprep.subr.bf16.mxu0 0
    %1228 = vmatpush1.bf16.msra.mxu0 0
    %1229 = vmatprep.subr.bf16.mxu0 0
    %1230 = vmatpush1.bf16.msra.mxu0 0
    %1231 = vmatprep.subr.bf16.mxu0 0
    %1232 = vmatpush1.bf16.msra.mxu0 0
    %1233 = vmatprep.subr.bf16.mxu0 0
    %1234 = vmatpush1.bf16.msra.mxu0 0
    %1235 = vmatprep.subr.bf16.mxu0 0
    %1236 = vmatpush1.bf16.msra.mxu0 0
    %1237 = vmatprep.subr.bf16.mxu0 0
    %1238 = vmatpush1.bf16.msra.mxu0 %v641
    %1239 = vmatprep.subr.bf16.mxu0 0
    %1240 = vmatpush1.bf16.msra.mxu0 %v640
    %1241 = vmatprep.subr.bf16.mxu0 0
    %1242 = vmatpush2.bf16.msra.mxu0 0
    %1243 = vmatprep.subr.bf16.mxu0 0
    %1244 = vmatpush2.bf16.msra.mxu0 0
    %1245 = vmatprep.subr.bf16.mxu0 0
    %1246 = vmatpush2.bf16.msra.mxu0 0
    %1247 = vmatprep.subr.bf16.mxu0 0
    %1248 = vmatpush2.bf16.msra.mxu0 0
    %1249 = vmatprep.subr.bf16.mxu0 0
    %1250 = vmatpush2.bf16.msra.mxu0 0
    %1251 = vmatprep.subr.bf16.mxu0 0
    %1252 = vmatpush2.bf16.msra.mxu0 0
    %1253 = vmatprep.subr.bf16.mxu0 0
    %1254 = vmatpush2.bf16.msra.mxu0 0
    %1255 = vmatprep.subr.bf16.mxu0 0
    %1256 = vmatpush2.bf16.msra.mxu0 0
    %1257 = vmatprep.mubr.bf16.mxu0 0
    %1258 = vmatmul.mubr.bf16.gmra.mxu0 %v1022
    %v1259 = vpop.f32.mrf.mxu0
    %v1260 = vadd.f32 %v1211, %v1259
    %v1261 = vpop.f32.mrf.mxu0
    %v1262 = vpop.f32.mrf.mxu0
    %v1263 = vadd.f32 %v1214, %v1262
    %v1264 = vpop.f32.mrf.mxu0
    %1265 = vmatprep.mubr.bf16.mxu0 0
    %1266 = vmatmul.mubr.bf16.gmra.mxu0 %v1025
    %v1267 = vpop.f32.mrf.mxu0
    %v1268 = vadd.f32 %v1219, %v1267
    %v1269 = vpop.f32.mrf.mxu0
    %v1270 = vpop.f32.mrf.mxu0
    %v1271 = vadd.f32 %v1222, %v1270
    %v1272 = vpop.f32.mrf.mxu0
    %1273 = vdwg.mxu0
    %v1274 = vadd.f32 %v1260, %v697
    %v1275 = vadd.f32 %v1263, %v697
    %v1276 = vadd.f32 %v1268, %v697
    %v1277 = vadd.f32 %v1271, %v697
    %v1278 = vxor.u32 %v1274, 2147483648
    %v1279 = vxor.u32 %v1275, 2147483648
    %v1280 = vxor.u32 %v1276, 2147483648
    %v1281 = vxor.u32 %v1277, 2147483648
    %v1282 = vmul.f32 %v1278, 1.442695
    %v1283 = vpow.pop %v1282
    %v1284 = vmul.f32 %v1279, 1.442695
    %v1285 = vpow.pop %v1284
    %v1286 = vmul.f32 %v1280, 1.442695
    %v1287 = vpow.pop %v1286
    %v1288 = vmul.f32 %v1281, 1.442695
    %v1289 = vpow.pop %v1288
    %v1290 = vadd.f32 %v1283, 1.0
    %v1291 = vadd.f32 %v1285, 1.0
    %v1292 = vadd.f32 %v1287, 1.0
    %v1293 = vadd.f32 %v1289, 1.0
    %v1294 = vrcp.pop %v1290
    %v1295 = vmul.f32 1.0, %v1294
    %v1296 = vrcp.pop %v1291
    %v1297 = vmul.f32 1.0, %v1296
    %v1298 = vrcp.pop %v1292
    %v1299 = vmul.f32 1.0, %v1298
    %v1300 = vrcp.pop %v1293
    %v1301 = vmul.f32 1.0, %v1300
    %v1302 = vtanh.pop %v1274
    %v1303 = vtanh.pop %v1275
    %v1304 = vtanh.pop %v1276
    %v1305 = vtanh.pop %v1277
    %v1306 = vmul.f32 %v1295, %v787
    %v1307 = vmul.f32 %v1297, %v788
    %v1308 = vmul.f32 %v1299, %v789
    %v1309 = vmul.f32 %v1301, %v790
    %1314 = vrot.lane.b32.xlu0 %v1302, 64
    %v1315 = vpop.permute.xlu0 %1314
    %1316 = vrot.lane.b32.xlu0 %v1303, 64
    %v1317 = vpop.permute.xlu0 %1316
    %1318 = vrot.lane.b32.xlu0 %v1304, 64
    %v1319 = vpop.permute.xlu0 %1318
    %1320 = vrot.lane.b32.xlu0 %v1305, 64
    %v1321 = vpop.permute.xlu0 %1320
    %v1326 = vmul.f32 %v1295, %v1315
    %v1327 = vmul.f32 %v1297, %v1317
    %v1328 = vmul.f32 %v1299, %v1319
    %v1329 = vmul.f32 %v1301, %v1321
    %1334 = vrot.lane.b32.xlu0 %v1326, 32
    %v1335 = vpop.permute.xlu0 %1334
    %1336 = vrot.lane.b32.xlu0 %v1327, 32
    %v1337 = vpop.permute.xlu0 %1336
    %1338 = vrot.lane.b32.xlu0 %v1328, 32
    %v1339 = vpop.permute.xlu0 %1338
    %1340 = vrot.lane.b32.xlu0 %v1329, 32
    %v1341 = vpop.permute.xlu0 %1340
    %v1346 = vadd.f32 %v1306, %v1335
    %v1347 = vadd.f32 %v1307, %v1337
    %v1348 = vadd.f32 %v1308, %v1339
    %v1349 = vadd.f32 %v1309, %v1341
    %v1350 = vtanh.pop %v1346
    %v1351 = vtanh.pop %v1347
    %v1352 = vtanh.pop %v1348
    %v1353 = vtanh.pop %v1349
    %1358 = vrot.lane.b32.xlu0 %v1350, 64
    %v1359 = vpop.permute.xlu0 %1358
    %1360 = vrot.lane.b32.xlu0 %v1351, 64
    %v1361 = vpop.permute.xlu0 %1360
    %1362 = vrot.lane.b32.xlu0 %v1352, 64
    %v1363 = vpop.permute.xlu0 %1362
    %1364 = vrot.lane.b32.xlu0 %v1353, 64
    %v1365 = vpop.permute.xlu0 %1364
    %v1370 = vmul.f32 %v1295, %v1359
    %v1371 = vmul.f32 %v1297, %v1361
    %v1372 = vmul.f32 %v1299, %v1363
    %v1373 = vmul.f32 %v1301, %v1365
    %v1374 = vpack.c.bf16 %v1371, %v1370
    %v1375 = vpack.c.bf16 %v1373, %v1372
    %1378 = vrot.lane.b32.xlu0 %v1374, 32
    %v1379 = vpop.permute.xlu0 %1378
    %1380 = vrot.lane.b32.xlu0 %v1375, 32
    %v1381 = vpop.permute.xlu0 %1380
    %v1383 = vsel %vm224, %v1379, 0
    %v1386 = vsel %vm224, %v1381, 0
    %1388 = vmatprep.subr.bf16.mxu0 0
    %1389 = vmatpush1.bf16.msra.mxu0 0
    %1390 = vmatprep.subr.bf16.mxu0 0
    %1391 = vmatpush1.bf16.msra.mxu0 0
    %1392 = vmatprep.subr.bf16.mxu0 0
    %1393 = vmatpush1.bf16.msra.mxu0 0
    %1394 = vmatprep.subr.bf16.mxu0 0
    %1395 = vmatpush1.bf16.msra.mxu0 0
    %1396 = vmatprep.subr.bf16.mxu0 0
    %1397 = vmatpush1.bf16.msra.mxu0 0
    %1398 = vmatprep.subr.bf16.mxu0 0
    %1399 = vmatpush1.bf16.msra.mxu0 0
    %1400 = vmatprep.subr.bf16.mxu0 0
    %1401 = vmatpush1.bf16.msra.mxu0 %v838
    %1402 = vmatprep.subr.bf16.mxu0 0
    %1403 = vmatpush1.bf16.msra.mxu0 %v837
    %1404 = vmatprep.subr.bf16.mxu0 0
    %1405 = vmatpush2.bf16.msra.mxu0 0
    %1406 = vmatprep.subr.bf16.mxu0 0
    %1407 = vmatpush2.bf16.msra.mxu0 0
    %1408 = vmatprep.subr.bf16.mxu0 0
    %1409 = vmatpush2.bf16.msra.mxu0 0
    %1410 = vmatprep.subr.bf16.mxu0 0
    %1411 = vmatpush2.bf16.msra.mxu0 0
    %1412 = vmatprep.subr.bf16.mxu0 0
    %1413 = vmatpush2.bf16.msra.mxu0 0
    %1414 = vmatprep.subr.bf16.mxu0 0
    %1415 = vmatpush2.bf16.msra.mxu0 0
    %1416 = vmatprep.subr.bf16.mxu0 0
    %1417 = vmatpush2.bf16.msra.mxu0 0
    %1418 = vmatprep.subr.bf16.mxu0 0
    %1419 = vmatpush2.bf16.msra.mxu0 0
    %1420 = vmatprep.mubr.bf16.mxu0 0
    %1421 = vmatmul.mubr.bf16.gmra.mxu0 %v1383
    %v1422 = vpop.f32.mrf.mxu0
    %v1423 = vadd.f32 %v821, %v1422
    %v1424 = vpop.f32.mrf.mxu0
    %v1425 = vpop.f32.mrf.mxu0
    %v1426 = vadd.f32 %v821, %v1425
    %v1427 = vpop.f32.mrf.mxu0
    %1428 = vmatprep.mubr.bf16.mxu0 0
    %1429 = vmatmul.mubr.bf16.gmra.mxu0 %v1386
    %v1430 = vpop.f32.mrf.mxu0
    %v1431 = vadd.f32 %v821, %v1430
    %v1432 = vpop.f32.mrf.mxu0
    %v1433 = vpop.f32.mrf.mxu0
    %v1434 = vadd.f32 %v821, %v1433
    %v1435 = vpop.f32.mrf.mxu0
    %1436 = vdwg.mxu0
    %v1437 = vmax.f32 %v1423, 0.0
    %v1438 = vmax.f32 %v1426, 0.0
    %v1439 = vmax.f32 %v1431, 0.0
    %v1440 = vmax.f32 %v1434, 0.0
    %v1441 = vpack.c.bf16 %v1438, %v1437
    %v1442 = vpack.c.bf16 %v1440, %v1439
    %1443 = vmatprep.subr.bf16.mxu0 0
    %1444 = vmatpush1.bf16.msra.mxu0 %v947
    %1445 = vmatprep.subr.bf16.mxu0 0
    %1446 = vmatpush1.bf16.msra.mxu0 %v946
    %1447 = vmatprep.subr.bf16.mxu0 0
    %1448 = vmatpush1.bf16.msra.mxu0 %v945
    %1449 = vmatprep.subr.bf16.mxu0 0
    %1450 = vmatpush1.bf16.msra.mxu0 %v944
    %1451 = vmatprep.subr.bf16.mxu0 0
    %1452 = vmatpush1.bf16.msra.mxu0 %v943
    %1453 = vmatprep.subr.bf16.mxu0 0
    %1454 = vmatpush1.bf16.msra.mxu0 %v942
    %1455 = vmatprep.subr.bf16.mxu0 0
    %1456 = vmatpush1.bf16.msra.mxu0 %v941
    %1457 = vmatprep.subr.bf16.mxu0 0
    %1458 = vmatpush1.bf16.msra.mxu0 %v940
    %1459 = vmatprep.subr.bf16.mxu0 0
    %1460 = vmatpush2.bf16.msra.mxu0 0
    %1461 = vmatprep.subr.bf16.mxu0 0
    %1462 = vmatpush2.bf16.msra.mxu0 0
    %1463 = vmatprep.subr.bf16.mxu0 0
    %1464 = vmatpush2.bf16.msra.mxu0 0
    %1465 = vmatprep.subr.bf16.mxu0 0
    %1466 = vmatpush2.bf16.msra.mxu0 0
    %1467 = vmatprep.subr.bf16.mxu0 0
    %1468 = vmatpush2.bf16.msra.mxu0 0
    %1469 = vmatprep.subr.bf16.mxu0 0
    %1470 = vmatpush2.bf16.msra.mxu0 0
    %1471 = vmatprep.subr.bf16.mxu0 0
    %1472 = vmatpush2.bf16.msra.mxu0 0
    %1473 = vmatprep.subr.bf16.mxu0 0
    %1474 = vmatpush2.bf16.msra.mxu0 0
    %1475 = vmatprep.mubr.bf16.mxu0 0
    %1476 = vmatmul.mubr.bf16.gmra.mxu0 %v1441
    %v1477 = vpop.f32.mrf.mxu0
    %v1478 = vadd.f32 %v906, %v1477
    %v1479 = vpop.f32.mrf.mxu0
    %v1480 = vpop.f32.mrf.mxu0
    %v1481 = vadd.f32 %v906, %v1480
    %v1482 = vpop.f32.mrf.mxu0
    %1483 = vmatprep.mubr.bf16.mxu0 0
    %1484 = vmatmul.mubr.bf16.gmra.mxu0 %v1442
    %v1485 = vpop.f32.mrf.mxu0
    %v1486 = vadd.f32 %v906, %v1485
    %v1487 = vpop.f32.mrf.mxu0
    %v1488 = vpop.f32.mrf.mxu0
    %v1489 = vadd.f32 %v906, %v1488
    %v1490 = vpop.f32.mrf.mxu0
    %1491 = vdwg.mxu0
    %1492 = vst [vmem:[#allocation16 + $0x20] sm:$0xff] %v1478
    %1493 = vst [vmem:[#allocation16 + $0x28] sm:$0xff] %v1481
    %1494 = vst [vmem:[#allocation16 + $0x30] sm:$0xff] %v1486
    %1495 = vst [vmem:[#allocation16 + $0x38] sm:$0xff] %v1489
    %v1496 = vld [vmem:[#allocation2 + $0x60] sm:$0xff]
    %v1497 = vld [vmem:[#allocation2 + $0x68] sm:$0xff]
    %v1498 = vld [vmem:[#allocation2 + $0x70] sm:$0xff]
    %v1499 = vld [vmem:[#allocation2 + $0x78] sm:$0xff]
    %v1500 = vpack.c.bf16 %v1173, %v1172
    %v1501 = vpack.c.bf16 %v1175, %v1174
    %1504 = vrot.lane.b32.xlu0 %v1500, 32
    %v1505 = vpop.permute.xlu0 %1504
    %1506 = vrot.lane.b32.xlu0 %v1501, 32
    %v1507 = vpop.permute.xlu0 %1506
    %v1509 = vsel %vm224, %v1505, 0
    %v1512 = vsel %vm224, %v1507, 0
    %1514 = vmatprep.subr.bf16.mxu0 0
    %1515 = vmatpush1.bf16.msra.mxu0 0
    %1516 = vmatprep.subr.bf16.mxu0 0
    %1517 = vmatpush1.bf16.msra.mxu0 0
    %1518 = vmatprep.subr.bf16.mxu0 0
    %1519 = vmatpush1.bf16.msra.mxu0 0
    %1520 = vmatprep.subr.bf16.mxu0 0
    %1521 = vmatpush1.bf16.msra.mxu0 0
    %1522 = vmatprep.subr.bf16.mxu0 0
    %1523 = vmatpush1.bf16.msra.mxu0 0
    %1524 = vmatprep.subr.bf16.mxu0 0
    %1525 = vmatpush1.bf16.msra.mxu0 0
    %1526 = vmatprep.subr.bf16.mxu0 0
    %1527 = vmatpush1.bf16.msra.mxu0 %v221
    %1528 = vmatprep.subr.bf16.mxu0 0
    %1529 = vmatpush1.bf16.msra.mxu0 %v220
    %1530 = vmatprep.subr.bf16.mxu0 0
    %1531 = vmatpush2.bf16.msra.mxu0 0
    %1532 = vmatprep.subr.bf16.mxu0 0
    %1533 = vmatpush2.bf16.msra.mxu0 0
    %1534 = vmatprep.subr.bf16.mxu0 0
    %1535 = vmatpush2.bf16.msra.mxu0 0
    %1536 = vmatprep.subr.bf16.mxu0 0
    %1537 = vmatpush2.bf16.msra.mxu0 0
    %1538 = vmatprep.subr.bf16.mxu0 0
    %1539 = vmatpush2.bf16.msra.mxu0 0
    %1540 = vmatprep.subr.bf16.mxu0 0
    %1541 = vmatpush2.bf16.msra.mxu0 0
    %1542 = vmatprep.subr.bf16.mxu0 0
    %1543 = vmatpush2.bf16.msra.mxu0 0
    %1544 = vmatprep.subr.bf16.mxu0 0
    %1545 = vmatpush2.bf16.msra.mxu0 0
    %1546 = vmatprep.mubr.bf16.mxu0 0
    %1547 = vmatmul.mubr.bf16.gmra.mxu0 %v1509
    %v1548 = vpop.f32.mrf.mxu0
    %v1549 = vadd.f32 0.0, %v1548
    %v1550 = vpop.f32.mrf.mxu0
    %v1551 = vpop.f32.mrf.mxu0
    %v1552 = vadd.f32 0.0, %v1551
    %v1553 = vpop.f32.mrf.mxu0
    %1554 = vmatprep.mubr.bf16.mxu0 0
    %1555 = vmatmul.mubr.bf16.gmra.mxu0 %v1512
    %v1556 = vpop.f32.mrf.mxu0
    %v1557 = vadd.f32 0.0, %v1556
    %v1558 = vpop.f32.mrf.mxu0
    %v1559 = vpop.f32.mrf.mxu0
    %v1560 = vadd.f32 0.0, %v1559
    %v1561 = vpop.f32.mrf.mxu0
    %1562 = vdwg.mxu0
    %v1563 = vadd.f32 %v1496, %v1549
    %v1564 = vadd.f32 %v1497, %v1552
    %v1565 = vadd.f32 %v1498, %v1557
    %v1566 = vadd.f32 %v1499, %v1560
    %v1567 = vxor.u32 %v1563, 2147483648
    %v1568 = vxor.u32 %v1564, 2147483648
    %v1569 = vxor.u32 %v1565, 2147483648
    %v1570 = vxor.u32 %v1566, 2147483648
    %v1571 = vmul.f32 %v1567, 1.442695
    %v1572 = vpow.pop %v1571
    %v1573 = vmul.f32 %v1568, 1.442695
    %v1574 = vpow.pop %v1573
    %v1575 = vmul.f32 %v1569, 1.442695
    %v1576 = vpow.pop %v1575
    %v1577 = vmul.f32 %v1570, 1.442695
    %v1578 = vpow.pop %v1577
    %v1579 = vadd.f32 %v1572, 1.0
    %v1580 = vadd.f32 %v1574, 1.0
    %v1581 = vadd.f32 %v1576, 1.0
    %v1582 = vadd.f32 %v1578, 1.0
    %v1583 = vrcp.pop %v1579
    %v1584 = vmul.f32 1.0, %v1583
    %v1585 = vrcp.pop %v1580
    %v1586 = vmul.f32 1.0, %v1585
    %v1587 = vrcp.pop %v1581
    %v1588 = vmul.f32 1.0, %v1587
    %v1589 = vrcp.pop %v1582
    %v1590 = vmul.f32 1.0, %v1589
    %v1591 = vtanh.pop %v1563
    %v1592 = vtanh.pop %v1564
    %v1593 = vtanh.pop %v1565
    %v1594 = vtanh.pop %v1566
    %v1595 = vmul.f32 %v1584, %v1148
    %v1596 = vmul.f32 %v1586, %v1149
    %v1597 = vmul.f32 %v1588, %v1150
    %v1598 = vmul.f32 %v1590, %v1151
    %1603 = vrot.lane.b32.xlu0 %v1591, 64
    %v1604 = vpop.permute.xlu0 %1603
    %1605 = vrot.lane.b32.xlu0 %v1592, 64
    %v1606 = vpop.permute.xlu0 %1605
    %1607 = vrot.lane.b32.xlu0 %v1593, 64
    %v1608 = vpop.permute.xlu0 %1607
    %1609 = vrot.lane.b32.xlu0 %v1594, 64
    %v1610 = vpop.permute.xlu0 %1609
    %v1615 = vmul.f32 %v1584, %v1604
    %v1616 = vmul.f32 %v1586, %v1606
    %v1617 = vmul.f32 %v1588, %v1608
    %v1618 = vmul.f32 %v1590, %v1610
    %1623 = vrot.lane.b32.xlu0 %v1615, 32
    %v1624 = vpop.permute.xlu0 %1623
    %1625 = vrot.lane.b32.xlu0 %v1616, 32
    %v1626 = vpop.permute.xlu0 %1625
    %1627 = vrot.lane.b32.xlu0 %v1617, 32
    %v1628 = vpop.permute.xlu0 %1627
    %1629 = vrot.lane.b32.xlu0 %v1618, 32
    %v1630 = vpop.permute.xlu0 %1629
    %v1635 = vadd.f32 %v1595, %v1624
    %v1636 = vadd.f32 %v1596, %v1626
    %v1637 = vadd.f32 %v1597, %v1628
    %v1638 = vadd.f32 %v1598, %v1630
    %v1639 = vtanh.pop %v1635
    %v1640 = vtanh.pop %v1636
    %v1641 = vtanh.pop %v1637
    %v1642 = vtanh.pop %v1638
    %1647 = vrot.lane.b32.xlu0 %v1639, 64
    %v1648 = vpop.permute.xlu0 %1647
    %1649 = vrot.lane.b32.xlu0 %v1640, 64
    %v1650 = vpop.permute.xlu0 %1649
    %1651 = vrot.lane.b32.xlu0 %v1641, 64
    %v1652 = vpop.permute.xlu0 %1651
    %1653 = vrot.lane.b32.xlu0 %v1642, 64
    %v1654 = vpop.permute.xlu0 %1653
    %v1659 = vmul.f32 %v1584, %v1648
    %v1660 = vmul.f32 %v1586, %v1650
    %v1661 = vmul.f32 %v1588, %v1652
    %v1662 = vmul.f32 %v1590, %v1654
    %1663 = vmatprep.subr.bf16.mxu0 0
    %1664 = vmatpush1.bf16.msra.mxu0 0
    %1665 = vmatprep.subr.bf16.mxu0 0
    %1666 = vmatpush1.bf16.msra.mxu0 0
    %1667 = vmatprep.subr.bf16.mxu0 0
    %1668 = vmatpush1.bf16.msra.mxu0 0
    %1669 = vmatprep.subr.bf16.mxu0 0
    %1670 = vmatpush1.bf16.msra.mxu0 0
    %1671 = vmatprep.subr.bf16.mxu0 0
    %1672 = vmatpush1.bf16.msra.mxu0 0
    %1673 = vmatprep.subr.bf16.mxu0 0
    %1674 = vmatpush1.bf16.msra.mxu0 0
    %1675 = vmatprep.subr.bf16.mxu0 0
    %1676 = vmatpush1.bf16.msra.mxu0 %v574
    %1677 = vmatprep.subr.bf16.mxu0 0
    %1678 = vmatpush1.bf16.msra.mxu0 %v573
    %1679 = vmatprep.subr.bf16.mxu0 0
    %1680 = vmatpush2.bf16.msra.mxu0 0
    %1681 = vmatprep.subr.bf16.mxu0 0
    %1682 = vmatpush2.bf16.msra.mxu0 0
    %1683 = vmatprep.subr.bf16.mxu0 0
    %1684 = vmatpush2.bf16.msra.mxu0 0
    %1685 = vmatprep.subr.bf16.mxu0 0
    %1686 = vmatpush2.bf16.msra.mxu0 0
    %1687 = vmatprep.subr.bf16.mxu0 0
    %1688 = vmatpush2.bf16.msra.mxu0 0
    %1689 = vmatprep.subr.bf16.mxu0 0
    %1690 = vmatpush2.bf16.msra.mxu0 0
    %1691 = vmatprep.subr.bf16.mxu0 0
    %1692 = vmatpush2.bf16.msra.mxu0 0
    %1693 = vmatprep.subr.bf16.mxu0 0
    %1694 = vmatpush2.bf16.msra.mxu0 0
    %1695 = vmatprep.mubr.bf16.mxu0 0
    %1696 = vmatmul.mubr.bf16.gmra.mxu0 %v1383
    %v1697 = vpop.f32.mrf.mxu0
    %v1698 = vadd.f32 0.0, %v1697
    %v1699 = vpop.f32.mrf.mxu0
    %v1700 = vpop.f32.mrf.mxu0
    %v1701 = vadd.f32 0.0, %v1700
    %v1702 = vpop.f32.mrf.mxu0
    %1703 = vmatprep.mubr.bf16.mxu0 0
    %1704 = vmatmul.mubr.bf16.gmra.mxu0 %v1386
    %v1705 = vpop.f32.mrf.mxu0
    %v1706 = vadd.f32 0.0, %v1705
    %v1707 = vpop.f32.mrf.mxu0
    %v1708 = vpop.f32.mrf.mxu0
    %v1709 = vadd.f32 0.0, %v1708
    %v1710 = vpop.f32.mrf.mxu0
    %1711 = vdwg.mxu0
    %1712 = vmatprep.subr.bf16.mxu0 0
    %1713 = vmatpush1.bf16.msra.mxu0 0
    %1714 = vmatprep.subr.bf16.mxu0 0
    %1715 = vmatpush1.bf16.msra.mxu0 0
    %1716 = vmatprep.subr.bf16.mxu0 0
    %1717 = vmatpush1.bf16.msra.mxu0 0
    %1718 = vmatprep.subr.bf16.mxu0 0
    %1719 = vmatpush1.bf16.msra.mxu0 0
    %1720 = vmatprep.subr.bf16.mxu0 0
    %1721 = vmatpush1.bf16.msra.mxu0 0
    %1722 = vmatprep.subr.bf16.mxu0 0
    %1723 = vmatpush1.bf16.msra.mxu0 0
    %1724 = vmatprep.subr.bf16.mxu0 0
    %1725 = vmatpush1.bf16.msra.mxu0 %v641
    %1726 = vmatprep.subr.bf16.mxu0 0
    %1727 = vmatpush1.bf16.msra.mxu0 %v640
    %1728 = vmatprep.subr.bf16.mxu0 0
    %1729 = vmatpush2.bf16.msra.mxu0 0
    %1730 = vmatprep.subr.bf16.mxu0 0
    %1731 = vmatpush2.bf16.msra.mxu0 0
    %1732 = vmatprep.subr.bf16.mxu0 0
    %1733 = vmatpush2.bf16.msra.mxu0 0
    %1734 = vmatprep.subr.bf16.mxu0 0
    %1735 = vmatpush2.bf16.msra.mxu0 0
    %1736 = vmatprep.subr.bf16.mxu0 0
    %1737 = vmatpush2.bf16.msra.mxu0 0
    %1738 = vmatprep.subr.bf16.mxu0 0
    %1739 = vmatpush2.bf16.msra.mxu0 0
    %1740 = vmatprep.subr.bf16.mxu0 0
    %1741 = vmatpush2.bf16.msra.mxu0 0
    %1742 = vmatprep.subr.bf16.mxu0 0
    %1743 = vmatpush2.bf16.msra.mxu0 0
    %1744 = vmatprep.mubr.bf16.mxu0 0
    %1745 = vmatmul.mubr.bf16.gmra.mxu0 %v1509
    %v1746 = vpop.f32.mrf.mxu0
    %v1747 = vadd.f32 %v1698, %v1746
    %v1748 = vpop.f32.mrf.mxu0
    %v1749 = vpop.f32.mrf.mxu0
    %v1750 = vadd.f32 %v1701, %v1749
    %v1751 = vpop.f32.mrf.mxu0
    %1752 = vmatprep.mubr.bf16.mxu0 0
    %1753 = vmatmul.mubr.bf16.gmra.mxu0 %v1512
    %v1754 = vpop.f32.mrf.mxu0
    %v1755 = vadd.f32 %v1706, %v1754
    %v1756 = vpop.f32.mrf.mxu0
    %v1757 = vpop.f32.mrf.mxu0
    %v1758 = vadd.f32 %v1709, %v1757
    %v1759 = vpop.f32.mrf.mxu0
    %1760 = vdwg.mxu0
    %v1761 = vadd.f32 %v1747, %v697
    %v1762 = vadd.f32 %v1750, %v697
    %v1763 = vadd.f32 %v1755, %v697
    %v1764 = vadd.f32 %v1758, %v697
    %v1765 = vxor.u32 %v1761, 2147483648
    %v1766 = vxor.u32 %v1762, 2147483648
    %v1767 = vxor.u32 %v1763, 2147483648
    %v1768 = vxor.u32 %v1764, 2147483648
    %v1769 = vmul.f32 %v1765, 1.442695
    %v1770 = vpow.pop %v1769
    %v1771 = vmul.f32 %v1766, 1.442695
    %v1772 = vpow.pop %v1771
    %v1773 = vmul.f32 %v1767, 1.442695
    %v1774 = vpow.pop %v1773
    %v1775 = vmul.f32 %v1768, 1.442695
    %v1776 = vpow.pop %v1775
    %v1777 = vadd.f32 %v1770, 1.0
    %v1778 = vadd.f32 %v1772, 1.0
    %v1779 = vadd.f32 %v1774, 1.0
    %v1780 = vadd.f32 %v1776, 1.0
    %v1781 = vrcp.pop %v1777
    %v1782 = vmul.f32 1.0, %v1781
    %v1783 = vrcp.pop %v1778
    %v1784 = vmul.f32 1.0, %v1783
    %v1785 = vrcp.pop %v1779
    %v1786 = vmul.f32 1.0, %v1785
    %v1787 = vrcp.pop %v1780
    %v1788 = vmul.f32 1.0, %v1787
    %v1789 = vtanh.pop %v1761
    %v1790 = vtanh.pop %v1762
    %v1791 = vtanh.pop %v1763
    %v1792 = vtanh.pop %v1764
    %v1793 = vmul.f32 %v1782, %v1346
    %v1794 = vmul.f32 %v1784, %v1347
    %v1795 = vmul.f32 %v1786, %v1348
    %v1796 = vmul.f32 %v1788, %v1349
    %1801 = vrot.lane.b32.xlu0 %v1789, 64
    %v1802 = vpop.permute.xlu0 %1801
    %1803 = vrot.lane.b32.xlu0 %v1790, 64
    %v1804 = vpop.permute.xlu0 %1803
    %1805 = vrot.lane.b32.xlu0 %v1791, 64
    %v1806 = vpop.permute.xlu0 %1805
    %1807 = vrot.lane.b32.xlu0 %v1792, 64
    %v1808 = vpop.permute.xlu0 %1807
    %v1813 = vmul.f32 %v1782, %v1802
    %v1814 = vmul.f32 %v1784, %v1804
    %v1815 = vmul.f32 %v1786, %v1806
    %v1816 = vmul.f32 %v1788, %v1808
    %1821 = vrot.lane.b32.xlu0 %v1813, 32
    %v1822 = vpop.permute.xlu0 %1821
    %1823 = vrot.lane.b32.xlu0 %v1814, 32
    %v1824 = vpop.permute.xlu0 %1823
    %1825 = vrot.lane.b32.xlu0 %v1815, 32
    %v1826 = vpop.permute.xlu0 %1825
    %1827 = vrot.lane.b32.xlu0 %v1816, 32
    %v1828 = vpop.permute.xlu0 %1827
    %v1833 = vadd.f32 %v1793, %v1822
    %v1834 = vadd.f32 %v1794, %v1824
    %v1835 = vadd.f32 %v1795, %v1826
    %v1836 = vadd.f32 %v1796, %v1828
    %v1837 = vtanh.pop %v1833
    %v1838 = vtanh.pop %v1834
    %v1839 = vtanh.pop %v1835
    %v1840 = vtanh.pop %v1836
    %1845 = vrot.lane.b32.xlu0 %v1837, 64
    %v1846 = vpop.permute.xlu0 %1845
    %1847 = vrot.lane.b32.xlu0 %v1838, 64
    %v1848 = vpop.permute.xlu0 %1847
    %1849 = vrot.lane.b32.xlu0 %v1839, 64
    %v1850 = vpop.permute.xlu0 %1849
    %1851 = vrot.lane.b32.xlu0 %v1840, 64
    %v1852 = vpop.permute.xlu0 %1851
    %v1857 = vmul.f32 %v1782, %v1846
    %v1858 = vmul.f32 %v1784, %v1848
    %v1859 = vmul.f32 %v1786, %v1850
    %v1860 = vmul.f32 %v1788, %v1852
    %v1861 = vpack.c.bf16 %v1858, %v1857
    %v1862 = vpack.c.bf16 %v1860, %v1859
    %1865 = vrot.lane.b32.xlu0 %v1861, 32
    %v1866 = vpop.permute.xlu0 %1865
    %1867 = vrot.lane.b32.xlu0 %v1862, 32
    %v1868 = vpop.permute.xlu0 %1867
    %v1870 = vsel %vm224, %v1866, 0
    %v1873 = vsel %vm224, %v1868, 0
    %1875 = vmatprep.subr.bf16.mxu0 0
    %1876 = vmatpush1.bf16.msra.mxu0 0
    %1877 = vmatprep.subr.bf16.mxu0 0
    %1878 = vmatpush1.bf16.msra.mxu0 0
    %1879 = vmatprep.subr.bf16.mxu0 0
    %1880 = vmatpush1.bf16.msra.mxu0 0
    %1881 = vmatprep.subr.bf16.mxu0 0
    %1882 = vmatpush1.bf16.msra.mxu0 0
    %1883 = vmatprep.subr.bf16.mxu0 0
    %1884 = vmatpush1.bf16.msra.mxu0 0
    %1885 = vmatprep.subr.bf16.mxu0 0
    %1886 = vmatpush1.bf16.msra.mxu0 0
    %1887 = vmatprep.subr.bf16.mxu0 0
    %1888 = vmatpush1.bf16.msra.mxu0 %v838
    %1889 = vmatprep.subr.bf16.mxu0 0
    %1890 = vmatpush1.bf16.msra.mxu0 %v837
    %1891 = vmatprep.subr.bf16.mxu0 0
    %1892 = vmatpush2.bf16.msra.mxu0 0
    %1893 = vmatprep.subr.bf16.mxu0 0
    %1894 = vmatpush2.bf16.msra.mxu0 0
    %1895 = vmatprep.subr.bf16.mxu0 0
    %1896 = vmatpush2.bf16.msra.mxu0 0
    %1897 = vmatprep.subr.bf16.mxu0 0
    %1898 = vmatpush2.bf16.msra.mxu0 0
    %1899 = vmatprep.subr.bf16.mxu0 0
    %1900 = vmatpush2.bf16.msra.mxu0 0
    %1901 = vmatprep.subr.bf16.mxu0 0
    %1902 = vmatpush2.bf16.msra.mxu0 0
    %1903 = vmatprep.subr.bf16.mxu0 0
    %1904 = vmatpush2.bf16.msra.mxu0 0
    %1905 = vmatprep.subr.bf16.mxu0 0
    %1906 = vmatpush2.bf16.msra.mxu0 0
    %1907 = vmatprep.mubr.bf16.mxu0 0
    %1908 = vmatmul.mubr.bf16.gmra.mxu0 %v1870
    %v1909 = vpop.f32.mrf.mxu0
    %v1910 = vadd.f32 %v821, %v1909
    %v1911 = vpop.f32.mrf.mxu0
    %v1912 = vpop.f32.mrf.mxu0
    %v1913 = vadd.f32 %v821, %v1912
    %v1914 = vpop.f32.mrf.mxu0
    %1915 = vmatprep.mubr.bf16.mxu0 0
    %1916 = vmatmul.mubr.bf16.gmra.mxu0 %v1873
    %v1917 = vpop.f32.mrf.mxu0
    %v1918 = vadd.f32 %v821, %v1917
    %v1919 = vpop.f32.mrf.mxu0
    %v1920 = vpop.f32.mrf.mxu0
    %v1921 = vadd.f32 %v821, %v1920
    %v1922 = vpop.f32.mrf.mxu0
    %1923 = vdwg.mxu0
    %v1924 = vmax.f32 %v1910, 0.0
    %v1925 = vmax.f32 %v1913, 0.0
    %v1926 = vmax.f32 %v1918, 0.0
    %v1927 = vmax.f32 %v1921, 0.0
    %v1928 = vpack.c.bf16 %v1925, %v1924
    %v1929 = vpack.c.bf16 %v1927, %v1926
    %1930 = vmatprep.subr.bf16.mxu0 0
    %1931 = vmatpush1.bf16.msra.mxu0 %v947
    %1932 = vmatprep.subr.bf16.mxu0 0
    %1933 = vmatpush1.bf16.msra.mxu0 %v946
    %1934 = vmatprep.subr.bf16.mxu0 0
    %1935 = vmatpush1.bf16.msra.mxu0 %v945
    %1936 = vmatprep.subr.bf16.mxu0 0
    %1937 = vmatpush1.bf16.msra.mxu0 %v944
    %1938 = vmatprep.subr.bf16.mxu0 0
    %1939 = vmatpush1.bf16.msra.mxu0 %v943
    %1940 = vmatprep.subr.bf16.mxu0 0
    %1941 = vmatpush1.bf16.msra.mxu0 %v942
    %1942 = vmatprep.subr.bf16.mxu0 0
    %1943 = vmatpush1.bf16.msra.mxu0 %v941
    %1944 = vmatprep.subr.bf16.mxu0 0
    %1945 = vmatpush1.bf16.msra.mxu0 %v940
    %1946 = vmatprep.subr.bf16.mxu0 0
    %1947 = vmatpush2.bf16.msra.mxu0 0
    %1948 = vmatprep.subr.bf16.mxu0 0
    %1949 = vmatpush2.bf16.msra.mxu0 0
    %1950 = vmatprep.subr.bf16.mxu0 0
    %1951 = vmatpush2.bf16.msra.mxu0 0
    %1952 = vmatprep.subr.bf16.mxu0 0
    %1953 = vmatpush2.bf16.msra.mxu0 0
    %1954 = vmatprep.subr.bf16.mxu0 0
    %1955 = vmatpush2.bf16.msra.mxu0 0
    %1956 = vmatprep.subr.bf16.mxu0 0
    %1957 = vmatpush2.bf16.msra.mxu0 0
    %1958 = vmatprep.subr.bf16.mxu0 0
    %1959 = vmatpush2.bf16.msra.mxu0 0
    %1960 = vmatprep.subr.bf16.mxu0 0
    %1961 = vmatpush2.bf16.msra.mxu0 0
    %1962 = vmatprep.mubr.bf16.mxu0 0
    %1963 = vmatmul.mubr.bf16.gmra.mxu0 %v1928
    %v1964 = vpop.f32.mrf.mxu0
    %v1965 = vadd.f32 %v906, %v1964
    %v1966 = vpop.f32.mrf.mxu0
    %v1967 = vpop.f32.mrf.mxu0
    %v1968 = vadd.f32 %v906, %v1967
    %v1969 = vpop.f32.mrf.mxu0
    %1970 = vmatprep.mubr.bf16.mxu0 0
    %1971 = vmatmul.mubr.bf16.gmra.mxu0 %v1929
    %v1972 = vpop.f32.mrf.mxu0
    %v1973 = vadd.f32 %v906, %v1972
    %v1974 = vpop.f32.mrf.mxu0
    %v1975 = vpop.f32.mrf.mxu0
    %v1976 = vadd.f32 %v906, %v1975
    %v1977 = vpop.f32.mrf.mxu0
    %1978 = vdwg.mxu0
    %1979 = vst [vmem:[#allocation16 + $0x40] sm:$0xff] %v1965
    %1980 = vst [vmem:[#allocation16 + $0x48] sm:$0xff] %v1968
    %1981 = vst [vmem:[#allocation16 + $0x50] sm:$0xff] %v1973
    %1982 = vst [vmem:[#allocation16 + $0x58] sm:$0xff] %v1976
    %v1983 = vld [vmem:[#allocation2 + $0x80] sm:$0xff]
    %v1984 = vld [vmem:[#allocation2 + $0x88] sm:$0xff]
    %v1985 = vld [vmem:[#allocation2 + $0x90] sm:$0xff]
    %v1986 = vld [vmem:[#allocation2 + $0x98] sm:$0xff]
    %v1987 = vpack.c.bf16 %v1660, %v1659
    %v1988 = vpack.c.bf16 %v1662, %v1661
    %1991 = vrot.lane.b32.xlu0 %v1987, 32
    %v1992 = vpop.permute.xlu0 %1991
    %1993 = vrot.lane.b32.xlu0 %v1988, 32
    %v1994 = vpop.permute.xlu0 %1993
    %v1996 = vsel %vm224, %v1992, 0
    %v1999 = vsel %vm224, %v1994, 0
    %2001 = vmatprep.subr.bf16.mxu0 0
    %2002 = vmatpush1.bf16.msra.mxu0 0
    %2003 = vmatprep.subr.bf16.mxu0 0
    %2004 = vmatpush1.bf16.msra.mxu0 0
    %2005 = vmatprep.subr.bf16.mxu0 0
    %2006 = vmatpush1.bf16.msra.mxu0 0
    %2007 = vmatprep.subr.bf16.mxu0 0
    %2008 = vmatpush1.bf16.msra.mxu0 0
    %2009 = vmatprep.subr.bf16.mxu0 0
    %2010 = vmatpush1.bf16.msra.mxu0 0
    %2011 = vmatprep.subr.bf16.mxu0 0
    %2012 = vmatpush1.bf16.msra.mxu0 0
    %2013 = vmatprep.subr.bf16.mxu0 0
    %2014 = vmatpush1.bf16.msra.mxu0 %v221
    %2015 = vmatprep.subr.bf16.mxu0 0
    %2016 = vmatpush1.bf16.msra.mxu0 %v220
    %2017 = vmatprep.subr.bf16.mxu0 0
    %2018 = vmatpush2.bf16.msra.mxu0 0
    %2019 = vmatprep.subr.bf16.mxu0 0
    %2020 = vmatpush2.bf16.msra.mxu0 0
    %2021 = vmatprep.subr.bf16.mxu0 0
    %2022 = vmatpush2.bf16.msra.mxu0 0
    %2023 = vmatprep.subr.bf16.mxu0 0
    %2024 = vmatpush2.bf16.msra.mxu0 0
    %2025 = vmatprep.subr.bf16.mxu0 0
    %2026 = vmatpush2.bf16.msra.mxu0 0
    %2027 = vmatprep.subr.bf16.mxu0 0
    %2028 = vmatpush2.bf16.msra.mxu0 0
    %2029 = vmatprep.subr.bf16.mxu0 0
    %2030 = vmatpush2.bf16.msra.mxu0 0
    %2031 = vmatprep.subr.bf16.mxu0 0
    %2032 = vmatpush2.bf16.msra.mxu0 0
    %2033 = vmatprep.mubr.bf16.mxu0 0
    %2034 = vmatmul.mubr.bf16.gmra.mxu0 %v1996
    %v2035 = vpop.f32.mrf.mxu0
    %v2036 = vadd.f32 0.0, %v2035
    %v2037 = vpop.f32.mrf.mxu0
    %v2038 = vpop.f32.mrf.mxu0
    %v2039 = vadd.f32 0.0, %v2038
    %v2040 = vpop.f32.mrf.mxu0
    %2041 = vmatprep.mubr.bf16.mxu0 0
    %2042 = vmatmul.mubr.bf16.gmra.mxu0 %v1999
    %v2043 = vpop.f32.mrf.mxu0
    %v2044 = vadd.f32 0.0, %v2043
    %v2045 = vpop.f32.mrf.mxu0
    %v2046 = vpop.f32.mrf.mxu0
    %v2047 = vadd.f32 0.0, %v2046
    %v2048 = vpop.f32.mrf.mxu0
    %2049 = vdwg.mxu0
    %v2050 = vadd.f32 %v1983, %v2036
    %v2051 = vadd.f32 %v1984, %v2039
    %v2052 = vadd.f32 %v1985, %v2044
    %v2053 = vadd.f32 %v1986, %v2047
    %v2054 = vxor.u32 %v2050, 2147483648
    %v2055 = vxor.u32 %v2051, 2147483648
    %v2056 = vxor.u32 %v2052, 2147483648
    %v2057 = vxor.u32 %v2053, 2147483648
    %v2058 = vmul.f32 %v2054, 1.442695
    %v2059 = vpow.pop %v2058
    %v2060 = vmul.f32 %v2055, 1.442695
    %v2061 = vpow.pop %v2060
    %v2062 = vmul.f32 %v2056, 1.442695
    %v2063 = vpow.pop %v2062
    %v2064 = vmul.f32 %v2057, 1.442695
    %v2065 = vpow.pop %v2064
    %v2066 = vadd.f32 %v2059, 1.0
    %v2067 = vadd.f32 %v2061, 1.0
    %v2068 = vadd.f32 %v2063, 1.0
    %v2069 = vadd.f32 %v2065, 1.0
    %v2070 = vrcp.pop %v2066
    %v2071 = vmul.f32 1.0, %v2070
    %v2072 = vrcp.pop %v2067
    %v2073 = vmul.f32 1.0, %v2072
    %v2074 = vrcp.pop %v2068
    %v2075 = vmul.f32 1.0, %v2074
    %v2076 = vrcp.pop %v2069
    %v2077 = vmul.f32 1.0, %v2076
    %v2078 = vtanh.pop %v2050
    %v2079 = vtanh.pop %v2051
    %v2080 = vtanh.pop %v2052
    %v2081 = vtanh.pop %v2053
    %v2082 = vmul.f32 %v2071, %v1635
    %v2083 = vmul.f32 %v2073, %v1636
    %v2084 = vmul.f32 %v2075, %v1637
    %v2085 = vmul.f32 %v2077, %v1638
    %2090 = vrot.lane.b32.xlu0 %v2078, 64
    %v2091 = vpop.permute.xlu0 %2090
    %2092 = vrot.lane.b32.xlu0 %v2079, 64
    %v2093 = vpop.permute.xlu0 %2092
    %2094 = vrot.lane.b32.xlu0 %v2080, 64
    %v2095 = vpop.permute.xlu0 %2094
    %2096 = vrot.lane.b32.xlu0 %v2081, 64
    %v2097 = vpop.permute.xlu0 %2096
    %v2102 = vmul.f32 %v2071, %v2091
    %v2103 = vmul.f32 %v2073, %v2093
    %v2104 = vmul.f32 %v2075, %v2095
    %v2105 = vmul.f32 %v2077, %v2097
    %2110 = vrot.lane.b32.xlu0 %v2102, 32
    %v2111 = vpop.permute.xlu0 %2110
    %2112 = vrot.lane.b32.xlu0 %v2103, 32
    %v2113 = vpop.permute.xlu0 %2112
    %2114 = vrot.lane.b32.xlu0 %v2104, 32
    %v2115 = vpop.permute.xlu0 %2114
    %2116 = vrot.lane.b32.xlu0 %v2105, 32
    %v2117 = vpop.permute.xlu0 %2116
    %v2122 = vadd.f32 %v2082, %v2111
    %v2123 = vadd.f32 %v2083, %v2113
    %v2124 = vadd.f32 %v2084, %v2115
    %v2125 = vadd.f32 %v2085, %v2117
    %v2126 = vtanh.pop %v2122
    %v2127 = vtanh.pop %v2123
    %v2128 = vtanh.pop %v2124
    %v2129 = vtanh.pop %v2125
    %2134 = vrot.lane.b32.xlu0 %v2126, 64
    %v2135 = vpop.permute.xlu0 %2134
    %2136 = vrot.lane.b32.xlu0 %v2127, 64
    %v2137 = vpop.permute.xlu0 %2136
    %2138 = vrot.lane.b32.xlu0 %v2128, 64
    %v2139 = vpop.permute.xlu0 %2138
    %2140 = vrot.lane.b32.xlu0 %v2129, 64
    %v2141 = vpop.permute.xlu0 %2140
    %v2146 = vmul.f32 %v2071, %v2135
    %v2147 = vmul.f32 %v2073, %v2137
    %v2148 = vmul.f32 %v2075, %v2139
    %v2149 = vmul.f32 %v2077, %v2141
    %2150 = vmatprep.subr.bf16.mxu0 0
    %2151 = vmatpush1.bf16.msra.mxu0 0
    %2152 = vmatprep.subr.bf16.mxu0 0
    %2153 = vmatpush1.bf16.msra.mxu0 0
    %2154 = vmatprep.subr.bf16.mxu0 0
    %2155 = vmatpush1.bf16.msra.mxu0 0
    %2156 = vmatprep.subr.bf16.mxu0 0
    %2157 = vmatpush1.bf16.msra.mxu0 0
    %2158 = vmatprep.subr.bf16.mxu0 0
    %2159 = vmatpush1.bf16.msra.mxu0 0
    %2160 = vmatprep.subr.bf16.mxu0 0
    %2161 = vmatpush1.bf16.msra.mxu0 0
    %2162 = vmatprep.subr.bf16.mxu0 0
    %2163 = vmatpush1.bf16.msra.mxu0 %v574
    %2164 = vmatprep.subr.bf16.mxu0 0
    %2165 = vmatpush1.bf16.msra.mxu0 %v573
    %2166 = vmatprep.subr.bf16.mxu0 0
    %2167 = vmatpush2.bf16.msra.mxu0 0
    %2168 = vmatprep.subr.bf16.mxu0 0
    %2169 = vmatpush2.bf16.msra.mxu0 0
    %2170 = vmatprep.subr.bf16.mxu0 0
    %2171 = vmatpush2.bf16.msra.mxu0 0
    %2172 = vmatprep.subr.bf16.mxu0 0
    %2173 = vmatpush2.bf16.msra.mxu0 0
    %2174 = vmatprep.subr.bf16.mxu0 0
    %2175 = vmatpush2.bf16.msra.mxu0 0
    %2176 = vmatprep.subr.bf16.mxu0 0
    %2177 = vmatpush2.bf16.msra.mxu0 0
    %2178 = vmatprep.subr.bf16.mxu0 0
    %2179 = vmatpush2.bf16.msra.mxu0 0
    %2180 = vmatprep.subr.bf16.mxu0 0
    %2181 = vmatpush2.bf16.msra.mxu0 0
    %2182 = vmatprep.mubr.bf16.mxu0 0
    %2183 = vmatmul.mubr.bf16.gmra.mxu0 %v1870
    %v2184 = vpop.f32.mrf.mxu0
    %v2185 = vadd.f32 0.0, %v2184
    %v2186 = vpop.f32.mrf.mxu0
    %v2187 = vpop.f32.mrf.mxu0
    %v2188 = vadd.f32 0.0, %v2187
    %v2189 = vpop.f32.mrf.mxu0
    %2190 = vmatprep.mubr.bf16.mxu0 0
    %2191 = vmatmul.mubr.bf16.gmra.mxu0 %v1873
    %v2192 = vpop.f32.mrf.mxu0
    %v2193 = vadd.f32 0.0, %v2192
    %v2194 = vpop.f32.mrf.mxu0
    %v2195 = vpop.f32.mrf.mxu0
    %v2196 = vadd.f32 0.0, %v2195
    %v2197 = vpop.f32.mrf.mxu0
    %2198 = vdwg.mxu0
    %2199 = vmatprep.subr.bf16.mxu0 0
    %2200 = vmatpush1.bf16.msra.mxu0 0
    %2201 = vmatprep.subr.bf16.mxu0 0
    %2202 = vmatpush1.bf16.msra.mxu0 0
    %2203 = vmatprep.subr.bf16.mxu0 0
    %2204 = vmatpush1.bf16.msra.mxu0 0
    %2205 = vmatprep.subr.bf16.mxu0 0
    %2206 = vmatpush1.bf16.msra.mxu0 0
    %2207 = vmatprep.subr.bf16.mxu0 0
    %2208 = vmatpush1.bf16.msra.mxu0 0
    %2209 = vmatprep.subr.bf16.mxu0 0
    %2210 = vmatpush1.bf16.msra.mxu0 0
    %2211 = vmatprep.subr.bf16.mxu0 0
    %2212 = vmatpush1.bf16.msra.mxu0 %v641
    %2213 = vmatprep.subr.bf16.mxu0 0
    %2214 = vmatpush1.bf16.msra.mxu0 %v640
    %2215 = vmatprep.subr.bf16.mxu0 0
    %2216 = vmatpush2.bf16.msra.mxu0 0
    %2217 = vmatprep.subr.bf16.mxu0 0
    %2218 = vmatpush2.bf16.msra.mxu0 0
    %2219 = vmatprep.subr.bf16.mxu0 0
    %2220 = vmatpush2.bf16.msra.mxu0 0
    %2221 = vmatprep.subr.bf16.mxu0 0
    %2222 = vmatpush2.bf16.msra.mxu0 0
    %2223 = vmatprep.subr.bf16.mxu0 0
    %2224 = vmatpush2.bf16.msra.mxu0 0
    %2225 = vmatprep.subr.bf16.mxu0 0
    %2226 = vmatpush2.bf16.msra.mxu0 0
    %2227 = vmatprep.subr.bf16.mxu0 0
    %2228 = vmatpush2.bf16.msra.mxu0 0
    %2229 = vmatprep.subr.bf16.mxu0 0
    %2230 = vmatpush2.bf16.msra.mxu0 0
    %2231 = vmatprep.mubr.bf16.mxu0 0
    %2232 = vmatmul.mubr.bf16.gmra.mxu0 %v1996
    %v2233 = vpop.f32.mrf.mxu0
    %v2234 = vadd.f32 %v2185, %v2233
    %v2235 = vpop.f32.mrf.mxu0
    %v2236 = vpop.f32.mrf.mxu0
    %v2237 = vadd.f32 %v2188, %v2236
    %v2238 = vpop.f32.mrf.mxu0
    %2239 = vmatprep.mubr.bf16.mxu0 0
    %2240 = vmatmul.mubr.bf16.gmra.mxu0 %v1999
    %v2241 = vpop.f32.mrf.mxu0
    %v2242 = vadd.f32 %v2193, %v2241
    %v2243 = vpop.f32.mrf.mxu0
    %v2244 = vpop.f32.mrf.mxu0
    %v2245 = vadd.f32 %v2196, %v2244
    %v2246 = vpop.f32.mrf.mxu0
    %2247 = vdwg.mxu0
    %v2248 = vadd.f32 %v2234, %v697
    %v2249 = vadd.f32 %v2237, %v697
    %v2250 = vadd.f32 %v2242, %v697
    %v2251 = vadd.f32 %v2245, %v697
    %v2252 = vxor.u32 %v2248, 2147483648
    %v2253 = vxor.u32 %v2249, 2147483648
    %v2254 = vxor.u32 %v2250, 2147483648
    %v2255 = vxor.u32 %v2251, 2147483648
    %v2256 = vmul.f32 %v2252, 1.442695
    %v2257 = vpow.pop %v2256
    %v2258 = vmul.f32 %v2253, 1.442695
    %v2259 = vpow.pop %v2258
    %v2260 = vmul.f32 %v2254, 1.442695
    %v2261 = vpow.pop %v2260
    %v2262 = vmul.f32 %v2255, 1.442695
    %v2263 = vpow.pop %v2262
    %v2264 = vadd.f32 %v2257, 1.0
    %v2265 = vadd.f32 %v2259, 1.0
    %v2266 = vadd.f32 %v2261, 1.0
    %v2267 = vadd.f32 %v2263, 1.0
    %v2268 = vrcp.pop %v2264
    %v2269 = vmul.f32 1.0, %v2268
    %v2270 = vrcp.pop %v2265
    %v2271 = vmul.f32 1.0, %v2270
    %v2272 = vrcp.pop %v2266
    %v2273 = vmul.f32 1.0, %v2272
    %v2274 = vrcp.pop %v2267
    %v2275 = vmul.f32 1.0, %v2274
    %v2276 = vtanh.pop %v2248
    %v2277 = vtanh.pop %v2249
    %v2278 = vtanh.pop %v2250
    %v2279 = vtanh.pop %v2251
    %v2280 = vmul.f32 %v2269, %v1833
    %v2281 = vmul.f32 %v2271, %v1834
    %v2282 = vmul.f32 %v2273, %v1835
    %v2283 = vmul.f32 %v2275, %v1836
    %2288 = vrot.lane.b32.xlu0 %v2276, 64
    %v2289 = vpop.permute.xlu0 %2288
    %2290 = vrot.lane.b32.xlu0 %v2277, 64
    %v2291 = vpop.permute.xlu0 %2290
    %2292 = vrot.lane.b32.xlu0 %v2278, 64
    %v2293 = vpop.permute.xlu0 %2292
    %2294 = vrot.lane.b32.xlu0 %v2279, 64
    %v2295 = vpop.permute.xlu0 %2294
    %v2300 = vmul.f32 %v2269, %v2289
    %v2301 = vmul.f32 %v2271, %v2291
    %v2302 = vmul.f32 %v2273, %v2293
    %v2303 = vmul.f32 %v2275, %v2295
    %2308 = vrot.lane.b32.xlu0 %v2300, 32
    %v2309 = vpop.permute.xlu0 %2308
    %2310 = vrot.lane.b32.xlu0 %v2301, 32
    %v2311 = vpop.permute.xlu0 %2310
    %2312 = vrot.lane.b32.xlu0 %v2302, 32
    %v2313 = vpop.permute.xlu0 %2312
    %2314 = vrot.lane.b32.xlu0 %v2303, 32
    %v2315 = vpop.permute.xlu0 %2314
    %v2320 = vadd.f32 %v2280, %v2309
    %v2321 = vadd.f32 %v2281, %v2311
    %v2322 = vadd.f32 %v2282, %v2313
    %v2323 = vadd.f32 %v2283, %v2315
    %v2324 = vtanh.pop %v2320
    %v2325 = vtanh.pop %v2321
    %v2326 = vtanh.pop %v2322
    %v2327 = vtanh.pop %v2323
    %2332 = vrot.lane.b32.xlu0 %v2324, 64
    %v2333 = vpop.permute.xlu0 %2332
    %2334 = vrot.lane.b32.xlu0 %v2325, 64
    %v2335 = vpop.permute.xlu0 %2334
    %2336 = vrot.lane.b32.xlu0 %v2326, 64
    %v2337 = vpop.permute.xlu0 %2336
    %2338 = vrot.lane.b32.xlu0 %v2327, 64
    %v2339 = vpop.permute.xlu0 %2338
    %v2344 = vmul.f32 %v2269, %v2333
    %v2345 = vmul.f32 %v2271, %v2335
    %v2346 = vmul.f32 %v2273, %v2337
    %v2347 = vmul.f32 %v2275, %v2339
    %v2348 = vpack.c.bf16 %v2345, %v2344
    %v2349 = vpack.c.bf16 %v2347, %v2346
    %2352 = vrot.lane.b32.xlu0 %v2348, 32
    %v2353 = vpop.permute.xlu0 %2352
    %2354 = vrot.lane.b32.xlu0 %v2349, 32
    %v2355 = vpop.permute.xlu0 %2354
    %v2357 = vsel %vm224, %v2353, 0
    %v2360 = vsel %vm224, %v2355, 0
    %2362 = vmatprep.subr.bf16.mxu0 0
    %2363 = vmatpush1.bf16.msra.mxu0 0
    %2364 = vmatprep.subr.bf16.mxu0 0
    %2365 = vmatpush1.bf16.msra.mxu0 0
    %2366 = vmatprep.subr.bf16.mxu0 0
    %2367 = vmatpush1.bf16.msra.mxu0 0
    %2368 = vmatprep.subr.bf16.mxu0 0
    %2369 = vmatpush1.bf16.msra.mxu0 0
    %2370 = vmatprep.subr.bf16.mxu0 0
    %2371 = vmatpush1.bf16.msra.mxu0 0
    %2372 = vmatprep.subr.bf16.mxu0 0
    %2373 = vmatpush1.bf16.msra.mxu0 0
    %2374 = vmatprep.subr.bf16.mxu0 0
    %2375 = vmatpush1.bf16.msra.mxu0 %v838
    %2376 = vmatprep.subr.bf16.mxu0 0
    %2377 = vmatpush1.bf16.msra.mxu0 %v837
    %2378 = vmatprep.subr.bf16.mxu0 0
    %2379 = vmatpush2.bf16.msra.mxu0 0
    %2380 = vmatprep.subr.bf16.mxu0 0
    %2381 = vmatpush2.bf16.msra.mxu0 0
    %2382 = vmatprep.subr.bf16.mxu0 0
    %2383 = vmatpush2.bf16.msra.mxu0 0
    %2384 = vmatprep.subr.bf16.mxu0 0
    %2385 = vmatpush2.bf16.msra.mxu0 0
    %2386 = vmatprep.subr.bf16.mxu0 0
    %2387 = vmatpush2.bf16.msra.mxu0 0
    %2388 = vmatprep.subr.bf16.mxu0 0
    %2389 = vmatpush2.bf16.msra.mxu0 0
    %2390 = vmatprep.subr.bf16.mxu0 0
    %2391 = vmatpush2.bf16.msra.mxu0 0
    %2392 = vmatprep.subr.bf16.mxu0 0
    %2393 = vmatpush2.bf16.msra.mxu0 0
    %2394 = vmatprep.mubr.bf16.mxu0 0
    %2395 = vmatmul.mubr.bf16.gmra.mxu0 %v2357
    %v2396 = vpop.f32.mrf.mxu0
    %v2397 = vadd.f32 %v821, %v2396
    %v2398 = vpop.f32.mrf.mxu0
    %v2399 = vpop.f32.mrf.mxu0
    %v2400 = vadd.f32 %v821, %v2399
    %v2401 = vpop.f32.mrf.mxu0
    %2402 = vmatprep.mubr.bf16.mxu0 0
    %2403 = vmatmul.mubr.bf16.gmra.mxu0 %v2360
    %v2404 = vpop.f32.mrf.mxu0
    %v2405 = vadd.f32 %v821, %v2404
    %v2406 = vpop.f32.mrf.mxu0
    %v2407 = vpop.f32.mrf.mxu0
    %v2408 = vadd.f32 %v821, %v2407
    %v2409 = vpop.f32.mrf.mxu0
    %2410 = vdwg.mxu0
    %v2411 = vmax.f32 %v2397, 0.0
    %v2412 = vmax.f32 %v2400, 0.0
    %v2413 = vmax.f32 %v2405, 0.0
    %v2414 = vmax.f32 %v2408, 0.0
    %v2415 = vpack.c.bf16 %v2412, %v2411
    %v2416 = vpack.c.bf16 %v2414, %v2413
    %2417 = vmatprep.subr.bf16.mxu0 0
    %2418 = vmatpush1.bf16.msra.mxu0 %v947
    %2419 = vmatprep.subr.bf16.mxu0 0
    %2420 = vmatpush1.bf16.msra.mxu0 %v946
    %2421 = vmatprep.subr.bf16.mxu0 0
    %2422 = vmatpush1.bf16.msra.mxu0 %v945
    %2423 = vmatprep.subr.bf16.mxu0 0
    %2424 = vmatpush1.bf16.msra.mxu0 %v944
    %2425 = vmatprep.subr.bf16.mxu0 0
    %2426 = vmatpush1.bf16.msra.mxu0 %v943
    %2427 = vmatprep.subr.bf16.mxu0 0
    %2428 = vmatpush1.bf16.msra.mxu0 %v942
    %2429 = vmatprep.subr.bf16.mxu0 0
    %2430 = vmatpush1.bf16.msra.mxu0 %v941
    %2431 = vmatprep.subr.bf16.mxu0 0
    %2432 = vmatpush1.bf16.msra.mxu0 %v940
    %2433 = vmatprep.subr.bf16.mxu0 0
    %2434 = vmatpush2.bf16.msra.mxu0 0
    %2435 = vmatprep.subr.bf16.mxu0 0
    %2436 = vmatpush2.bf16.msra.mxu0 0
    %2437 = vmatprep.subr.bf16.mxu0 0
    %2438 = vmatpush2.bf16.msra.mxu0 0
    %2439 = vmatprep.subr.bf16.mxu0 0
    %2440 = vmatpush2.bf16.msra.mxu0 0
    %2441 = vmatprep.subr.bf16.mxu0 0
    %2442 = vmatpush2.bf16.msra.mxu0 0
    %2443 = vmatprep.subr.bf16.mxu0 0
    %2444 = vmatpush2.bf16.msra.mxu0 0
    %2445 = vmatprep.subr.bf16.mxu0 0
    %2446 = vmatpush2.bf16.msra.mxu0 0
    %2447 = vmatprep.subr.bf16.mxu0 0
    %2448 = vmatpush2.bf16.msra.mxu0 0
    %2449 = vmatprep.mubr.bf16.mxu0 0
    %2450 = vmatmul.mubr.bf16.gmra.mxu0 %v2415
    %v2451 = vpop.f32.mrf.mxu0
    %v2452 = vadd.f32 %v906, %v2451
    %v2453 = vpop.f32.mrf.mxu0
    %v2454 = vpop.f32.mrf.mxu0
    %v2455 = vadd.f32 %v906, %v2454
    %v2456 = vpop.f32.mrf.mxu0
    %2457 = vmatprep.mubr.bf16.mxu0 0
    %2458 = vmatmul.mubr.bf16.gmra.mxu0 %v2416
    %v2459 = vpop.f32.mrf.mxu0
    %v2460 = vadd.f32 %v906, %v2459
    %v2461 = vpop.f32.mrf.mxu0
    %v2462 = vpop.f32.mrf.mxu0
    %v2463 = vadd.f32 %v906, %v2462
    %v2464 = vpop.f32.mrf.mxu0
    %2465 = vdwg.mxu0
    %2466 = vst [vmem:[#allocation16 + $0x60] sm:$0xff] %v2452
    %2467 = vst [vmem:[#allocation16 + $0x68] sm:$0xff] %v2455
    %2468 = vst [vmem:[#allocation16 + $0x70] sm:$0xff] %v2460
    %2469 = vst [vmem:[#allocation16 + $0x78] sm:$0xff] %v2463
    %v2470 = vld [vmem:[#allocation2 + $0xa0] sm:$0xff]
    %v2471 = vld [vmem:[#allocation2 + $0xa8] sm:$0xff]
    %v2472 = vld [vmem:[#allocation2 + $0xb0] sm:$0xff]
    %v2473 = vld [vmem:[#allocation2 + $0xb8] sm:$0xff]
    %v2474 = vpack.c.bf16 %v2147, %v2146
    %v2475 = vpack.c.bf16 %v2149, %v2148
    %2478 = vrot.lane.b32.xlu0 %v2474, 32
    %v2479 = vpop.permute.xlu0 %2478
    %2480 = vrot.lane.b32.xlu0 %v2475, 32
    %v2481 = vpop.permute.xlu0 %2480
    %v2483 = vsel %vm224, %v2479, 0
    %v2486 = vsel %vm224, %v2481, 0
    %2488 = vmatprep.subr.bf16.mxu0 0
    %2489 = vmatpush1.bf16.msra.mxu0 0
    %2490 = vmatprep.subr.bf16.mxu0 0
    %2491 = vmatpush1.bf16.msra.mxu0 0
    %2492 = vmatprep.subr.bf16.mxu0 0
    %2493 = vmatpush1.bf16.msra.mxu0 0
    %2494 = vmatprep.subr.bf16.mxu0 0
    %2495 = vmatpush1.bf16.msra.mxu0 0
    %2496 = vmatprep.subr.bf16.mxu0 0
    %2497 = vmatpush1.bf16.msra.mxu0 0
    %2498 = vmatprep.subr.bf16.mxu0 0
    %2499 = vmatpush1.bf16.msra.mxu0 0
    %2500 = vmatprep.subr.bf16.mxu0 0
    %2501 = vmatpush1.bf16.msra.mxu0 %v221
    %2502 = vmatprep.subr.bf16.mxu0 0
    %2503 = vmatpush1.bf16.msra.mxu0 %v220
    %2504 = vmatprep.subr.bf16.mxu0 0
    %2505 = vmatpush2.bf16.msra.mxu0 0
    %2506 = vmatprep.subr.bf16.mxu0 0
    %2507 = vmatpush2.bf16.msra.mxu0 0
    %2508 = vmatprep.subr.bf16.mxu0 0
    %2509 = vmatpush2.bf16.msra.mxu0 0
    %2510 = vmatprep.subr.bf16.mxu0 0
    %2511 = vmatpush2.bf16.msra.mxu0 0
    %2512 = vmatprep.subr.bf16.mxu0 0
    %2513 = vmatpush2.bf16.msra.mxu0 0
    %2514 = vmatprep.subr.bf16.mxu0 0
    %2515 = vmatpush2.bf16.msra.mxu0 0
    %2516 = vmatprep.subr.bf16.mxu0 0
    %2517 = vmatpush2.bf16.msra.mxu0 0
    %2518 = vmatprep.subr.bf16.mxu0 0
    %2519 = vmatpush2.bf16.msra.mxu0 0
    %2520 = vmatprep.mubr.bf16.mxu0 0
    %2521 = vmatmul.mubr.bf16.gmra.mxu0 %v2483
    %v2522 = vpop.f32.mrf.mxu0
    %v2523 = vadd.f32 0.0, %v2522
    %v2524 = vpop.f32.mrf.mxu0
    %v2525 = vpop.f32.mrf.mxu0
    %v2526 = vadd.f32 0.0, %v2525
    %v2527 = vpop.f32.mrf.mxu0
    %2528 = vmatprep.mubr.bf16.mxu0 0
    %2529 = vmatmul.mubr.bf16.gmra.mxu0 %v2486
    %v2530 = vpop.f32.mrf.mxu0
    %v2531 = vadd.f32 0.0, %v2530
    %v2532 = vpop.f32.mrf.mxu0
    %v2533 = vpop.f32.mrf.mxu0
    %v2534 = vadd.f32 0.0, %v2533
    %v2535 = vpop.f32.mrf.mxu0
    %2536 = vdwg.mxu0
    %v2537 = vadd.f32 %v2470, %v2523
    %v2538 = vadd.f32 %v2471, %v2526
    %v2539 = vadd.f32 %v2472, %v2531
    %v2540 = vadd.f32 %v2473, %v2534
    %v2541 = vxor.u32 %v2537, 2147483648
    %v2542 = vxor.u32 %v2538, 2147483648
    %v2543 = vxor.u32 %v2539, 2147483648
    %v2544 = vxor.u32 %v2540, 2147483648
    %v2545 = vmul.f32 %v2541, 1.442695
    %v2546 = vpow.pop %v2545
    %v2547 = vmul.f32 %v2542, 1.442695
    %v2548 = vpow.pop %v2547
    %v2549 = vmul.f32 %v2543, 1.442695
    %v2550 = vpow.pop %v2549
    %v2551 = vmul.f32 %v2544, 1.442695
    %v2552 = vpow.pop %v2551
    %v2553 = vadd.f32 %v2546, 1.0
    %v2554 = vadd.f32 %v2548, 1.0
    %v2555 = vadd.f32 %v2550, 1.0
    %v2556 = vadd.f32 %v2552, 1.0
    %v2557 = vrcp.pop %v2553
    %v2558 = vmul.f32 1.0, %v2557
    %v2559 = vrcp.pop %v2554
    %v2560 = vmul.f32 1.0, %v2559
    %v2561 = vrcp.pop %v2555
    %v2562 = vmul.f32 1.0, %v2561
    %v2563 = vrcp.pop %v2556
    %v2564 = vmul.f32 1.0, %v2563
    %v2565 = vtanh.pop %v2537
    %v2566 = vtanh.pop %v2538
    %v2567 = vtanh.pop %v2539
    %v2568 = vtanh.pop %v2540
    %v2569 = vmul.f32 %v2558, %v2122
    %v2570 = vmul.f32 %v2560, %v2123
    %v2571 = vmul.f32 %v2562, %v2124
    %v2572 = vmul.f32 %v2564, %v2125
    %2577 = vrot.lane.b32.xlu0 %v2565, 64
    %v2578 = vpop.permute.xlu0 %2577
    %2579 = vrot.lane.b32.xlu0 %v2566, 64
    %v2580 = vpop.permute.xlu0 %2579
    %2581 = vrot.lane.b32.xlu0 %v2567, 64
    %v2582 = vpop.permute.xlu0 %2581
    %2583 = vrot.lane.b32.xlu0 %v2568, 64
    %v2584 = vpop.permute.xlu0 %2583
    %v2589 = vmul.f32 %v2558, %v2578
    %v2590 = vmul.f32 %v2560, %v2580
    %v2591 = vmul.f32 %v2562, %v2582
    %v2592 = vmul.f32 %v2564, %v2584
    %2597 = vrot.lane.b32.xlu0 %v2589, 32
    %v2598 = vpop.permute.xlu0 %2597
    %2599 = vrot.lane.b32.xlu0 %v2590, 32
    %v2600 = vpop.permute.xlu0 %2599
    %2601 = vrot.lane.b32.xlu0 %v2591, 32
    %v2602 = vpop.permute.xlu0 %2601
    %2603 = vrot.lane.b32.xlu0 %v2592, 32
    %v2604 = vpop.permute.xlu0 %2603
    %v2609 = vadd.f32 %v2569, %v2598
    %v2610 = vadd.f32 %v2570, %v2600
    %v2611 = vadd.f32 %v2571, %v2602
    %v2612 = vadd.f32 %v2572, %v2604
    %v2613 = vtanh.pop %v2609
    %v2614 = vtanh.pop %v2610
    %v2615 = vtanh.pop %v2611
    %v2616 = vtanh.pop %v2612
    %2621 = vrot.lane.b32.xlu0 %v2613, 64
    %v2622 = vpop.permute.xlu0 %2621
    %2623 = vrot.lane.b32.xlu0 %v2614, 64
    %v2624 = vpop.permute.xlu0 %2623
    %2625 = vrot.lane.b32.xlu0 %v2615, 64
    %v2626 = vpop.permute.xlu0 %2625
    %2627 = vrot.lane.b32.xlu0 %v2616, 64
    %v2628 = vpop.permute.xlu0 %2627
    %v2633 = vmul.f32 %v2558, %v2622
    %v2634 = vmul.f32 %v2560, %v2624
    %v2635 = vmul.f32 %v2562, %v2626
    %v2636 = vmul.f32 %v2564, %v2628
    %2637 = vmatprep.subr.bf16.mxu0 0
    %2638 = vmatpush1.bf16.msra.mxu0 0
    %2639 = vmatprep.subr.bf16.mxu0 0
    %2640 = vmatpush1.bf16.msra.mxu0 0
    %2641 = vmatprep.subr.bf16.mxu0 0
    %2642 = vmatpush1.bf16.msra.mxu0 0
    %2643 = vmatprep.subr.bf16.mxu0 0
    %2644 = vmatpush1.bf16.msra.mxu0 0
    %2645 = vmatprep.subr.bf16.mxu0 0
    %2646 = vmatpush1.bf16.msra.mxu0 0
    %2647 = vmatprep.subr.bf16.mxu0 0
    %2648 = vmatpush1.bf16.msra.mxu0 0
    %2649 = vmatprep.subr.bf16.mxu0 0
    %2650 = vmatpush1.bf16.msra.mxu0 %v574
    %2651 = vmatprep.subr.bf16.mxu0 0
    %2652 = vmatpush1.bf16.msra.mxu0 %v573
    %2653 = vmatprep.subr.bf16.mxu0 0
    %2654 = vmatpush2.bf16.msra.mxu0 0
    %2655 = vmatprep.subr.bf16.mxu0 0
    %2656 = vmatpush2.bf16.msra.mxu0 0
    %2657 = vmatprep.subr.bf16.mxu0 0
    %2658 = vmatpush2.bf16.msra.mxu0 0
    %2659 = vmatprep.subr.bf16.mxu0 0
    %2660 = vmatpush2.bf16.msra.mxu0 0
    %2661 = vmatprep.subr.bf16.mxu0 0
    %2662 = vmatpush2.bf16.msra.mxu0 0
    %2663 = vmatprep.subr.bf16.mxu0 0
    %2664 = vmatpush2.bf16.msra.mxu0 0
    %2665 = vmatprep.subr.bf16.mxu0 0
    %2666 = vmatpush2.bf16.msra.mxu0 0
    %2667 = vmatprep.subr.bf16.mxu0 0
    %2668 = vmatpush2.bf16.msra.mxu0 0
    %2669 = vmatprep.mubr.bf16.mxu0 0
    %2670 = vmatmul.mubr.bf16.gmra.mxu0 %v2357
    %v2671 = vpop.f32.mrf.mxu0
    %v2672 = vadd.f32 0.0, %v2671
    %v2673 = vpop.f32.mrf.mxu0
    %v2674 = vpop.f32.mrf.mxu0
    %v2675 = vadd.f32 0.0, %v2674
    %v2676 = vpop.f32.mrf.mxu0
    %2677 = vmatprep.mubr.bf16.mxu0 0
    %2678 = vmatmul.mubr.bf16.gmra.mxu0 %v2360
    %v2679 = vpop.f32.mrf.mxu0
    %v2680 = vadd.f32 0.0, %v2679
    %v2681 = vpop.f32.mrf.mxu0
    %v2682 = vpop.f32.mrf.mxu0
    %v2683 = vadd.f32 0.0, %v2682
    %v2684 = vpop.f32.mrf.mxu0
    %2685 = vdwg.mxu0
    %2686 = vmatprep.subr.bf16.mxu0 0
    %2687 = vmatpush1.bf16.msra.mxu0 0
    %2688 = vmatprep.subr.bf16.mxu0 0
    %2689 = vmatpush1.bf16.msra.mxu0 0
    %2690 = vmatprep.subr.bf16.mxu0 0
    %2691 = vmatpush1.bf16.msra.mxu0 0
    %2692 = vmatprep.subr.bf16.mxu0 0
    %2693 = vmatpush1.bf16.msra.mxu0 0
    %2694 = vmatprep.subr.bf16.mxu0 0
    %2695 = vmatpush1.bf16.msra.mxu0 0
    %2696 = vmatprep.subr.bf16.mxu0 0
    %2697 = vmatpush1.bf16.msra.mxu0 0
    %2698 = vmatprep.subr.bf16.mxu0 0
    %2699 = vmatpush1.bf16.msra.mxu0 %v641
    %2700 = vmatprep.subr.bf16.mxu0 0
    %2701 = vmatpush1.bf16.msra.mxu0 %v640
    %2702 = vmatprep.subr.bf16.mxu0 0
    %2703 = vmatpush2.bf16.msra.mxu0 0
    %2704 = vmatprep.subr.bf16.mxu0 0
    %2705 = vmatpush2.bf16.msra.mxu0 0
    %2706 = vmatprep.subr.bf16.mxu0 0
    %2707 = vmatpush2.bf16.msra.mxu0 0
    %2708 = vmatprep.subr.bf16.mxu0 0
    %2709 = vmatpush2.bf16.msra.mxu0 0
    %2710 = vmatprep.subr.bf16.mxu0 0
    %2711 = vmatpush2.bf16.msra.mxu0 0
    %2712 = vmatprep.subr.bf16.mxu0 0
    %2713 = vmatpush2.bf16.msra.mxu0 0
    %2714 = vmatprep.subr.bf16.mxu0 0
    %2715 = vmatpush2.bf16.msra.mxu0 0
    %2716 = vmatprep.subr.bf16.mxu0 0
    %2717 = vmatpush2.bf16.msra.mxu0 0
    %2718 = vmatprep.mubr.bf16.mxu0 0
    %2719 = vmatmul.mubr.bf16.gmra.mxu0 %v2483
    %v2720 = vpop.f32.mrf.mxu0
    %v2721 = vadd.f32 %v2672, %v2720
    %v2722 = vpop.f32.mrf.mxu0
    %v2723 = vpop.f32.mrf.mxu0
    %v2724 = vadd.f32 %v2675, %v2723
    %v2725 = vpop.f32.mrf.mxu0
    %2726 = vmatprep.mubr.bf16.mxu0 0
    %2727 = vmatmul.mubr.bf16.gmra.mxu0 %v2486
    %v2728 = vpop.f32.mrf.mxu0
    %v2729 = vadd.f32 %v2680, %v2728
    %v2730 = vpop.f32.mrf.mxu0
    %v2731 = vpop.f32.mrf.mxu0
    %v2732 = vadd.f32 %v2683, %v2731
    %v2733 = vpop.f32.mrf.mxu0
    %2734 = vdwg.mxu0
    %v2735 = vadd.f32 %v2721, %v697
    %v2736 = vadd.f32 %v2724, %v697
    %v2737 = vadd.f32 %v2729, %v697
    %v2738 = vadd.f32 %v2732, %v697
    %v2739 = vxor.u32 %v2735, 2147483648
    %v2740 = vxor.u32 %v2736, 2147483648
    %v2741 = vxor.u32 %v2737, 2147483648
    %v2742 = vxor.u32 %v2738, 2147483648
    %v2743 = vmul.f32 %v2739, 1.442695
    %v2744 = vpow.pop %v2743
    %v2745 = vmul.f32 %v2740, 1.442695
    %v2746 = vpow.pop %v2745
    %v2747 = vmul.f32 %v2741, 1.442695
    %v2748 = vpow.pop %v2747
    %v2749 = vmul.f32 %v2742, 1.442695
    %v2750 = vpow.pop %v2749
    %v2751 = vadd.f32 %v2744, 1.0
    %v2752 = vadd.f32 %v2746, 1.0
    %v2753 = vadd.f32 %v2748, 1.0
    %v2754 = vadd.f32 %v2750, 1.0
    %v2755 = vrcp.pop %v2751
    %v2756 = vmul.f32 1.0, %v2755
    %v2757 = vrcp.pop %v2752
    %v2758 = vmul.f32 1.0, %v2757
    %v2759 = vrcp.pop %v2753
    %v2760 = vmul.f32 1.0, %v2759
    %v2761 = vrcp.pop %v2754
    %v2762 = vmul.f32 1.0, %v2761
    %v2763 = vtanh.pop %v2735
    %v2764 = vtanh.pop %v2736
    %v2765 = vtanh.pop %v2737
    %v2766 = vtanh.pop %v2738
    %v2767 = vmul.f32 %v2756, %v2320
    %v2768 = vmul.f32 %v2758, %v2321
    %v2769 = vmul.f32 %v2760, %v2322
    %v2770 = vmul.f32 %v2762, %v2323
    %2775 = vrot.lane.b32.xlu0 %v2763, 64
    %v2776 = vpop.permute.xlu0 %2775
    %2777 = vrot.lane.b32.xlu0 %v2764, 64
    %v2778 = vpop.permute.xlu0 %2777
    %2779 = vrot.lane.b32.xlu0 %v2765, 64
    %v2780 = vpop.permute.xlu0 %2779
    %2781 = vrot.lane.b32.xlu0 %v2766, 64
    %v2782 = vpop.permute.xlu0 %2781
    %v2787 = vmul.f32 %v2756, %v2776
    %v2788 = vmul.f32 %v2758, %v2778
    %v2789 = vmul.f32 %v2760, %v2780
    %v2790 = vmul.f32 %v2762, %v2782
    %2795 = vrot.lane.b32.xlu0 %v2787, 32
    %v2796 = vpop.permute.xlu0 %2795
    %2797 = vrot.lane.b32.xlu0 %v2788, 32
    %v2798 = vpop.permute.xlu0 %2797
    %2799 = vrot.lane.b32.xlu0 %v2789, 32
    %v2800 = vpop.permute.xlu0 %2799
    %2801 = vrot.lane.b32.xlu0 %v2790, 32
    %v2802 = vpop.permute.xlu0 %2801
    %v2807 = vadd.f32 %v2767, %v2796
    %v2808 = vadd.f32 %v2768, %v2798
    %v2809 = vadd.f32 %v2769, %v2800
    %v2810 = vadd.f32 %v2770, %v2802
    %v2811 = vtanh.pop %v2807
    %v2812 = vtanh.pop %v2808
    %v2813 = vtanh.pop %v2809
    %v2814 = vtanh.pop %v2810
    %2819 = vrot.lane.b32.xlu0 %v2811, 64
    %v2820 = vpop.permute.xlu0 %2819
    %2821 = vrot.lane.b32.xlu0 %v2812, 64
    %v2822 = vpop.permute.xlu0 %2821
    %2823 = vrot.lane.b32.xlu0 %v2813, 64
    %v2824 = vpop.permute.xlu0 %2823
    %2825 = vrot.lane.b32.xlu0 %v2814, 64
    %v2826 = vpop.permute.xlu0 %2825
    %v2831 = vmul.f32 %v2756, %v2820
    %v2832 = vmul.f32 %v2758, %v2822
    %v2833 = vmul.f32 %v2760, %v2824
    %v2834 = vmul.f32 %v2762, %v2826
    %v2835 = vpack.c.bf16 %v2832, %v2831
    %v2836 = vpack.c.bf16 %v2834, %v2833
    %2839 = vrot.lane.b32.xlu0 %v2835, 32
    %v2840 = vpop.permute.xlu0 %2839
    %2841 = vrot.lane.b32.xlu0 %v2836, 32
    %v2842 = vpop.permute.xlu0 %2841
    %v2844 = vsel %vm224, %v2840, 0
    %v2847 = vsel %vm224, %v2842, 0
    %2849 = vmatprep.subr.bf16.mxu0 0
    %2850 = vmatpush1.bf16.msra.mxu0 0
    %2851 = vmatprep.subr.bf16.mxu0 0
    %2852 = vmatpush1.bf16.msra.mxu0 0
    %2853 = vmatprep.subr.bf16.mxu0 0
    %2854 = vmatpush1.bf16.msra.mxu0 0
    %2855 = vmatprep.subr.bf16.mxu0 0
    %2856 = vmatpush1.bf16.msra.mxu0 0
    %2857 = vmatprep.subr.bf16.mxu0 0
    %2858 = vmatpush1.bf16.msra.mxu0 0
    %2859 = vmatprep.subr.bf16.mxu0 0
    %2860 = vmatpush1.bf16.msra.mxu0 0
    %2861 = vmatprep.subr.bf16.mxu0 0
    %2862 = vmatpush1.bf16.msra.mxu0 %v838
    %2863 = vmatprep.subr.bf16.mxu0 0
    %2864 = vmatpush1.bf16.msra.mxu0 %v837
    %2865 = vmatprep.subr.bf16.mxu0 0
    %2866 = vmatpush2.bf16.msra.mxu0 0
    %2867 = vmatprep.subr.bf16.mxu0 0
    %2868 = vmatpush2.bf16.msra.mxu0 0
    %2869 = vmatprep.subr.bf16.mxu0 0
    %2870 = vmatpush2.bf16.msra.mxu0 0
    %2871 = vmatprep.subr.bf16.mxu0 0
    %2872 = vmatpush2.bf16.msra.mxu0 0
    %2873 = vmatprep.subr.bf16.mxu0 0
    %2874 = vmatpush2.bf16.msra.mxu0 0
    %2875 = vmatprep.subr.bf16.mxu0 0
    %2876 = vmatpush2.bf16.msra.mxu0 0
    %2877 = vmatprep.subr.bf16.mxu0 0
    %2878 = vmatpush2.bf16.msra.mxu0 0
    %2879 = vmatprep.subr.bf16.mxu0 0
    %2880 = vmatpush2.bf16.msra.mxu0 0
    %2881 = vmatprep.mubr.bf16.mxu0 0
    %2882 = vmatmul.mubr.bf16.gmra.mxu0 %v2844
    %v2883 = vpop.f32.mrf.mxu0
    %v2884 = vadd.f32 %v821, %v2883
    %v2885 = vpop.f32.mrf.mxu0
    %v2886 = vpop.f32.mrf.mxu0
    %v2887 = vadd.f32 %v821, %v2886
    %v2888 = vpop.f32.mrf.mxu0
    %2889 = vmatprep.mubr.bf16.mxu0 0
    %2890 = vmatmul.mubr.bf16.gmra.mxu0 %v2847
    %v2891 = vpop.f32.mrf.mxu0
    %v2892 = vadd.f32 %v821, %v2891
    %v2893 = vpop.f32.mrf.mxu0
    %v2894 = vpop.f32.mrf.mxu0
    %v2895 = vadd.f32 %v821, %v2894
    %v2896 = vpop.f32.mrf.mxu0
    %2897 = vdwg.mxu0
    %v2898 = vmax.f32 %v2884, 0.0
    %v2899 = vmax.f32 %v2887, 0.0
    %v2900 = vmax.f32 %v2892, 0.0
    %v2901 = vmax.f32 %v2895, 0.0
    %v2902 = vpack.c.bf16 %v2899, %v2898
    %v2903 = vpack.c.bf16 %v2901, %v2900
    %2904 = vmatprep.subr.bf16.mxu0 0
    %2905 = vmatpush1.bf16.msra.mxu0 %v947
    %2906 = vmatprep.subr.bf16.mxu0 0
    %2907 = vmatpush1.bf16.msra.mxu0 %v946
    %2908 = vmatprep.subr.bf16.mxu0 0
    %2909 = vmatpush1.bf16.msra.mxu0 %v945
    %2910 = vmatprep.subr.bf16.mxu0 0
    %2911 = vmatpush1.bf16.msra.mxu0 %v944
    %2912 = vmatprep.subr.bf16.mxu0 0
    %2913 = vmatpush1.bf16.msra.mxu0 %v943
    %2914 = vmatprep.subr.bf16.mxu0 0
    %2915 = vmatpush1.bf16.msra.mxu0 %v942
    %2916 = vmatprep.subr.bf16.mxu0 0
    %2917 = vmatpush1.bf16.msra.mxu0 %v941
    %2918 = vmatprep.subr.bf16.mxu0 0
    %2919 = vmatpush1.bf16.msra.mxu0 %v940
    %2920 = vmatprep.subr.bf16.mxu0 0
    %2921 = vmatpush2.bf16.msra.mxu0 0
    %2922 = vmatprep.subr.bf16.mxu0 0
    %2923 = vmatpush2.bf16.msra.mxu0 0
    %2924 = vmatprep.subr.bf16.mxu0 0
    %2925 = vmatpush2.bf16.msra.mxu0 0
    %2926 = vmatprep.subr.bf16.mxu0 0
    %2927 = vmatpush2.bf16.msra.mxu0 0
    %2928 = vmatprep.subr.bf16.mxu0 0
    %2929 = vmatpush2.bf16.msra.mxu0 0
    %2930 = vmatprep.subr.bf16.mxu0 0
    %2931 = vmatpush2.bf16.msra.mxu0 0
    %2932 = vmatprep.subr.bf16.mxu0 0
    %2933 = vmatpush2.bf16.msra.mxu0 0
    %2934 = vmatprep.subr.bf16.mxu0 0
    %2935 = vmatpush2.bf16.msra.mxu0 0
    %2936 = vmatprep.mubr.bf16.mxu0 0
    %2937 = vmatmul.mubr.bf16.gmra.mxu0 %v2902
    %v2938 = vpop.f32.mrf.mxu0
    %v2939 = vadd.f32 %v906, %v2938
    %v2940 = vpop.f32.mrf.mxu0
    %v2941 = vpop.f32.mrf.mxu0
    %v2942 = vadd.f32 %v906, %v2941
    %v2943 = vpop.f32.mrf.mxu0
    %2944 = vmatprep.mubr.bf16.mxu0 0
    %2945 = vmatmul.mubr.bf16.gmra.mxu0 %v2903
    %v2946 = vpop.f32.mrf.mxu0
    %v2947 = vadd.f32 %v906, %v2946
    %v2948 = vpop.f32.mrf.mxu0
    %v2949 = vpop.f32.mrf.mxu0
    %v2950 = vadd.f32 %v906, %v2949
    %v2951 = vpop.f32.mrf.mxu0
    %2952 = vdwg.mxu0
    %2953 = vst [vmem:[#allocation16 + $0x80] sm:$0xff] %v2939
    %2954 = vst [vmem:[#allocation16 + $0x88] sm:$0xff] %v2942
    %2955 = vst [vmem:[#allocation16 + $0x90] sm:$0xff] %v2947
    %2956 = vst [vmem:[#allocation16 + $0x98] sm:$0xff] %v2950
    %v2957 = vld [vmem:[#allocation2 + $0xc0] sm:$0xff]
    %v2958 = vld [vmem:[#allocation2 + $0xc8] sm:$0xff]
    %v2959 = vld [vmem:[#allocation2 + $0xd0] sm:$0xff]
    %v2960 = vld [vmem:[#allocation2 + $0xd8] sm:$0xff]
    %v2961 = vpack.c.bf16 %v2634, %v2633
    %v2962 = vpack.c.bf16 %v2636, %v2635
    %2965 = vrot.lane.b32.xlu0 %v2961, 32
    %v2966 = vpop.permute.xlu0 %2965
    %2967 = vrot.lane.b32.xlu0 %v2962, 32
    %v2968 = vpop.permute.xlu0 %2967
    %v2970 = vsel %vm224, %v2966, 0
    %v2973 = vsel %vm224, %v2968, 0
    %2975 = vmatprep.subr.bf16.mxu0 0
    %2976 = vmatpush1.bf16.msra.mxu0 0
    %2977 = vmatprep.subr.bf16.mxu0 0
    %2978 = vmatpush1.bf16.msra.mxu0 0
    %2979 = vmatprep.subr.bf16.mxu0 0
    %2980 = vmatpush1.bf16.msra.mxu0 0
    %2981 = vmatprep.subr.bf16.mxu0 0
    %2982 = vmatpush1.bf16.msra.mxu0 0
    %2983 = vmatprep.subr.bf16.mxu0 0
    %2984 = vmatpush1.bf16.msra.mxu0 0
    %2985 = vmatprep.subr.bf16.mxu0 0
    %2986 = vmatpush1.bf16.msra.mxu0 0
    %2987 = vmatprep.subr.bf16.mxu0 0
    %2988 = vmatpush1.bf16.msra.mxu0 %v221
    %2989 = vmatprep.subr.bf16.mxu0 0
    %2990 = vmatpush1.bf16.msra.mxu0 %v220
    %2991 = vmatprep.subr.bf16.mxu0 0
    %2992 = vmatpush2.bf16.msra.mxu0 0
    %2993 = vmatprep.subr.bf16.mxu0 0
    %2994 = vmatpush2.bf16.msra.mxu0 0
    %2995 = vmatprep.subr.bf16.mxu0 0
    %2996 = vmatpush2.bf16.msra.mxu0 0
    %2997 = vmatprep.subr.bf16.mxu0 0
    %2998 = vmatpush2.bf16.msra.mxu0 0
    %2999 = vmatprep.subr.bf16.mxu0 0
    %3000 = vmatpush2.bf16.msra.mxu0 0
    %3001 = vmatprep.subr.bf16.mxu0 0
    %3002 = vmatpush2.bf16.msra.mxu0 0
    %3003 = vmatprep.subr.bf16.mxu0 0
    %3004 = vmatpush2.bf16.msra.mxu0 0
    %3005 = vmatprep.subr.bf16.mxu0 0
    %3006 = vmatpush2.bf16.msra.mxu0 0
    %3007 = vmatprep.mubr.bf16.mxu0 0
    %3008 = vmatmul.mubr.bf16.gmra.mxu0 %v2970
    %v3009 = vpop.f32.mrf.mxu0
    %v3010 = vadd.f32 0.0, %v3009
    %v3011 = vpop.f32.mrf.mxu0
    %v3012 = vpop.f32.mrf.mxu0
    %v3013 = vadd.f32 0.0, %v3012
    %v3014 = vpop.f32.mrf.mxu0
    %3015 = vmatprep.mubr.bf16.mxu0 0
    %3016 = vmatmul.mubr.bf16.gmra.mxu0 %v2973
    %v3017 = vpop.f32.mrf.mxu0
    %v3018 = vadd.f32 0.0, %v3017
    %v3019 = vpop.f32.mrf.mxu0
    %v3020 = vpop.f32.mrf.mxu0
    %v3021 = vadd.f32 0.0, %v3020
    %v3022 = vpop.f32.mrf.mxu0
    %3023 = vdwg.mxu0
    %v3024 = vadd.f32 %v2957, %v3010
    %v3025 = vadd.f32 %v2958, %v3013
    %v3026 = vadd.f32 %v2959, %v3018
    %v3027 = vadd.f32 %v2960, %v3021
    %v3028 = vxor.u32 %v3024, 2147483648
    %v3029 = vxor.u32 %v3025, 2147483648
    %v3030 = vxor.u32 %v3026, 2147483648
    %v3031 = vxor.u32 %v3027, 2147483648
    %v3032 = vmul.f32 %v3028, 1.442695
    %v3033 = vpow.pop %v3032
    %v3034 = vmul.f32 %v3029, 1.442695
    %v3035 = vpow.pop %v3034
    %v3036 = vmul.f32 %v3030, 1.442695
    %v3037 = vpow.pop %v3036
    %v3038 = vmul.f32 %v3031, 1.442695
    %v3039 = vpow.pop %v3038
    %v3040 = vadd.f32 %v3033, 1.0
    %v3041 = vadd.f32 %v3035, 1.0
    %v3042 = vadd.f32 %v3037, 1.0
    %v3043 = vadd.f32 %v3039, 1.0
    %v3044 = vrcp.pop %v3040
    %v3045 = vmul.f32 1.0, %v3044
    %v3046 = vrcp.pop %v3041
    %v3047 = vmul.f32 1.0, %v3046
    %v3048 = vrcp.pop %v3042
    %v3049 = vmul.f32 1.0, %v3048
    %v3050 = vrcp.pop %v3043
    %v3051 = vmul.f32 1.0, %v3050
    %v3052 = vtanh.pop %v3024
    %v3053 = vtanh.pop %v3025
    %v3054 = vtanh.pop %v3026
    %v3055 = vtanh.pop %v3027
    %v3056 = vmul.f32 %v3045, %v2609
    %v3057 = vmul.f32 %v3047, %v2610
    %v3058 = vmul.f32 %v3049, %v2611
    %v3059 = vmul.f32 %v3051, %v2612
    %3064 = vrot.lane.b32.xlu0 %v3052, 64
    %v3065 = vpop.permute.xlu0 %3064
    %3066 = vrot.lane.b32.xlu0 %v3053, 64
    %v3067 = vpop.permute.xlu0 %3066
    %3068 = vrot.lane.b32.xlu0 %v3054, 64
    %v3069 = vpop.permute.xlu0 %3068
    %3070 = vrot.lane.b32.xlu0 %v3055, 64
    %v3071 = vpop.permute.xlu0 %3070
    %v3076 = vmul.f32 %v3045, %v3065
    %v3077 = vmul.f32 %v3047, %v3067
    %v3078 = vmul.f32 %v3049, %v3069
    %v3079 = vmul.f32 %v3051, %v3071
    %3084 = vrot.lane.b32.xlu0 %v3076, 32
    %v3085 = vpop.permute.xlu0 %3084
    %3086 = vrot.lane.b32.xlu0 %v3077, 32
    %v3087 = vpop.permute.xlu0 %3086
    %3088 = vrot.lane.b32.xlu0 %v3078, 32
    %v3089 = vpop.permute.xlu0 %3088
    %3090 = vrot.lane.b32.xlu0 %v3079, 32
    %v3091 = vpop.permute.xlu0 %3090
    %v3096 = vadd.f32 %v3056, %v3085
    %v3097 = vadd.f32 %v3057, %v3087
    %v3098 = vadd.f32 %v3058, %v3089
    %v3099 = vadd.f32 %v3059, %v3091
    %v3100 = vtanh.pop %v3096
    %v3101 = vtanh.pop %v3097
    %v3102 = vtanh.pop %v3098
    %v3103 = vtanh.pop %v3099
    %3108 = vrot.lane.b32.xlu0 %v3100, 64
    %v3109 = vpop.permute.xlu0 %3108
    %3110 = vrot.lane.b32.xlu0 %v3101, 64
    %v3111 = vpop.permute.xlu0 %3110
    %3112 = vrot.lane.b32.xlu0 %v3102, 64
    %v3113 = vpop.permute.xlu0 %3112
    %3114 = vrot.lane.b32.xlu0 %v3103, 64
    %v3115 = vpop.permute.xlu0 %3114
    %v3120 = vmul.f32 %v3045, %v3109
    %v3121 = vmul.f32 %v3047, %v3111
    %v3122 = vmul.f32 %v3049, %v3113
    %v3123 = vmul.f32 %v3051, %v3115
    %3124 = vmatprep.subr.bf16.mxu0 0
    %3125 = vmatpush1.bf16.msra.mxu0 0
    %3126 = vmatprep.subr.bf16.mxu0 0
    %3127 = vmatpush1.bf16.msra.mxu0 0
    %3128 = vmatprep.subr.bf16.mxu0 0
    %3129 = vmatpush1.bf16.msra.mxu0 0
    %3130 = vmatprep.subr.bf16.mxu0 0
    %3131 = vmatpush1.bf16.msra.mxu0 0
    %3132 = vmatprep.subr.bf16.mxu0 0
    %3133 = vmatpush1.bf16.msra.mxu0 0
    %3134 = vmatprep.subr.bf16.mxu0 0
    %3135 = vmatpush1.bf16.msra.mxu0 0
    %3136 = vmatprep.subr.bf16.mxu0 0
    %3137 = vmatpush1.bf16.msra.mxu0 %v574
    %3138 = vmatprep.subr.bf16.mxu0 0
    %3139 = vmatpush1.bf16.msra.mxu0 %v573
    %3140 = vmatprep.subr.bf16.mxu0 0
    %3141 = vmatpush2.bf16.msra.mxu0 0
    %3142 = vmatprep.subr.bf16.mxu0 0
    %3143 = vmatpush2.bf16.msra.mxu0 0
    %3144 = vmatprep.subr.bf16.mxu0 0
    %3145 = vmatpush2.bf16.msra.mxu0 0
    %3146 = vmatprep.subr.bf16.mxu0 0
    %3147 = vmatpush2.bf16.msra.mxu0 0
    %3148 = vmatprep.subr.bf16.mxu0 0
    %3149 = vmatpush2.bf16.msra.mxu0 0
    %3150 = vmatprep.subr.bf16.mxu0 0
    %3151 = vmatpush2.bf16.msra.mxu0 0
    %3152 = vmatprep.subr.bf16.mxu0 0
    %3153 = vmatpush2.bf16.msra.mxu0 0
    %3154 = vmatprep.subr.bf16.mxu0 0
    %3155 = vmatpush2.bf16.msra.mxu0 0
    %3156 = vmatprep.mubr.bf16.mxu0 0
    %3157 = vmatmul.mubr.bf16.gmra.mxu0 %v2844
    %v3158 = vpop.f32.mrf.mxu0
    %v3159 = vadd.f32 0.0, %v3158
    %v3160 = vpop.f32.mrf.mxu0
    %v3161 = vpop.f32.mrf.mxu0
    %v3162 = vadd.f32 0.0, %v3161
    %v3163 = vpop.f32.mrf.mxu0
    %3164 = vmatprep.mubr.bf16.mxu0 0
    %3165 = vmatmul.mubr.bf16.gmra.mxu0 %v2847
    %v3166 = vpop.f32.mrf.mxu0
    %v3167 = vadd.f32 0.0, %v3166
    %v3168 = vpop.f32.mrf.mxu0
    %v3169 = vpop.f32.mrf.mxu0
    %v3170 = vadd.f32 0.0, %v3169
    %v3171 = vpop.f32.mrf.mxu0
    %3172 = vdwg.mxu0
    %3173 = vmatprep.subr.bf16.mxu0 0
    %3174 = vmatpush1.bf16.msra.mxu0 0
    %3175 = vmatprep.subr.bf16.mxu0 0
    %3176 = vmatpush1.bf16.msra.mxu0 0
    %3177 = vmatprep.subr.bf16.mxu0 0
    %3178 = vmatpush1.bf16.msra.mxu0 0
    %3179 = vmatprep.subr.bf16.mxu0 0
    %3180 = vmatpush1.bf16.msra.mxu0 0
    %3181 = vmatprep.subr.bf16.mxu0 0
    %3182 = vmatpush1.bf16.msra.mxu0 0
    %3183 = vmatprep.subr.bf16.mxu0 0
    %3184 = vmatpush1.bf16.msra.mxu0 0
    %3185 = vmatprep.subr.bf16.mxu0 0
    %3186 = vmatpush1.bf16.msra.mxu0 %v641
    %3187 = vmatprep.subr.bf16.mxu0 0
    %3188 = vmatpush1.bf16.msra.mxu0 %v640
    %3189 = vmatprep.subr.bf16.mxu0 0
    %3190 = vmatpush2.bf16.msra.mxu0 0
    %3191 = vmatprep.subr.bf16.mxu0 0
    %3192 = vmatpush2.bf16.msra.mxu0 0
    %3193 = vmatprep.subr.bf16.mxu0 0
    %3194 = vmatpush2.bf16.msra.mxu0 0
    %3195 = vmatprep.subr.bf16.mxu0 0
    %3196 = vmatpush2.bf16.msra.mxu0 0
    %3197 = vmatprep.subr.bf16.mxu0 0
    %3198 = vmatpush2.bf16.msra.mxu0 0
    %3199 = vmatprep.subr.bf16.mxu0 0
    %3200 = vmatpush2.bf16.msra.mxu0 0
    %3201 = vmatprep.subr.bf16.mxu0 0
    %3202 = vmatpush2.bf16.msra.mxu0 0
    %3203 = vmatprep.subr.bf16.mxu0 0
    %3204 = vmatpush2.bf16.msra.mxu0 0
    %3205 = vmatprep.mubr.bf16.mxu0 0
    %3206 = vmatmul.mubr.bf16.gmra.mxu0 %v2970
    %v3207 = vpop.f32.mrf.mxu0
    %v3208 = vadd.f32 %v3159, %v3207
    %v3209 = vpop.f32.mrf.mxu0
    %v3210 = vpop.f32.mrf.mxu0
    %v3211 = vadd.f32 %v3162, %v3210
    %v3212 = vpop.f32.mrf.mxu0
    %3213 = vmatprep.mubr.bf16.mxu0 0
    %3214 = vmatmul.mubr.bf16.gmra.mxu0 %v2973
    %v3215 = vpop.f32.mrf.mxu0
    %v3216 = vadd.f32 %v3167, %v3215
    %v3217 = vpop.f32.mrf.mxu0
    %v3218 = vpop.f32.mrf.mxu0
    %v3219 = vadd.f32 %v3170, %v3218
    %v3220 = vpop.f32.mrf.mxu0
    %3221 = vdwg.mxu0
    %v3222 = vadd.f32 %v3208, %v697
    %v3223 = vadd.f32 %v3211, %v697
    %v3224 = vadd.f32 %v3216, %v697
    %v3225 = vadd.f32 %v3219, %v697
    %v3226 = vxor.u32 %v3222, 2147483648
    %v3227 = vxor.u32 %v3223, 2147483648
    %v3228 = vxor.u32 %v3224, 2147483648
    %v3229 = vxor.u32 %v3225, 2147483648
    %v3230 = vmul.f32 %v3226, 1.442695
    %v3231 = vpow.pop %v3230
    %v3232 = vmul.f32 %v3227, 1.442695
    %v3233 = vpow.pop %v3232
    %v3234 = vmul.f32 %v3228, 1.442695
    %v3235 = vpow.pop %v3234
    %v3236 = vmul.f32 %v3229, 1.442695
    %v3237 = vpow.pop %v3236
    %v3238 = vadd.f32 %v3231, 1.0
    %v3239 = vadd.f32 %v3233, 1.0
    %v3240 = vadd.f32 %v3235, 1.0
    %v3241 = vadd.f32 %v3237, 1.0
    %v3242 = vrcp.pop %v3238
    %v3243 = vmul.f32 1.0, %v3242
    %v3244 = vrcp.pop %v3239
    %v3245 = vmul.f32 1.0, %v3244
    %v3246 = vrcp.pop %v3240
    %v3247 = vmul.f32 1.0, %v3246
    %v3248 = vrcp.pop %v3241
    %v3249 = vmul.f32 1.0, %v3248
    %v3250 = vtanh.pop %v3222
    %v3251 = vtanh.pop %v3223
    %v3252 = vtanh.pop %v3224
    %v3253 = vtanh.pop %v3225
    %v3254 = vmul.f32 %v3243, %v2807
    %v3255 = vmul.f32 %v3245, %v2808
    %v3256 = vmul.f32 %v3247, %v2809
    %v3257 = vmul.f32 %v3249, %v2810
    %3262 = vrot.lane.b32.xlu0 %v3250, 64
    %v3263 = vpop.permute.xlu0 %3262
    %3264 = vrot.lane.b32.xlu0 %v3251, 64
    %v3265 = vpop.permute.xlu0 %3264
    %3266 = vrot.lane.b32.xlu0 %v3252, 64
    %v3267 = vpop.permute.xlu0 %3266
    %3268 = vrot.lane.b32.xlu0 %v3253, 64
    %v3269 = vpop.permute.xlu0 %3268
    %v3274 = vmul.f32 %v3243, %v3263
    %v3275 = vmul.f32 %v3245, %v3265
    %v3276 = vmul.f32 %v3247, %v3267
    %v3277 = vmul.f32 %v3249, %v3269
    %3282 = vrot.lane.b32.xlu0 %v3274, 32
    %v3283 = vpop.permute.xlu0 %3282
    %3284 = vrot.lane.b32.xlu0 %v3275, 32
    %v3285 = vpop.permute.xlu0 %3284
    %3286 = vrot.lane.b32.xlu0 %v3276, 32
    %v3287 = vpop.permute.xlu0 %3286
    %3288 = vrot.lane.b32.xlu0 %v3277, 32
    %v3289 = vpop.permute.xlu0 %3288
    %v3294 = vadd.f32 %v3254, %v3283
    %v3295 = vadd.f32 %v3255, %v3285
    %v3296 = vadd.f32 %v3256, %v3287
    %v3297 = vadd.f32 %v3257, %v3289
    %v3298 = vtanh.pop %v3294
    %v3299 = vtanh.pop %v3295
    %v3300 = vtanh.pop %v3296
    %v3301 = vtanh.pop %v3297
    %3306 = vrot.lane.b32.xlu0 %v3298, 64
    %v3307 = vpop.permute.xlu0 %3306
    %3308 = vrot.lane.b32.xlu0 %v3299, 64
    %v3309 = vpop.permute.xlu0 %3308
    %3310 = vrot.lane.b32.xlu0 %v3300, 64
    %v3311 = vpop.permute.xlu0 %3310
    %3312 = vrot.lane.b32.xlu0 %v3301, 64
    %v3313 = vpop.permute.xlu0 %3312
    %v3318 = vmul.f32 %v3243, %v3307
    %v3319 = vmul.f32 %v3245, %v3309
    %v3320 = vmul.f32 %v3247, %v3311
    %v3321 = vmul.f32 %v3249, %v3313
    %v3322 = vpack.c.bf16 %v3319, %v3318
    %v3323 = vpack.c.bf16 %v3321, %v3320
    %3326 = vrot.lane.b32.xlu0 %v3322, 32
    %v3327 = vpop.permute.xlu0 %3326
    %3328 = vrot.lane.b32.xlu0 %v3323, 32
    %v3329 = vpop.permute.xlu0 %3328
    %v3331 = vsel %vm224, %v3327, 0
    %v3334 = vsel %vm224, %v3329, 0
    %3336 = vmatprep.subr.bf16.mxu0 0
    %3337 = vmatpush1.bf16.msra.mxu0 0
    %3338 = vmatprep.subr.bf16.mxu0 0
    %3339 = vmatpush1.bf16.msra.mxu0 0
    %3340 = vmatprep.subr.bf16.mxu0 0
    %3341 = vmatpush1.bf16.msra.mxu0 0
    %3342 = vmatprep.subr.bf16.mxu0 0
    %3343 = vmatpush1.bf16.msra.mxu0 0
    %3344 = vmatprep.subr.bf16.mxu0 0
    %3345 = vmatpush1.bf16.msra.mxu0 0
    %3346 = vmatprep.subr.bf16.mxu0 0
    %3347 = vmatpush1.bf16.msra.mxu0 0
    %3348 = vmatprep.subr.bf16.mxu0 0
    %3349 = vmatpush1.bf16.msra.mxu0 %v838
    %3350 = vmatprep.subr.bf16.mxu0 0
    %3351 = vmatpush1.bf16.msra.mxu0 %v837
    %3352 = vmatprep.subr.bf16.mxu0 0
    %3353 = vmatpush2.bf16.msra.mxu0 0
    %3354 = vmatprep.subr.bf16.mxu0 0
    %3355 = vmatpush2.bf16.msra.mxu0 0
    %3356 = vmatprep.subr.bf16.mxu0 0
    %3357 = vmatpush2.bf16.msra.mxu0 0
    %3358 = vmatprep.subr.bf16.mxu0 0
    %3359 = vmatpush2.bf16.msra.mxu0 0
    %3360 = vmatprep.subr.bf16.mxu0 0
    %3361 = vmatpush2.bf16.msra.mxu0 0
    %3362 = vmatprep.subr.bf16.mxu0 0
    %3363 = vmatpush2.bf16.msra.mxu0 0
    %3364 = vmatprep.subr.bf16.mxu0 0
    %3365 = vmatpush2.bf16.msra.mxu0 0
    %3366 = vmatprep.subr.bf16.mxu0 0
    %3367 = vmatpush2.bf16.msra.mxu0 0
    %3368 = vmatprep.mubr.bf16.mxu0 0
    %3369 = vmatmul.mubr.bf16.gmra.mxu0 %v3331
    %v3370 = vpop.f32.mrf.mxu0
    %v3371 = vadd.f32 %v821, %v3370
    %v3372 = vpop.f32.mrf.mxu0
    %v3373 = vpop.f32.mrf.mxu0
    %v3374 = vadd.f32 %v821, %v3373
    %v3375 = vpop.f32.mrf.mxu0
    %3376 = vmatprep.mubr.bf16.mxu0 0
    %3377 = vmatmul.mubr.bf16.gmra.mxu0 %v3334
    %v3378 = vpop.f32.mrf.mxu0
    %v3379 = vadd.f32 %v821, %v3378
    %v3380 = vpop.f32.mrf.mxu0
    %v3381 = vpop.f32.mrf.mxu0
    %v3382 = vadd.f32 %v821, %v3381
    %v3383 = vpop.f32.mrf.mxu0
    %3384 = vdwg.mxu0
    %v3385 = vmax.f32 %v3371, 0.0
    %v3386 = vmax.f32 %v3374, 0.0
    %v3387 = vmax.f32 %v3379, 0.0
    %v3388 = vmax.f32 %v3382, 0.0
    %v3389 = vpack.c.bf16 %v3386, %v3385
    %v3390 = vpack.c.bf16 %v3388, %v3387
    %3391 = vmatprep.subr.bf16.mxu0 0
    %3392 = vmatpush1.bf16.msra.mxu0 %v947
    %3393 = vmatprep.subr.bf16.mxu0 0
    %3394 = vmatpush1.bf16.msra.mxu0 %v946
    %3395 = vmatprep.subr.bf16.mxu0 0
    %3396 = vmatpush1.bf16.msra.mxu0 %v945
    %3397 = vmatprep.subr.bf16.mxu0 0
    %3398 = vmatpush1.bf16.msra.mxu0 %v944
    %3399 = vmatprep.subr.bf16.mxu0 0
    %3400 = vmatpush1.bf16.msra.mxu0 %v943
    %3401 = vmatprep.subr.bf16.mxu0 0
    %3402 = vmatpush1.bf16.msra.mxu0 %v942
    %3403 = vmatprep.subr.bf16.mxu0 0
    %3404 = vmatpush1.bf16.msra.mxu0 %v941
    %3405 = vmatprep.subr.bf16.mxu0 0
    %3406 = vmatpush1.bf16.msra.mxu0 %v940
    %3407 = vmatprep.subr.bf16.mxu0 0
    %3408 = vmatpush2.bf16.msra.mxu0 0
    %3409 = vmatprep.subr.bf16.mxu0 0
    %3410 = vmatpush2.bf16.msra.mxu0 0
    %3411 = vmatprep.subr.bf16.mxu0 0
    %3412 = vmatpush2.bf16.msra.mxu0 0
    %3413 = vmatprep.subr.bf16.mxu0 0
    %3414 = vmatpush2.bf16.msra.mxu0 0
    %3415 = vmatprep.subr.bf16.mxu0 0
    %3416 = vmatpush2.bf16.msra.mxu0 0
    %3417 = vmatprep.subr.bf16.mxu0 0
    %3418 = vmatpush2.bf16.msra.mxu0 0
    %3419 = vmatprep.subr.bf16.mxu0 0
    %3420 = vmatpush2.bf16.msra.mxu0 0
    %3421 = vmatprep.subr.bf16.mxu0 0
    %3422 = vmatpush2.bf16.msra.mxu0 0
    %3423 = vmatprep.mubr.bf16.mxu0 0
    %3424 = vmatmul.mubr.bf16.gmra.mxu0 %v3389
    %v3425 = vpop.f32.mrf.mxu0
    %v3426 = vadd.f32 %v906, %v3425
    %v3427 = vpop.f32.mrf.mxu0
    %v3428 = vpop.f32.mrf.mxu0
    %v3429 = vadd.f32 %v906, %v3428
    %v3430 = vpop.f32.mrf.mxu0
    %3431 = vmatprep.mubr.bf16.mxu0 0
    %3432 = vmatmul.mubr.bf16.gmra.mxu0 %v3390
    %v3433 = vpop.f32.mrf.mxu0
    %v3434 = vadd.f32 %v906, %v3433
    %v3435 = vpop.f32.mrf.mxu0
    %v3436 = vpop.f32.mrf.mxu0
    %v3437 = vadd.f32 %v906, %v3436
    %v3438 = vpop.f32.mrf.mxu0
    %3439 = vdwg.mxu0
    %3440 = vst [vmem:[#allocation16 + $0xa0] sm:$0xff] %v3426
    %3441 = vst [vmem:[#allocation16 + $0xa8] sm:$0xff] %v3429
    %3442 = vst [vmem:[#allocation16 + $0xb0] sm:$0xff] %v3434
    %3443 = vst [vmem:[#allocation16 + $0xb8] sm:$0xff] %v3437
    %v3444 = vld [vmem:[#allocation2 + $0xe0] sm:$0xff]
    %v3445 = vld [vmem:[#allocation2 + $0xe8] sm:$0xff]
    %v3446 = vld [vmem:[#allocation2 + $0xf0] sm:$0xff]
    %v3447 = vld [vmem:[#allocation2 + $0xf8] sm:$0xff]
    %v3448 = vpack.c.bf16 %v3121, %v3120
    %v3449 = vpack.c.bf16 %v3123, %v3122
    %3452 = vrot.lane.b32.xlu0 %v3448, 32
    %v3453 = vpop.permute.xlu0 %3452
    %3454 = vrot.lane.b32.xlu0 %v3449, 32
    %v3455 = vpop.permute.xlu0 %3454
    %v3457 = vsel %vm224, %v3453, 0
    %v3460 = vsel %vm224, %v3455, 0
    %3462 = vmatprep.subr.bf16.mxu0 0
    %3463 = vmatpush1.bf16.msra.mxu0 0
    %3464 = vmatprep.subr.bf16.mxu0 0
    %3465 = vmatpush1.bf16.msra.mxu0 0
    %3466 = vmatprep.subr.bf16.mxu0 0
    %3467 = vmatpush1.bf16.msra.mxu0 0
    %3468 = vmatprep.subr.bf16.mxu0 0
    %3469 = vmatpush1.bf16.msra.mxu0 0
    %3470 = vmatprep.subr.bf16.mxu0 0
    %3471 = vmatpush1.bf16.msra.mxu0 0
    %3472 = vmatprep.subr.bf16.mxu0 0
    %3473 = vmatpush1.bf16.msra.mxu0 0
    %3474 = vmatprep.subr.bf16.mxu0 0
    %3475 = vmatpush1.bf16.msra.mxu0 %v221
    %3476 = vmatprep.subr.bf16.mxu0 0
    %3477 = vmatpush1.bf16.msra.mxu0 %v220
    %3478 = vmatprep.subr.bf16.mxu0 0
    %3479 = vmatpush2.bf16.msra.mxu0 0
    %3480 = vmatprep.subr.bf16.mxu0 0
    %3481 = vmatpush2.bf16.msra.mxu0 0
    %3482 = vmatprep.subr.bf16.mxu0 0
    %3483 = vmatpush2.bf16.msra.mxu0 0
    %3484 = vmatprep.subr.bf16.mxu0 0
    %3485 = vmatpush2.bf16.msra.mxu0 0
    %3486 = vmatprep.subr.bf16.mxu0 0
    %3487 = vmatpush2.bf16.msra.mxu0 0
    %3488 = vmatprep.subr.bf16.mxu0 0
    %3489 = vmatpush2.bf16.msra.mxu0 0
    %3490 = vmatprep.subr.bf16.mxu0 0
    %3491 = vmatpush2.bf16.msra.mxu0 0
    %3492 = vmatprep.subr.bf16.mxu0 0
    %3493 = vmatpush2.bf16.msra.mxu0 0
    %3494 = vmatprep.mubr.bf16.mxu0 0
    %3495 = vmatmul.mubr.bf16.gmra.mxu0 %v3457
    %v3496 = vpop.f32.mrf.mxu0
    %v3497 = vadd.f32 0.0, %v3496
    %v3498 = vpop.f32.mrf.mxu0
    %v3499 = vpop.f32.mrf.mxu0
    %v3500 = vadd.f32 0.0, %v3499
    %v3501 = vpop.f32.mrf.mxu0
    %3502 = vmatprep.mubr.bf16.mxu0 0
    %3503 = vmatmul.mubr.bf16.gmra.mxu0 %v3460
    %v3504 = vpop.f32.mrf.mxu0
    %v3505 = vadd.f32 0.0, %v3504
    %v3506 = vpop.f32.mrf.mxu0
    %v3507 = vpop.f32.mrf.mxu0
    %v3508 = vadd.f32 0.0, %v3507
    %v3509 = vpop.f32.mrf.mxu0
    %3510 = vdwg.mxu0
    %v3511 = vadd.f32 %v3444, %v3497
    %v3512 = vadd.f32 %v3445, %v3500
    %v3513 = vadd.f32 %v3446, %v3505
    %v3514 = vadd.f32 %v3447, %v3508
    %v3515 = vxor.u32 %v3511, 2147483648
    %v3516 = vxor.u32 %v3512, 2147483648
    %v3517 = vxor.u32 %v3513, 2147483648
    %v3518 = vxor.u32 %v3514, 2147483648
    %v3519 = vmul.f32 %v3515, 1.442695
    %v3520 = vpow.pop %v3519
    %v3521 = vmul.f32 %v3516, 1.442695
    %v3522 = vpow.pop %v3521
    %v3523 = vmul.f32 %v3517, 1.442695
    %v3524 = vpow.pop %v3523
    %v3525 = vmul.f32 %v3518, 1.442695
    %v3526 = vpow.pop %v3525
    %v3527 = vadd.f32 %v3520, 1.0
    %v3528 = vadd.f32 %v3522, 1.0
    %v3529 = vadd.f32 %v3524, 1.0
    %v3530 = vadd.f32 %v3526, 1.0
    %v3531 = vrcp.pop %v3527
    %v3532 = vmul.f32 1.0, %v3531
    %v3533 = vrcp.pop %v3528
    %v3534 = vmul.f32 1.0, %v3533
    %v3535 = vrcp.pop %v3529
    %v3536 = vmul.f32 1.0, %v3535
    %v3537 = vrcp.pop %v3530
    %v3538 = vmul.f32 1.0, %v3537
    %v3539 = vtanh.pop %v3511
    %v3540 = vtanh.pop %v3512
    %v3541 = vtanh.pop %v3513
    %v3542 = vtanh.pop %v3514
    %v3543 = vmul.f32 %v3532, %v3096
    %v3544 = vmul.f32 %v3534, %v3097
    %v3545 = vmul.f32 %v3536, %v3098
    %v3546 = vmul.f32 %v3538, %v3099
    %3551 = vrot.lane.b32.xlu0 %v3539, 64
    %v3552 = vpop.permute.xlu0 %3551
    %3553 = vrot.lane.b32.xlu0 %v3540, 64
    %v3554 = vpop.permute.xlu0 %3553
    %3555 = vrot.lane.b32.xlu0 %v3541, 64
    %v3556 = vpop.permute.xlu0 %3555
    %3557 = vrot.lane.b32.xlu0 %v3542, 64
    %v3558 = vpop.permute.xlu0 %3557
    %v3563 = vmul.f32 %v3532, %v3552
    %v3564 = vmul.f32 %v3534, %v3554
    %v3565 = vmul.f32 %v3536, %v3556
    %v3566 = vmul.f32 %v3538, %v3558
    %3571 = vrot.lane.b32.xlu0 %v3563, 32
    %v3572 = vpop.permute.xlu0 %3571
    %3573 = vrot.lane.b32.xlu0 %v3564, 32
    %v3574 = vpop.permute.xlu0 %3573
    %3575 = vrot.lane.b32.xlu0 %v3565, 32
    %v3576 = vpop.permute.xlu0 %3575
    %3577 = vrot.lane.b32.xlu0 %v3566, 32
    %v3578 = vpop.permute.xlu0 %3577
    %v3583 = vadd.f32 %v3543, %v3572
    %v3584 = vadd.f32 %v3544, %v3574
    %v3585 = vadd.f32 %v3545, %v3576
    %v3586 = vadd.f32 %v3546, %v3578
    %v3587 = vtanh.pop %v3583
    %v3588 = vtanh.pop %v3584
    %v3589 = vtanh.pop %v3585
    %v3590 = vtanh.pop %v3586
    %3595 = vrot.lane.b32.xlu0 %v3587, 64
    %v3596 = vpop.permute.xlu0 %3595
    %3597 = vrot.lane.b32.xlu0 %v3588, 64
    %v3598 = vpop.permute.xlu0 %3597
    %3599 = vrot.lane.b32.xlu0 %v3589, 64
    %v3600 = vpop.permute.xlu0 %3599
    %3601 = vrot.lane.b32.xlu0 %v3590, 64
    %v3602 = vpop.permute.xlu0 %3601
    %v3607 = vmul.f32 %v3532, %v3596
    %v3608 = vmul.f32 %v3534, %v3598
    %v3609 = vmul.f32 %v3536, %v3600
    %v3610 = vmul.f32 %v3538, %v3602
    %3611 = vmatprep.subr.bf16.mxu0 0
    %3612 = vmatpush1.bf16.msra.mxu0 0
    %3613 = vmatprep.subr.bf16.mxu0 0
    %3614 = vmatpush1.bf16.msra.mxu0 0
    %3615 = vmatprep.subr.bf16.mxu0 0
    %3616 = vmatpush1.bf16.msra.mxu0 0
    %3617 = vmatprep.subr.bf16.mxu0 0
    %3618 = vmatpush1.bf16.msra.mxu0 0
    %3619 = vmatprep.subr.bf16.mxu0 0
    %3620 = vmatpush1.bf16.msra.mxu0 0
    %3621 = vmatprep.subr.bf16.mxu0 0
    %3622 = vmatpush1.bf16.msra.mxu0 0
    %3623 = vmatprep.subr.bf16.mxu0 0
    %3624 = vmatpush1.bf16.msra.mxu0 %v574
    %3625 = vmatprep.subr.bf16.mxu0 0
    %3626 = vmatpush1.bf16.msra.mxu0 %v573
    %3627 = vmatprep.subr.bf16.mxu0 0
    %3628 = vmatpush2.bf16.msra.mxu0 0
    %3629 = vmatprep.subr.bf16.mxu0 0
    %3630 = vmatpush2.bf16.msra.mxu0 0
    %3631 = vmatprep.subr.bf16.mxu0 0
    %3632 = vmatpush2.bf16.msra.mxu0 0
    %3633 = vmatprep.subr.bf16.mxu0 0
    %3634 = vmatpush2.bf16.msra.mxu0 0
    %3635 = vmatprep.subr.bf16.mxu0 0
    %3636 = vmatpush2.bf16.msra.mxu0 0
    %3637 = vmatprep.subr.bf16.mxu0 0
    %3638 = vmatpush2.bf16.msra.mxu0 0
    %3639 = vmatprep.subr.bf16.mxu0 0
    %3640 = vmatpush2.bf16.msra.mxu0 0
    %3641 = vmatprep.subr.bf16.mxu0 0
    %3642 = vmatpush2.bf16.msra.mxu0 0
    %3643 = vmatprep.mubr.bf16.mxu0 0
    %3644 = vmatmul.mubr.bf16.gmra.mxu0 %v3331
    %v3645 = vpop.f32.mrf.mxu0
    %v3646 = vadd.f32 0.0, %v3645
    %v3647 = vpop.f32.mrf.mxu0
    %v3648 = vpop.f32.mrf.mxu0
    %v3649 = vadd.f32 0.0, %v3648
    %v3650 = vpop.f32.mrf.mxu0
    %3651 = vmatprep.mubr.bf16.mxu0 0
    %3652 = vmatmul.mubr.bf16.gmra.mxu0 %v3334
    %v3653 = vpop.f32.mrf.mxu0
    %v3654 = vadd.f32 0.0, %v3653
    %v3655 = vpop.f32.mrf.mxu0
    %v3656 = vpop.f32.mrf.mxu0
    %v3657 = vadd.f32 0.0, %v3656
    %v3658 = vpop.f32.mrf.mxu0
    %3659 = vdwg.mxu0
    %3660 = vmatprep.subr.bf16.mxu0 0
    %3661 = vmatpush1.bf16.msra.mxu0 0
    %3662 = vmatprep.subr.bf16.mxu0 0
    %3663 = vmatpush1.bf16.msra.mxu0 0
    %3664 = vmatprep.subr.bf16.mxu0 0
    %3665 = vmatpush1.bf16.msra.mxu0 0
    %3666 = vmatprep.subr.bf16.mxu0 0
    %3667 = vmatpush1.bf16.msra.mxu0 0
    %3668 = vmatprep.subr.bf16.mxu0 0
    %3669 = vmatpush1.bf16.msra.mxu0 0
    %3670 = vmatprep.subr.bf16.mxu0 0
    %3671 = vmatpush1.bf16.msra.mxu0 0
    %3672 = vmatprep.subr.bf16.mxu0 0
    %3673 = vmatpush1.bf16.msra.mxu0 %v641
    %3674 = vmatprep.subr.bf16.mxu0 0
    %3675 = vmatpush1.bf16.msra.mxu0 %v640
    %3676 = vmatprep.subr.bf16.mxu0 0
    %3677 = vmatpush2.bf16.msra.mxu0 0
    %3678 = vmatprep.subr.bf16.mxu0 0
    %3679 = vmatpush2.bf16.msra.mxu0 0
    %3680 = vmatprep.subr.bf16.mxu0 0
    %3681 = vmatpush2.bf16.msra.mxu0 0
    %3682 = vmatprep.subr.bf16.mxu0 0
    %3683 = vmatpush2.bf16.msra.mxu0 0
    %3684 = vmatprep.subr.bf16.mxu0 0
    %3685 = vmatpush2.bf16.msra.mxu0 0
    %3686 = vmatprep.subr.bf16.mxu0 0
    %3687 = vmatpush2.bf16.msra.mxu0 0
    %3688 = vmatprep.subr.bf16.mxu0 0
    %3689 = vmatpush2.bf16.msra.mxu0 0
    %3690 = vmatprep.subr.bf16.mxu0 0
    %3691 = vmatpush2.bf16.msra.mxu0 0
    %3692 = vmatprep.mubr.bf16.mxu0 0
    %3693 = vmatmul.mubr.bf16.gmra.mxu0 %v3457
    %v3694 = vpop.f32.mrf.mxu0
    %v3695 = vadd.f32 %v3646, %v3694
    %v3696 = vpop.f32.mrf.mxu0
    %v3697 = vpop.f32.mrf.mxu0
    %v3698 = vadd.f32 %v3649, %v3697
    %v3699 = vpop.f32.mrf.mxu0
    %3700 = vmatprep.mubr.bf16.mxu0 0
    %3701 = vmatmul.mubr.bf16.gmra.mxu0 %v3460
    %v3702 = vpop.f32.mrf.mxu0
    %v3703 = vadd.f32 %v3654, %v3702
    %v3704 = vpop.f32.mrf.mxu0
    %v3705 = vpop.f32.mrf.mxu0
    %v3706 = vadd.f32 %v3657, %v3705
    %v3707 = vpop.f32.mrf.mxu0
    %3708 = vdwg.mxu0
    %v3709 = vadd.f32 %v3695, %v697
    %v3710 = vadd.f32 %v3698, %v697
    %v3711 = vadd.f32 %v3703, %v697
    %v3712 = vadd.f32 %v3706, %v697
    %v3713 = vxor.u32 %v3709, 2147483648
    %v3714 = vxor.u32 %v3710, 2147483648
    %v3715 = vxor.u32 %v3711, 2147483648
    %v3716 = vxor.u32 %v3712, 2147483648
    %v3717 = vmul.f32 %v3713, 1.442695
    %v3718 = vpow.pop %v3717
    %v3719 = vmul.f32 %v3714, 1.442695
    %v3720 = vpow.pop %v3719
    %v3721 = vmul.f32 %v3715, 1.442695
    %v3722 = vpow.pop %v3721
    %v3723 = vmul.f32 %v3716, 1.442695
    %v3724 = vpow.pop %v3723
    %v3725 = vadd.f32 %v3718, 1.0
    %v3726 = vadd.f32 %v3720, 1.0
    %v3727 = vadd.f32 %v3722, 1.0
    %v3728 = vadd.f32 %v3724, 1.0
    %v3729 = vrcp.pop %v3725
    %v3730 = vmul.f32 1.0, %v3729
    %v3731 = vrcp.pop %v3726
    %v3732 = vmul.f32 1.0, %v3731
    %v3733 = vrcp.pop %v3727
    %v3734 = vmul.f32 1.0, %v3733
    %v3735 = vrcp.pop %v3728
    %v3736 = vmul.f32 1.0, %v3735
    %v3737 = vtanh.pop %v3709
    %v3738 = vtanh.pop %v3710
    %v3739 = vtanh.pop %v3711
    %v3740 = vtanh.pop %v3712
    %v3741 = vmul.f32 %v3730, %v3294
    %v3742 = vmul.f32 %v3732, %v3295
    %v3743 = vmul.f32 %v3734, %v3296
    %v3744 = vmul.f32 %v3736, %v3297
    %3749 = vrot.lane.b32.xlu0 %v3737, 64
    %v3750 = vpop.permute.xlu0 %3749
    %3751 = vrot.lane.b32.xlu0 %v3738, 64
    %v3752 = vpop.permute.xlu0 %3751
    %3753 = vrot.lane.b32.xlu0 %v3739, 64
    %v3754 = vpop.permute.xlu0 %3753
    %3755 = vrot.lane.b32.xlu0 %v3740, 64
    %v3756 = vpop.permute.xlu0 %3755
    %v3761 = vmul.f32 %v3730, %v3750
    %v3762 = vmul.f32 %v3732, %v3752
    %v3763 = vmul.f32 %v3734, %v3754
    %v3764 = vmul.f32 %v3736, %v3756
    %3769 = vrot.lane.b32.xlu0 %v3761, 32
    %v3770 = vpop.permute.xlu0 %3769
    %3771 = vrot.lane.b32.xlu0 %v3762, 32
    %v3772 = vpop.permute.xlu0 %3771
    %3773 = vrot.lane.b32.xlu0 %v3763, 32
    %v3774 = vpop.permute.xlu0 %3773
    %3775 = vrot.lane.b32.xlu0 %v3764, 32
    %v3776 = vpop.permute.xlu0 %3775
    %v3781 = vadd.f32 %v3741, %v3770
    %v3782 = vadd.f32 %v3742, %v3772
    %v3783 = vadd.f32 %v3743, %v3774
    %v3784 = vadd.f32 %v3744, %v3776
    %v3785 = vtanh.pop %v3781
    %v3786 = vtanh.pop %v3782
    %v3787 = vtanh.pop %v3783
    %v3788 = vtanh.pop %v3784
    %3793 = vrot.lane.b32.xlu0 %v3785, 64
    %v3794 = vpop.permute.xlu0 %3793
    %3795 = vrot.lane.b32.xlu0 %v3786, 64
    %v3796 = vpop.permute.xlu0 %3795
    %3797 = vrot.lane.b32.xlu0 %v3787, 64
    %v3798 = vpop.permute.xlu0 %3797
    %3799 = vrot.lane.b32.xlu0 %v3788, 64
    %v3800 = vpop.permute.xlu0 %3799
    %v3805 = vmul.f32 %v3730, %v3794
    %v3806 = vmul.f32 %v3732, %v3796
    %v3807 = vmul.f32 %v3734, %v3798
    %v3808 = vmul.f32 %v3736, %v3800
    %v3809 = vpack.c.bf16 %v3806, %v3805
    %v3810 = vpack.c.bf16 %v3808, %v3807
    %3813 = vrot.lane.b32.xlu0 %v3809, 32
    %v3814 = vpop.permute.xlu0 %3813
    %3815 = vrot.lane.b32.xlu0 %v3810, 32
    %v3816 = vpop.permute.xlu0 %3815
    %v3818 = vsel %vm224, %v3814, 0
    %v3821 = vsel %vm224, %v3816, 0
    %3823 = vmatprep.subr.bf16.mxu0 0
    %3824 = vmatpush1.bf16.msra.mxu0 0
    %3825 = vmatprep.subr.bf16.mxu0 0
    %3826 = vmatpush1.bf16.msra.mxu0 0
    %3827 = vmatprep.subr.bf16.mxu0 0
    %3828 = vmatpush1.bf16.msra.mxu0 0
    %3829 = vmatprep.subr.bf16.mxu0 0
    %3830 = vmatpush1.bf16.msra.mxu0 0
    %3831 = vmatprep.subr.bf16.mxu0 0
    %3832 = vmatpush1.bf16.msra.mxu0 0
    %3833 = vmatprep.subr.bf16.mxu0 0
    %3834 = vmatpush1.bf16.msra.mxu0 0
    %3835 = vmatprep.subr.bf16.mxu0 0
    %3836 = vmatpush1.bf16.msra.mxu0 %v838
    %3837 = vmatprep.subr.bf16.mxu0 0
    %3838 = vmatpush1.bf16.msra.mxu0 %v837
    %3839 = vmatprep.subr.bf16.mxu0 0
    %3840 = vmatpush2.bf16.msra.mxu0 0
    %3841 = vmatprep.subr.bf16.mxu0 0
    %3842 = vmatpush2.bf16.msra.mxu0 0
    %3843 = vmatprep.subr.bf16.mxu0 0
    %3844 = vmatpush2.bf16.msra.mxu0 0
    %3845 = vmatprep.subr.bf16.mxu0 0
    %3846 = vmatpush2.bf16.msra.mxu0 0
    %3847 = vmatprep.subr.bf16.mxu0 0
    %3848 = vmatpush2.bf16.msra.mxu0 0
    %3849 = vmatprep.subr.bf16.mxu0 0
    %3850 = vmatpush2.bf16.msra.mxu0 0
    %3851 = vmatprep.subr.bf16.mxu0 0
    %3852 = vmatpush2.bf16.msra.mxu0 0
    %3853 = vmatprep.subr.bf16.mxu0 0
    %3854 = vmatpush2.bf16.msra.mxu0 0
    %3855 = vmatprep.mubr.bf16.mxu0 0
    %3856 = vmatmul.mubr.bf16.gmra.mxu0 %v3818
    %v3857 = vpop.f32.mrf.mxu0
    %v3858 = vadd.f32 %v821, %v3857
    %v3859 = vpop.f32.mrf.mxu0
    %v3860 = vpop.f32.mrf.mxu0
    %v3861 = vadd.f32 %v821, %v3860
    %v3862 = vpop.f32.mrf.mxu0
    %3863 = vmatprep.mubr.bf16.mxu0 0
    %3864 = vmatmul.mubr.bf16.gmra.mxu0 %v3821
    %v3865 = vpop.f32.mrf.mxu0
    %v3866 = vadd.f32 %v821, %v3865
    %v3867 = vpop.f32.mrf.mxu0
    %v3868 = vpop.f32.mrf.mxu0
    %v3869 = vadd.f32 %v821, %v3868
    %v3870 = vpop.f32.mrf.mxu0
    %3871 = vdwg.mxu0
    %v3872 = vmax.f32 %v3858, 0.0
    %v3873 = vmax.f32 %v3861, 0.0
    %v3874 = vmax.f32 %v3866, 0.0
    %v3875 = vmax.f32 %v3869, 0.0
    %v3876 = vpack.c.bf16 %v3873, %v3872
    %v3877 = vpack.c.bf16 %v3875, %v3874
    %3878 = vmatprep.subr.bf16.mxu0 0
    %3879 = vmatpush1.bf16.msra.mxu0 %v947
    %3880 = vmatprep.subr.bf16.mxu0 0
    %3881 = vmatpush1.bf16.msra.mxu0 %v946
    %3882 = vmatprep.subr.bf16.mxu0 0
    %3883 = vmatpush1.bf16.msra.mxu0 %v945
    %3884 = vmatprep.subr.bf16.mxu0 0
    %3885 = vmatpush1.bf16.msra.mxu0 %v944
    %3886 = vmatprep.subr.bf16.mxu0 0
    %3887 = vmatpush1.bf16.msra.mxu0 %v943
    %3888 = vmatprep.subr.bf16.mxu0 0
    %3889 = vmatpush1.bf16.msra.mxu0 %v942
    %3890 = vmatprep.subr.bf16.mxu0 0
    %3891 = vmatpush1.bf16.msra.mxu0 %v941
    %3892 = vmatprep.subr.bf16.mxu0 0
    %3893 = vmatpush1.bf16.msra.mxu0 %v940
    %3894 = vmatprep.subr.bf16.mxu0 0
    %3895 = vmatpush2.bf16.msra.mxu0 0
    %3896 = vmatprep.subr.bf16.mxu0 0
    %3897 = vmatpush2.bf16.msra.mxu0 0
    %3898 = vmatprep.subr.bf16.mxu0 0
    %3899 = vmatpush2.bf16.msra.mxu0 0
    %3900 = vmatprep.subr.bf16.mxu0 0
    %3901 = vmatpush2.bf16.msra.mxu0 0
    %3902 = vmatprep.subr.bf16.mxu0 0
    %3903 = vmatpush2.bf16.msra.mxu0 0
    %3904 = vmatprep.subr.bf16.mxu0 0
    %3905 = vmatpush2.bf16.msra.mxu0 0
    %3906 = vmatprep.subr.bf16.mxu0 0
    %3907 = vmatpush2.bf16.msra.mxu0 0
    %3908 = vmatprep.subr.bf16.mxu0 0
    %3909 = vmatpush2.bf16.msra.mxu0 0
    %3910 = vmatprep.mubr.bf16.mxu0 0
    %3911 = vmatmul.mubr.bf16.gmra.mxu0 %v3876
    %v3912 = vpop.f32.mrf.mxu0
    %v3913 = vadd.f32 %v906, %v3912
    %v3914 = vpop.f32.mrf.mxu0
    %v3915 = vpop.f32.mrf.mxu0
    %v3916 = vadd.f32 %v906, %v3915
    %v3917 = vpop.f32.mrf.mxu0
    %3918 = vmatprep.mubr.bf16.mxu0 0
    %3919 = vmatmul.mubr.bf16.gmra.mxu0 %v3877
    %v3920 = vpop.f32.mrf.mxu0
    %v3921 = vadd.f32 %v906, %v3920
    %v3922 = vpop.f32.mrf.mxu0
    %v3923 = vpop.f32.mrf.mxu0
    %v3924 = vadd.f32 %v906, %v3923
    %v3925 = vpop.f32.mrf.mxu0
    %3926 = vdwg.mxu0
    %3927 = vst [vmem:[#allocation16 + $0xc0] sm:$0xff] %v3913
    %3928 = vst [vmem:[#allocation16 + $0xc8] sm:$0xff] %v3916
    %3929 = vst [vmem:[#allocation16 + $0xd0] sm:$0xff] %v3921
    %3930 = vst [vmem:[#allocation16 + $0xd8] sm:$0xff] %v3924
    %v3931 = vpack.c.bf16 %v3608, %v3607
    %v3932 = vpack.c.bf16 %v3610, %v3609
    %3933 = vmatprep.subr.bf16.mxu0 0
    %3934 = vmatpush1.bf16.msra.mxu0 0
    %3935 = vmatprep.subr.bf16.mxu0 0
    %3936 = vmatpush1.bf16.msra.mxu0 0
    %3937 = vmatprep.subr.bf16.mxu0 0
    %3938 = vmatpush1.bf16.msra.mxu0 0
    %3939 = vmatprep.subr.bf16.mxu0 0
    %3940 = vmatpush1.bf16.msra.mxu0 0
    %3941 = vmatprep.subr.bf16.mxu0 0
    %3942 = vmatpush1.bf16.msra.mxu0 0
    %3943 = vmatprep.subr.bf16.mxu0 0
    %3944 = vmatpush1.bf16.msra.mxu0 0
    %3945 = vmatprep.subr.bf16.mxu0 0
    %3946 = vmatpush1.bf16.msra.mxu0 %v574
    %3947 = vmatprep.subr.bf16.mxu0 0
    %3948 = vmatpush1.bf16.msra.mxu0 %v573
    %3949 = vmatprep.subr.bf16.mxu0 0
    %3950 = vmatpush2.bf16.msra.mxu0 0
    %3951 = vmatprep.subr.bf16.mxu0 0
    %3952 = vmatpush2.bf16.msra.mxu0 0
    %3953 = vmatprep.subr.bf16.mxu0 0
    %3954 = vmatpush2.bf16.msra.mxu0 0
    %3955 = vmatprep.subr.bf16.mxu0 0
    %3956 = vmatpush2.bf16.msra.mxu0 0
    %3957 = vmatprep.subr.bf16.mxu0 0
    %3958 = vmatpush2.bf16.msra.mxu0 0
    %3959 = vmatprep.subr.bf16.mxu0 0
    %3960 = vmatpush2.bf16.msra.mxu0 0
    %3961 = vmatprep.subr.bf16.mxu0 0
    %3962 = vmatpush2.bf16.msra.mxu0 0
    %3963 = vmatprep.subr.bf16.mxu0 0
    %3964 = vmatpush2.bf16.msra.mxu0 0
    %3965 = vmatprep.mubr.bf16.mxu0 0
    %3966 = vmatmul.mubr.bf16.gmra.mxu0 %v3818
    %v3967 = vpop.f32.mrf.mxu0
    %v3968 = vadd.f32 0.0, %v3967
    %v3969 = vpop.f32.mrf.mxu0
    %v3970 = vpop.f32.mrf.mxu0
    %v3971 = vadd.f32 0.0, %v3970
    %v3972 = vpop.f32.mrf.mxu0
    %3973 = vmatprep.mubr.bf16.mxu0 0
    %3974 = vmatmul.mubr.bf16.gmra.mxu0 %v3821
    %v3975 = vpop.f32.mrf.mxu0
    %v3976 = vadd.f32 0.0, %v3975
    %v3977 = vpop.f32.mrf.mxu0
    %v3978 = vpop.f32.mrf.mxu0
    %v3979 = vadd.f32 0.0, %v3978
    %v3980 = vpop.f32.mrf.mxu0
    %3981 = vdwg.mxu0
    %3984 = vrot.lane.b32.xlu0 %v3931, 32
    %v3985 = vpop.permute.xlu0 %3984
    %3986 = vrot.lane.b32.xlu0 %v3932, 32
    %v3987 = vpop.permute.xlu0 %3986
    %v3989 = vsel %vm224, %v3985, 0
    %v3992 = vsel %vm224, %v3987, 0
    %3994 = vmatprep.subr.bf16.mxu0 0
    %3995 = vmatpush1.bf16.msra.mxu0 0
    %3996 = vmatprep.subr.bf16.mxu0 0
    %3997 = vmatpush1.bf16.msra.mxu0 0
    %3998 = vmatprep.subr.bf16.mxu0 0
    %3999 = vmatpush1.bf16.msra.mxu0 0
    %4000 = vmatprep.subr.bf16.mxu0 0
    %4001 = vmatpush1.bf16.msra.mxu0 0
    %4002 = vmatprep.subr.bf16.mxu0 0
    %4003 = vmatpush1.bf16.msra.mxu0 0
    %4004 = vmatprep.subr.bf16.mxu0 0
    %4005 = vmatpush1.bf16.msra.mxu0 0
    %4006 = vmatprep.subr.bf16.mxu0 0
    %4007 = vmatpush1.bf16.msra.mxu0 %v641
    %4008 = vmatprep.subr.bf16.mxu0 0
    %4009 = vmatpush1.bf16.msra.mxu0 %v640
    %4010 = vmatprep.subr.bf16.mxu0 0
    %4011 = vmatpush2.bf16.msra.mxu0 0
    %4012 = vmatprep.subr.bf16.mxu0 0
    %4013 = vmatpush2.bf16.msra.mxu0 0
    %4014 = vmatprep.subr.bf16.mxu0 0
    %4015 = vmatpush2.bf16.msra.mxu0 0
    %4016 = vmatprep.subr.bf16.mxu0 0
    %4017 = vmatpush2.bf16.msra.mxu0 0
    %4018 = vmatprep.subr.bf16.mxu0 0
    %4019 = vmatpush2.bf16.msra.mxu0 0
    %4020 = vmatprep.subr.bf16.mxu0 0
    %4021 = vmatpush2.bf16.msra.mxu0 0
    %4022 = vmatprep.subr.bf16.mxu0 0
    %4023 = vmatpush2.bf16.msra.mxu0 0
    %4024 = vmatprep.subr.bf16.mxu0 0
    %4025 = vmatpush2.bf16.msra.mxu0 0
    %4026 = vmatprep.mubr.bf16.mxu0 0
    %4027 = vmatmul.mubr.bf16.gmra.mxu0 %v3989
    %v4028 = vpop.f32.mrf.mxu0
    %v4029 = vadd.f32 %v3968, %v4028
    %v4030 = vpop.f32.mrf.mxu0
    %v4031 = vpop.f32.mrf.mxu0
    %v4032 = vadd.f32 %v3971, %v4031
    %v4033 = vpop.f32.mrf.mxu0
    %4034 = vmatprep.mubr.bf16.mxu0 0
    %4035 = vmatmul.mubr.bf16.gmra.mxu0 %v3992
    %v4036 = vpop.f32.mrf.mxu0
    %v4037 = vadd.f32 %v3976, %v4036
    %v4038 = vpop.f32.mrf.mxu0
    %v4039 = vpop.f32.mrf.mxu0
    %v4040 = vadd.f32 %v3979, %v4039
    %v4041 = vpop.f32.mrf.mxu0
    %4042 = vdwg.mxu0
    %v4043 = vadd.f32 %v4029, %v697
    %v4044 = vadd.f32 %v4032, %v697
    %v4045 = vadd.f32 %v4037, %v697
    %v4046 = vadd.f32 %v4040, %v697
    %v4047 = vxor.u32 %v4043, 2147483648
    %v4048 = vxor.u32 %v4044, 2147483648
    %v4049 = vxor.u32 %v4045, 2147483648
    %v4050 = vxor.u32 %v4046, 2147483648
    %v4051 = vmul.f32 %v4047, 1.442695
    %v4052 = vpow.pop %v4051
    %v4053 = vmul.f32 %v4048, 1.442695
    %v4054 = vpow.pop %v4053
    %v4055 = vmul.f32 %v4049, 1.442695
    %v4056 = vpow.pop %v4055
    %v4057 = vmul.f32 %v4050, 1.442695
    %v4058 = vpow.pop %v4057
    %v4059 = vadd.f32 %v4052, 1.0
    %v4060 = vadd.f32 %v4054, 1.0
    %v4061 = vadd.f32 %v4056, 1.0
    %v4062 = vadd.f32 %v4058, 1.0
    %v4063 = vrcp.pop %v4059
    %v4064 = vmul.f32 1.0, %v4063
    %v4065 = vrcp.pop %v4060
    %v4066 = vmul.f32 1.0, %v4065
    %v4067 = vrcp.pop %v4061
    %v4068 = vmul.f32 1.0, %v4067
    %v4069 = vrcp.pop %v4062
    %v4070 = vmul.f32 1.0, %v4069
    %v4071 = vtanh.pop %v4043
    %v4072 = vtanh.pop %v4044
    %v4073 = vtanh.pop %v4045
    %v4074 = vtanh.pop %v4046
    %v4075 = vmul.f32 %v4064, %v3781
    %v4076 = vmul.f32 %v4066, %v3782
    %v4077 = vmul.f32 %v4068, %v3783
    %v4078 = vmul.f32 %v4070, %v3784
    %4083 = vrot.lane.b32.xlu0 %v4071, 64
    %v4084 = vpop.permute.xlu0 %4083
    %4085 = vrot.lane.b32.xlu0 %v4072, 64
    %v4086 = vpop.permute.xlu0 %4085
    %4087 = vrot.lane.b32.xlu0 %v4073, 64
    %v4088 = vpop.permute.xlu0 %4087
    %4089 = vrot.lane.b32.xlu0 %v4074, 64
    %v4090 = vpop.permute.xlu0 %4089
    %v4095 = vmul.f32 %v4064, %v4084
    %v4096 = vmul.f32 %v4066, %v4086
    %v4097 = vmul.f32 %v4068, %v4088
    %v4098 = vmul.f32 %v4070, %v4090
    %4103 = vrot.lane.b32.xlu0 %v4095, 32
    %v4104 = vpop.permute.xlu0 %4103
    %4105 = vrot.lane.b32.xlu0 %v4096, 32
    %v4106 = vpop.permute.xlu0 %4105
    %4107 = vrot.lane.b32.xlu0 %v4097, 32
    %v4108 = vpop.permute.xlu0 %4107
    %4109 = vrot.lane.b32.xlu0 %v4098, 32
    %v4110 = vpop.permute.xlu0 %4109
    %v4115 = vadd.f32 %v4075, %v4104
    %v4116 = vadd.f32 %v4076, %v4106
    %v4117 = vadd.f32 %v4077, %v4108
    %v4118 = vadd.f32 %v4078, %v4110
    %v4119 = vtanh.pop %v4115
    %v4120 = vtanh.pop %v4116
    %v4121 = vtanh.pop %v4117
    %v4122 = vtanh.pop %v4118
    %4127 = vrot.lane.b32.xlu0 %v4119, 64
    %v4128 = vpop.permute.xlu0 %4127
    %4129 = vrot.lane.b32.xlu0 %v4120, 64
    %v4130 = vpop.permute.xlu0 %4129
    %4131 = vrot.lane.b32.xlu0 %v4121, 64
    %v4132 = vpop.permute.xlu0 %4131
    %4133 = vrot.lane.b32.xlu0 %v4122, 64
    %v4134 = vpop.permute.xlu0 %4133
    %v4139 = vmul.f32 %v4064, %v4128
    %v4140 = vmul.f32 %v4066, %v4130
    %v4141 = vmul.f32 %v4068, %v4132
    %v4142 = vmul.f32 %v4070, %v4134
    %v4143 = vpack.c.bf16 %v4140, %v4139
    %v4144 = vpack.c.bf16 %v4142, %v4141
    %4147 = vrot.lane.b32.xlu0 %v4143, 32
    %v4148 = vpop.permute.xlu0 %4147
    %4149 = vrot.lane.b32.xlu0 %v4144, 32
    %v4150 = vpop.permute.xlu0 %4149
    %v4152 = vsel %vm224, %v4148, 0
    %v4155 = vsel %vm224, %v4150, 0
    %4157 = vmatprep.subr.bf16.mxu0 0
    %4158 = vmatpush1.bf16.msra.mxu0 0
    %4159 = vmatprep.subr.bf16.mxu0 0
    %4160 = vmatpush1.bf16.msra.mxu0 0
    %4161 = vmatprep.subr.bf16.mxu0 0
    %4162 = vmatpush1.bf16.msra.mxu0 0
    %4163 = vmatprep.subr.bf16.mxu0 0
    %4164 = vmatpush1.bf16.msra.mxu0 0
    %4165 = vmatprep.subr.bf16.mxu0 0
    %4166 = vmatpush1.bf16.msra.mxu0 0
    %4167 = vmatprep.subr.bf16.mxu0 0
    %4168 = vmatpush1.bf16.msra.mxu0 0
    %4169 = vmatprep.subr.bf16.mxu0 0
    %4170 = vmatpush1.bf16.msra.mxu0 %v838
    %4171 = vmatprep.subr.bf16.mxu0 0
    %4172 = vmatpush1.bf16.msra.mxu0 %v837
    %4173 = vmatprep.subr.bf16.mxu0 0
    %4174 = vmatpush2.bf16.msra.mxu0 0
    %4175 = vmatprep.subr.bf16.mxu0 0
    %4176 = vmatpush2.bf16.msra.mxu0 0
    %4177 = vmatprep.subr.bf16.mxu0 0
    %4178 = vmatpush2.bf16.msra.mxu0 0
    %4179 = vmatprep.subr.bf16.mxu0 0
    %4180 = vmatpush2.bf16.msra.mxu0 0
    %4181 = vmatprep.subr.bf16.mxu0 0
    %4182 = vmatpush2.bf16.msra.mxu0 0
    %4183 = vmatprep.subr.bf16.mxu0 0
    %4184 = vmatpush2.bf16.msra.mxu0 0
    %4185 = vmatprep.subr.bf16.mxu0 0
    %4186 = vmatpush2.bf16.msra.mxu0 0
    %4187 = vmatprep.subr.bf16.mxu0 0
    %4188 = vmatpush2.bf16.msra.mxu0 0
    %4189 = vmatprep.mubr.bf16.mxu0 0
    %4190 = vmatmul.mubr.bf16.gmra.mxu0 %v4152
    %v4191 = vpop.f32.mrf.mxu0
    %v4192 = vadd.f32 %v821, %v4191
    %v4193 = vpop.f32.mrf.mxu0
    %v4194 = vpop.f32.mrf.mxu0
    %v4195 = vadd.f32 %v821, %v4194
    %v4196 = vpop.f32.mrf.mxu0
    %4197 = vmatprep.mubr.bf16.mxu0 0
    %4198 = vmatmul.mubr.bf16.gmra.mxu0 %v4155
    %v4199 = vpop.f32.mrf.mxu0
    %v4200 = vadd.f32 %v821, %v4199
    %v4201 = vpop.f32.mrf.mxu0
    %v4202 = vpop.f32.mrf.mxu0
    %v4203 = vadd.f32 %v821, %v4202
    %v4204 = vpop.f32.mrf.mxu0
    %4205 = vdwg.mxu0
    %v4206 = vmax.f32 %v4192, 0.0
    %v4207 = vmax.f32 %v4195, 0.0
    %v4208 = vmax.f32 %v4200, 0.0
    %v4209 = vmax.f32 %v4203, 0.0
    %v4210 = vpack.c.bf16 %v4207, %v4206
    %v4211 = vpack.c.bf16 %v4209, %v4208
    %4212 = vmatprep.subr.bf16.mxu0 0
    %4213 = vmatpush1.bf16.msra.mxu0 %v947
    %4214 = vmatprep.subr.bf16.mxu0 0
    %4215 = vmatpush1.bf16.msra.mxu0 %v946
    %4216 = vmatprep.subr.bf16.mxu0 0
    %4217 = vmatpush1.bf16.msra.mxu0 %v945
    %4218 = vmatprep.subr.bf16.mxu0 0
    %4219 = vmatpush1.bf16.msra.mxu0 %v944
    %4220 = vmatprep.subr.bf16.mxu0 0
    %4221 = vmatpush1.bf16.msra.mxu0 %v943
    %4222 = vmatprep.subr.bf16.mxu0 0
    %4223 = vmatpush1.bf16.msra.mxu0 %v942
    %4224 = vmatprep.subr.bf16.mxu0 0
    %4225 = vmatpush1.bf16.msra.mxu0 %v941
    %4226 = vmatprep.subr.bf16.mxu0 0
    %4227 = vmatpush1.bf16.msra.mxu0 %v940
    %4228 = vmatprep.subr.bf16.mxu0 0
    %4229 = vmatpush2.bf16.msra.mxu0 0
    %4230 = vmatprep.subr.bf16.mxu0 0
    %4231 = vmatpush2.bf16.msra.mxu0 0
    %4232 = vmatprep.subr.bf16.mxu0 0
    %4233 = vmatpush2.bf16.msra.mxu0 0
    %4234 = vmatprep.subr.bf16.mxu0 0
    %4235 = vmatpush2.bf16.msra.mxu0 0
    %4236 = vmatprep.subr.bf16.mxu0 0
    %4237 = vmatpush2.bf16.msra.mxu0 0
    %4238 = vmatprep.subr.bf16.mxu0 0
    %4239 = vmatpush2.bf16.msra.mxu0 0
    %4240 = vmatprep.subr.bf16.mxu0 0
    %4241 = vmatpush2.bf16.msra.mxu0 0
    %4242 = vmatprep.subr.bf16.mxu0 0
    %4243 = vmatpush2.bf16.msra.mxu0 0
    %4244 = vmatprep.mubr.bf16.mxu0 0
    %4245 = vmatmul.mubr.bf16.gmra.mxu0 %v4210
    %v4246 = vpop.f32.mrf.mxu0
    %v4247 = vadd.f32 %v906, %v4246
    %v4248 = vpop.f32.mrf.mxu0
    %v4249 = vpop.f32.mrf.mxu0
    %v4250 = vadd.f32 %v906, %v4249
    %v4251 = vpop.f32.mrf.mxu0
    %4252 = vmatprep.mubr.bf16.mxu0 0
    %4253 = vmatmul.mubr.bf16.gmra.mxu0 %v4211
    %v4254 = vpop.f32.mrf.mxu0
    %v4255 = vadd.f32 %v906, %v4254
    %v4256 = vpop.f32.mrf.mxu0
    %v4257 = vpop.f32.mrf.mxu0
    %v4258 = vadd.f32 %v906, %v4257
    %v4259 = vpop.f32.mrf.mxu0
    %4260 = vdwg.mxu0
    %4261 = vst [vmem:[#allocation16 + $0xe0] sm:$0xff] %v4247
    %4262 = vst [vmem:[#allocation16 + $0xe8] sm:$0xff] %v4250
    %4263 = vst [vmem:[#allocation16 + $0xf0] sm:$0xff] %v4255
    %4264 = vst [vmem:[#allocation16 + $0xf8] sm:$0xff] %v4258
    %4269 = vrot.lane.b32.xlu0 %v3607, 32
    %v4270 = vpop.permute.xlu0 %4269
    %4271 = vrot.lane.b32.xlu0 %v3608, 32
    %v4272 = vpop.permute.xlu0 %4271
    %4273 = vrot.lane.b32.xlu0 %v3609, 32
    %v4274 = vpop.permute.xlu0 %4273
    %4275 = vrot.lane.b32.xlu0 %v3610, 32
    %v4276 = vpop.permute.xlu0 %4275
    %4281 = vst.msk [vmem:[#allocation17] sm:$0xff] %vm224, %v4270
    %4282 = vst.msk [vmem:[#allocation17 + $0x8] sm:$0xff] %vm224, %v4272
    %4283 = vst.msk [vmem:[#allocation17 + $0x10] sm:$0xff] %vm224, %v4274
    %4284 = vst.msk [vmem:[#allocation17 + $0x18] sm:$0xff] %vm224, %v4276
    %4289 = vrot.lane.b32.xlu0 %v3583, 96
    %v4290 = vpop.permute.xlu0 %4289
    %4291 = vrot.lane.b32.xlu0 %v3584, 96
    %v4292 = vpop.permute.xlu0 %4291
    %4293 = vrot.lane.b32.xlu0 %v3585, 96
    %v4294 = vpop.permute.xlu0 %4293
    %4295 = vrot.lane.b32.xlu0 %v3586, 96
    %v4296 = vpop.permute.xlu0 %4295
    %4301 = vst.msk [vmem:[#allocation19] sm:$0xff] %vm224, %v4290
    %4302 = vst.msk [vmem:[#allocation19 + $0x8] sm:$0xff] %vm224, %v4292
    %4303 = vst.msk [vmem:[#allocation19 + $0x10] sm:$0xff] %vm224, %v4294
    %4304 = vst.msk [vmem:[#allocation19 + $0x18] sm:$0xff] %vm224, %v4296
    %4309 = vrot.lane.b32.xlu0 %v4139, 32
    %v4310 = vpop.permute.xlu0 %4309
    %4311 = vrot.lane.b32.xlu0 %v4140, 32
    %v4312 = vpop.permute.xlu0 %4311
    %4313 = vrot.lane.b32.xlu0 %v4141, 32
    %v4314 = vpop.permute.xlu0 %4313
    %4315 = vrot.lane.b32.xlu0 %v4142, 32
    %v4316 = vpop.permute.xlu0 %4315
    %s4321 = scalar_lea.vmem [#allocation17], 32
    %4322 = vst.msk [vmem:[%s4321] sm:$0xff] %vm224, %v4310
    %4323 = vst.msk [vmem:[%s4321 + $0x8] sm:$0xff] %vm224, %v4312
    %4324 = vst.msk [vmem:[%s4321 + $0x10] sm:$0xff] %vm224, %v4314
    %4325 = vst.msk [vmem:[%s4321 + $0x18] sm:$0xff] %vm224, %v4316
    %4330 = vrot.lane.b32.xlu0 %v4115, 96
    %v4331 = vpop.permute.xlu0 %4330
    %4332 = vrot.lane.b32.xlu0 %v4116, 96
    %v4333 = vpop.permute.xlu0 %4332
    %4334 = vrot.lane.b32.xlu0 %v4117, 96
    %v4335 = vpop.permute.xlu0 %4334
    %4336 = vrot.lane.b32.xlu0 %v4118, 96
    %v4337 = vpop.permute.xlu0 %4336
    %s4342 = scalar_lea.vmem [#allocation19], 32
    %4343 = vst.msk [vmem:[%s4342] sm:$0xff] %vm224, %v4331
    %4344 = vst.msk [vmem:[%s4342 + $0x8] sm:$0xff] %vm224, %v4333
    %4345 = vst.msk [vmem:[%s4342 + $0x10] sm:$0xff] %vm224, %v4335
    %4346 = vst.msk [vmem:[%s4342 + $0x18] sm:$0xff] %vm224, %v4337
    // Predicated region
    $region78: #{tpu_custom_call.1} parent=1 // pred_check
      _
    $region79: #{tpu_custom_call.1} parent=1 // pred_check_branch
      %4348 = sbr.rel (0) target = $region81
    $region80: #{tpu_custom_call.1} parent=1 // pred_region
      %s4350 = ssub.s32 4096, 4096
      %4351 = vsyncadd [#allocation4], %s4350
      %s4352 = sshll.u32 [#allocation16], 4
      %s4353 = int_to_ptr.vmem [resolvable:$true] %s4352
      %4358 = dma.vmem_to_hbm [thread:$0]  %s4353, 4096, %s11, [#allocation4], 128, 128, 8
    $region81: #{tpu_custom_call.1} parent=1 // pred_fallthru
      _
    // Predicated region
    $region82: #{tpu_custom_call.1} parent=1 // pred_check
      _
    $region83: #{tpu_custom_call.1} parent=1 // pred_check_branch
      %4360 = sbr.rel (0) target = $region85
    $region84: #{tpu_custom_call.1} parent=1 // pred_region
      %s4362 = ssub.s32 1024, 1024
      %4363 = vsyncadd [#allocation18], %s4362
      %s4364 = sshll.u32 [#allocation17], 4
      %s4365 = int_to_ptr.vmem [resolvable:$true] %s4364
      %4370 = dma.vmem_to_hbm [thread:$0]  %s4365, 1024, %s12, [#allocation18], 128, 128, 8
    $region85: #{tpu_custom_call.1} parent=1 // pred_fallthru
      _
    // Predicated region
    $region86: #{tpu_custom_call.1} parent=1 // pred_check
      _
    $region87: #{tpu_custom_call.1} parent=1 // pred_check_branch
      %4372 = sbr.rel (0) target = $region89
    $region88: #{tpu_custom_call.1} parent=1 // pred_region
      %s4374 = ssub.s32 1024, 1024
      %4375 = vsyncadd [#allocation18], %s4374
      %s4376 = sshll.u32 [#allocation19], 4
      %s4377 = int_to_ptr.vmem [resolvable:$true] %s4376
      %4382 = dma.vmem_to_hbm [thread:$0]  %s4377, 1024, %s13, [#allocation18], 128, 128, 8
    $region89: #{tpu_custom_call.1} parent=1 // pred_fallthru
      _
    // Predicated region
    $region90: #{tpu_custom_call.1} parent=1 // pred_check
      _
    $region91: #{tpu_custom_call.1} parent=1 // pred_check_branch
      %4384 = sbr.rel (0) target = $region93
    $region92: #{tpu_custom_call.1} parent=1 // pred_region
      %4385 = dma.done [#allocation4], 4096
    $region93: #{tpu_custom_call.1} parent=1 // pred_fallthru
      _
    // Predicated region
    $region94: #{tpu_custom_call.1} parent=1 // pred_check
      _
    $region95: #{tpu_custom_call.1} parent=1 // pred_check_branch
      %4387 = sbr.rel (0) target = $region97
    $region96: #{tpu_custom_call.1} parent=1 // pred_region
      %4388 = dma.done [#allocation18], 1024
    $region97: #{tpu_custom_call.1} parent=1 // pred_fallthru
      _
    // Predicated region
    $region98: #{tpu_custom_call.1} parent=1 // pred_check
      _
    $region99: #{tpu_custom_call.1} parent=1 // pred_check_branch
      %4390 = sbr.rel (0) target = $region101
    $region100: #{tpu_custom_call.1} parent=1 // pred_region
      %4391 = dma.done [#allocation18], 1024
    $region101: #{tpu_custom_call.1} parent=1 // pred_fallthru
      _
    %4392 = vsyncpa [#allocation3], 1
    %4393 = vsyncpa [#allocation6], 1
    %4394 = vsyncpa [#allocation9], 1
    %4395 = vsyncpa [#allocation12], 1
    %4396 = vsyncpa [#allocation15], 1
    %4397 = vsyncpa [#allocation4], 1
    %4398 = vsyncpa [#allocation18], 1

</llo_original>
